<compile_context>
chip_gen: v5e
topology: v5e:2x2
jax: 0.10.0
libtpu: 0.0.40
codegen_flags: <defaults>
</compile_context>

<pallas_src>
import numpy as np
import jax
import jax.numpy as jnp
from jax.experimental import pallas as pl
from jax.experimental.pallas import tpu as pltpu

# Fixed geometry of the PyTorch module.
H1, W1 = 28, 28        # conv1 input (after torch.cat([x, y], dim=2))
H1P = 32               # conv1 input rows zero-padded to a multiple of 8
HO1, WO1 = 14, 14      # conv1 output
H2, W2 = 14, 14        # conv2 input
HO2, WO2 = 7, 7        # conv2 output
C1, C2 = 8, 16         # conv output channels
NFC1, NFC2 = 256, 10
NFC2_PAD = 16          # fc2 rows zero-padded to a multiple of 8


# ------------------------------- Pallas kernel --------------------------------
def _fused_cnn_kernel(img_ref, cj1_ref, a1m_ref, b1c_ref,
                      cj2_ref, a2m_ref, b2c_ref,
                      w1fc_ref, b1fc_ref, w2fc_ref, b2fc_ref, out_ref):
    """One grid step == one batch sample; all intermediates live in VMEM."""
    f32 = jnp.float32
    cdt = cj1_ref.dtype                        # MXU operand dtype (f32 or bf16)

    def conv_block(act, cj_ref, am_ref, b_ref):
        # act: (Cin*Hrows, Wi) in compute dtype.
        # out[co*Ho+ho, wo] = relu(b[co] + sum_j (A[j] @ (act @ CJ[j]))[...]).
        acc = b_ref[...]                                                  # (Cout*Ho, 1) f32
        for j in range(4):                                                # static unroll
            sel = jnp.dot(act, cj_ref[j], preferred_element_type=f32)     # (Cin*Hrows, Wo)
            acc = acc + jnp.dot(am_ref[j], sel.astype(cdt),
                                preferred_element_type=f32)               # (Cout*Ho, Wo)
        return jnp.maximum(acc, 0.0)                                      # f32 epilogue

    img = img_ref[0]                                            # (32, 28), compute dtype
    a1 = conv_block(img, cj1_ref, a1m_ref, b1c_ref)             # (112, 14) == (C1*HO1, WO1)
    a2 = conv_block(a1.astype(cdt), cj2_ref, a2m_ref, b2c_ref)  # (112, 7)  == (C2*HO2, WO2)

    # fc1: torch's NCHW flatten order is folded into w1fc (prep-time permutation);
    # contract the (C*H, W) activation column-by-column (7 static matmuls).
    h1 = b1fc_ref[...]                                          # (256, 1) f32
    for q in range(WO2):
        h1 = h1 + jnp.dot(w1fc_ref[q], a2[:, q:q + 1].astype(cdt),
                          preferred_element_type=f32)           # (256, 1)
    h1 = jnp.maximum(h1, 0.0)

    # fc2 (rows zero-padded 10 -> 16; extra rows have zero weights/bias).
    logits = jnp.dot(w2fc_ref[...], h1.astype(cdt),
                     preferred_element_type=f32) + b2fc_ref[...]          # (16, 1)
    out_ref[0] = logits.astype(out_ref.dtype)


# --------------------------- parameter preparation ----------------------------
def init_params(key):
    """Deterministic synthetic params with PyTorch Conv2d/Linear shapes."""
    ks = jax.random.split(key, 8)

    def uni(k, shape, fan_in):
        bound = 1.0 / jnp.sqrt(jnp.float32(fan_in))
        return jax.random.uniform(k, shape, jnp.float32, -bound, bound)

    return {
        "conv1_w": uni(ks[0], (8, 1, 4, 4), 1 * 4 * 4),
        "conv1_b": uni(ks[1], (8,), 1 * 4 * 4),
        "conv2_w": uni(ks[2], (16, 8, 4, 4), 8 * 4 * 4),
        "conv2_b": uni(ks[3], (16,), 8 * 4 * 4),
        "fc1_w":   uni(ks[4], (256, 784), 784),     # torch Linear: (out, in)
        "fc1_b":   uni(ks[5], (256,), 784),
        "fc2_w":   uni(ks[6], (10, 256), 256),
        "fc2_b":   uni(ks[7], (10,), 256),
    }


def prepare_params(params, compute_dtype=jnp.float32):
    """Hoist every layout transform out of the forward pass (run once)."""
    f32 = jnp.float32

    def conv_mats(w, b, Hi, Wi, Hrows):
        # stride=2, padding=1, 4x4 kernel, folded into selection matrices.
        Co, Ci, Kh, Kw = w.shape
        Ho = (Hi + 2 - Kh) // 2 + 1
        Wo = (Wi + 2 - Kw) // 2 + 1
        s = np.arange(Wi)[:, None]
        wo = np.arange(Wo)[None, :]
        # CJ[j][s, wo] = [s == 2*wo + j - 1]  (strided column gather; pad folded in)
        cj = np.stack([(s == 2 * wo + j - 1) for j in range(Kw)], 0).astype(np.float32)
        # M[i][ho, r] = [r == 2*ho + i - 1 and r < Hi]  (strided row gather)
        r = np.arange(Hrows)[None, :]
        ho = np.arange(Ho)[:, None]
        m = np.stack([((r == 2 * ho + i - 1) & (r < Hi)) for i in range(Kh)],
                     0).astype(np.float32)
        # A[j][co*Ho+ho, c*Hrows+r] = sum_i w[co, c, i, j] * M[i][ho, r]
        a = jnp.einsum("acij,ihr->jahcr", w.astype(f32), jnp.asarray(m))
        a = a.reshape(Kw, Co * Ho, Ci * Hrows)
        bcol = jnp.repeat(b.astype(f32), Ho)[:, None]             # (Co*Ho, 1)
        return jnp.asarray(cj, compute_dtype), a.astype(compute_dtype), bcol

    cj1, a1m, b1c = conv_mats(params["conv1_w"], params["conv1_b"], H1, W1, H1P)
    cj2, a2m, b2c = conv_mats(params["conv2_w"], params["conv2_b"], H2, W2, H2)

    # fc1: permute the 784 input columns from torch's NCHW flatten (c*49+h*7+w)
    # to the kernel's (w-major, c*7+h) access pattern, split per output column w.
    w1 = params["fc1_w"].astype(f32).reshape(NFC1, C2, HO2, WO2)
    w1 = jnp.transpose(w1, (3, 0, 1, 2)).reshape(WO2, NFC1, C2 * HO2)   # (7, 256, 112)
    b1fc = params["fc1_b"].astype(f32)[:, None]                          # (256, 1)

    # fc2: zero-pad the 10 outputs to 16 (8-aligned rows, unmasked output tile).
    w2 = jnp.zeros((NFC2_PAD, NFC1), f32).at[:NFC2].set(params["fc2_w"].astype(f32))
    b2fc = jnp.zeros((NFC2_PAD, 1), f32).at[:NFC2, 0].set(params["fc2_b"].astype(f32))

    return dict(cj1=cj1, a1m=a1m, b1c=b1c, cj2=cj2, a2m=a2m, b2c=b2c,
                w1fc=w1.astype(compute_dtype), b1fc=b1fc,
                w2fc=w2.astype(compute_dtype), b2fc=b2fc)


# ------------------------------- forward pass ----------------------------------
@jax.jit
def cnn_mnist_forward(prepped, x, y):
    """forward(x, y) of cnn_MNIST; x, y: (B, 1, 14, 28)."""
    B = x.shape[0]
    # torch.cat([x, y], dim=2) -> (B, 1, 28, 28); drop the channel dim and pad the
    # rows to a multiple of 8 (the matching A1 columns are zero -> no-op rows).
    img = jnp.concatenate([x, y], axis=2).reshape(B, H1, W1)
    img = jnp.pad(img, ((0, 0), (0, H1P - H1), (0, 0)))
    img = img.astype(prepped["cj1"].dtype)

    names = ("cj1", "a1m", "b1c", "cj2", "a2m", "b2c", "w1fc", "b1fc", "w2fc", "b2fc")
    weights = [prepped[n] for n in names]

    def full_spec(arr):
        zeros = (0,) * arr.ndim          # whole array resident; fetched once
        return pl.BlockSpec(arr.shape, lambda b: zeros)

    out = pl.pallas_call(
        _fused_cnn_kernel,
        out_shape=jax.ShapeDtypeStruct((B, NFC2_PAD, 1), jnp.float32),
        grid=(B,),
        in_specs=[pl.BlockSpec((1, H1P, W1), lambda b: (b, 0, 0))]
                 + [full_spec(w) for w in weights],
        out_specs=pl.BlockSpec((1, NFC2_PAD, 1), lambda b: (b, 0, 0)),
        compiler_params=pltpu.CompilerParams(dimension_semantics=("parallel",)),
    )(img, *weights)
    return out[:, :NFC2, 0]


# ------------------------------ reference (jnp) --------------------------------
def _reference_forward(params, x, y):
    h = jnp.concatenate([x, y], axis=2)

    def conv(h, w, b, stride, pad):
        o = jax.lax.conv_general_dilated(
            h, w, window_strides=(stride, stride),
            padding=[(pad, pad), (pad, pad)],
            dimension_numbers=("NCHW", "OIHW", "NCHW"))
        return o + b[None, :, None, None]

    h = jax.nn.relu(conv(h, params["conv1_w"], params["conv1_b"], 2, 1))
    h = jax.nn.relu(conv(h, params["conv2_w"], params["conv2_b"], 2, 1))
    h = h.reshape(h.shape[0], -1)
    h = jax.nn.relu(h @ params["fc1_w"].T + params["fc1_b"])
    h = h @ params["fc2_w"].T + params["fc2_b"]
    return h


# ----------------------------------- main ---------------------------------------
if __name__ == "__main__":
    key = jax.random.PRNGKey(0)
    kp, kx, ky = jax.random.split(key, 3)
    params = init_params(kp)

    B = 2
    # each input is half of a 28x28 MNIST image (split along height)
    x = jax.random.normal(kx, (B, 1, 14, 28), jnp.float32)
    y = jax.random.normal(ky, (B, 1, 14, 28), jnp.float32)

    ref = jax.block_until_ready(_reference_forward(params, x, y))

    # f32 MXU operands: matches the XLA reference tightly.
    prep_f32 = prepare_params(params, jnp.float32)
    out_f32 = jax.block_until_ready(cnn_mnist_forward(prep_f32, x, y))
    assert out_f32.shape == (B, 10), out_f32.shape
    assert jnp.allclose(out_f32, ref, atol=1e-3, rtol=1e-3), \
        float(jnp.max(jnp.abs(out_f32 - ref)))

    # bf16 MXU operands, f32 accumulation + f32 epilogue (v6e/v7x fast path).
    prep_bf16 = prepare_params(params, jnp.bfloat16)
    out_bf16 = jax.block_until_ready(cnn_mnist_forward(prep_bf16, x, y))
    assert out_bf16.shape == (B, 10), out_bf16.shape
    assert jnp.allclose(out_bf16, ref, atol=2e-1, rtol=2e-1), \
        float(jnp.max(jnp.abs(out_bf16 - ref)))

    print("KERNEL_OK")
</pallas_src>

<mosaic_0001>
module attributes {stable_mosaic.version = 11 : i64} {
  func.func @_fused_cnn_kernel(%arg0: i32, %arg1: memref<1x32x28xf32, #tpu.memory_space<vmem>>, %arg2: memref<4x28x14xf32, #tpu.memory_space<vmem>>, %arg3: memref<4x112x32xf32, #tpu.memory_space<vmem>>, %arg4: memref<112x1xf32, #tpu.memory_space<vmem>>, %arg5: memref<4x14x7xf32, #tpu.memory_space<vmem>>, %arg6: memref<4x112x112xf32, #tpu.memory_space<vmem>>, %arg7: memref<112x1xf32, #tpu.memory_space<vmem>>, %arg8: memref<7x256x112xf32, #tpu.memory_space<vmem>>, %arg9: memref<256x1xf32, #tpu.memory_space<vmem>>, %arg10: memref<16x256xf32, #tpu.memory_space<vmem>>, %arg11: memref<16x1xf32, #tpu.memory_space<vmem>>, %arg12: memref<1x16x1xf32, #tpu.memory_space<vmem>>) attributes {dimension_semantics = [#tpu.dimension_semantics<parallel>], iteration_bounds = array<i64: 2>, scalar_prefetch = 0 : i64, scratch_operands = 0 : i64, tpu.core_type = #tpu.core_type<tc>, window_params = [{transform_indices = @transform_0, window_bounds = array<i64: 1, 32, 28>}, {pipeline_mode = #tpu.pipeline_mode<synchronous>, transform_indices = @transform_1, window_bounds = array<i64: 4, 28, 14>}, {pipeline_mode = #tpu.pipeline_mode<synchronous>, transform_indices = @transform_2, window_bounds = array<i64: 4, 112, 32>}, {pipeline_mode = #tpu.pipeline_mode<synchronous>, transform_indices = @transform_3, window_bounds = array<i64: 112, 1>}, {pipeline_mode = #tpu.pipeline_mode<synchronous>, transform_indices = @transform_4, window_bounds = array<i64: 4, 14, 7>}, {pipeline_mode = #tpu.pipeline_mode<synchronous>, transform_indices = @transform_5, window_bounds = array<i64: 4, 112, 112>}, {pipeline_mode = #tpu.pipeline_mode<synchronous>, transform_indices = @transform_6, window_bounds = array<i64: 112, 1>}, {pipeline_mode = #tpu.pipeline_mode<synchronous>, transform_indices = @transform_7, window_bounds = array<i64: 7, 256, 112>}, {pipeline_mode = #tpu.pipeline_mode<synchronous>, transform_indices = @transform_8, window_bounds = array<i64: 256, 1>}, {pipeline_mode = #tpu.pipeline_mode<synchronous>, transform_indices = @transform_9, window_bounds = array<i64: 16, 256>}, {pipeline_mode = #tpu.pipeline_mode<synchronous>, transform_indices = @transform_10, window_bounds = array<i64: 16, 1>}, {transform_indices = @transform_11, window_bounds = array<i64: 1, 16, 1>}]} {
    %c0 = arith.constant 0 : index
    %c0_0 = arith.constant 0 : index
    %c0_1 = arith.constant 0 : index
    %0 = vector.load %arg1[%c0, %c0_0, %c0_1] : memref<1x32x28xf32, #tpu.memory_space<vmem>>, vector<1x32x28xf32>
    %1 = vector.shape_cast %0 : vector<1x32x28xf32> to vector<32x28xf32>
    %c0_2 = arith.constant 0 : index
    %c0_3 = arith.constant 0 : index
    %2 = vector.load %arg4[%c0_2, %c0_3] : memref<112x1xf32, #tpu.memory_space<vmem>>, vector<112x1xf32>
    %c0_4 = arith.constant 0 : index
    %c0_5 = arith.constant 0 : index
    %c0_6 = arith.constant 0 : index
    %3 = vector.load %arg2[%c0_4, %c0_5, %c0_6] : memref<4x28x14xf32, #tpu.memory_space<vmem>>, vector<1x28x14xf32>
    %4 = vector.shape_cast %3 : vector<1x28x14xf32> to vector<28x14xf32>
    %cst = arith.constant dense<0.000000e+00> : vector<32x14xf32>
    %5 = tpu.matmul %1, %4, %cst {dimension_numbers = #tpu.dot_dimension_numbers<[1], [0], [0], [1], [0, 0, 1, 1], [], []>} : vector<32x28xf32>, vector<28x14xf32>, vector<32x14xf32> -> vector<32x14xf32>
    %c0_7 = arith.constant 0 : index
    %c0_8 = arith.constant 0 : index
    %c0_9 = arith.constant 0 : index
    %6 = vector.load %arg3[%c0_7, %c0_8, %c0_9] : memref<4x112x32xf32, #tpu.memory_space<vmem>>, vector<1x112x32xf32>
    %7 = vector.shape_cast %6 : vector<1x112x32xf32> to vector<112x32xf32>
    %cst_10 = arith.constant dense<0.000000e+00> : vector<112x14xf32>
    %8 = tpu.matmul %7, %5, %cst_10 {dimension_numbers = #tpu.dot_dimension_numbers<[1], [0], [0], [1], [0, 0, 1, 1], [], []>} : vector<112x32xf32>, vector<32x14xf32>, vector<112x14xf32> -> vector<112x14xf32>
    %9 = vector.broadcast %2 : vector<112x1xf32> to vector<112x14xf32>
    %10 = arith.addf %9, %8 : vector<112x14xf32>
    %c1 = arith.constant 1 : index
    %c0_11 = arith.constant 0 : index
    %c0_12 = arith.constant 0 : index
    %11 = vector.load %arg2[%c1, %c0_11, %c0_12] : memref<4x28x14xf32, #tpu.memory_space<vmem>>, vector<1x28x14xf32>
    %12 = vector.shape_cast %11 : vector<1x28x14xf32> to vector<28x14xf32>
    %cst_13 = arith.constant dense<0.000000e+00> : vector<32x14xf32>
    %13 = tpu.matmul %1, %12, %cst_13 {dimension_numbers = #tpu.dot_dimension_numbers<[1], [0], [0], [1], [0, 0, 1, 1], [], []>} : vector<32x28xf32>, vector<28x14xf32>, vector<32x14xf32> -> vector<32x14xf32>
    %c1_14 = arith.constant 1 : index
    %c0_15 = arith.constant 0 : index
    %c0_16 = arith.constant 0 : index
    %14 = vector.load %arg3[%c1_14, %c0_15, %c0_16] : memref<4x112x32xf32, #tpu.memory_space<vmem>>, vector<1x112x32xf32>
    %15 = vector.shape_cast %14 : vector<1x112x32xf32> to vector<112x32xf32>
    %cst_17 = arith.constant dense<0.000000e+00> : vector<112x14xf32>
    %16 = tpu.matmul %15, %13, %cst_17 {dimension_numbers = #tpu.dot_dimension_numbers<[1], [0], [0], [1], [0, 0, 1, 1], [], []>} : vector<112x32xf32>, vector<32x14xf32>, vector<112x14xf32> -> vector<112x14xf32>
    %17 = arith.addf %10, %16 : vector<112x14xf32>
    %c2 = arith.constant 2 : index
    %c0_18 = arith.constant 0 : index
    %c0_19 = arith.constant 0 : index
    %18 = vector.load %arg2[%c2, %c0_18, %c0_19] : memref<4x28x14xf32, #tpu.memory_space<vmem>>, vector<1x28x14xf32>
    %19 = vector.shape_cast %18 : vector<1x28x14xf32> to vector<28x14xf32>
    %cst_20 = arith.constant dense<0.000000e+00> : vector<32x14xf32>
    %20 = tpu.matmul %1, %19, %cst_20 {dimension_numbers = #tpu.dot_dimension_numbers<[1], [0], [0], [1], [0, 0, 1, 1], [], []>} : vector<32x28xf32>, vector<28x14xf32>, vector<32x14xf32> -> vector<32x14xf32>
    %c2_21 = arith.constant 2 : index
    %c0_22 = arith.constant 0 : index
    %c0_23 = arith.constant 0 : index
    %21 = vector.load %arg3[%c2_21, %c0_22, %c0_23] : memref<4x112x32xf32, #tpu.memory_space<vmem>>, vector<1x112x32xf32>
    %22 = vector.shape_cast %21 : vector<1x112x32xf32> to vector<112x32xf32>
    %cst_24 = arith.constant dense<0.000000e+00> : vector<112x14xf32>
    %23 = tpu.matmul %22, %20, %cst_24 {dimension_numbers = #tpu.dot_dimension_numbers<[1], [0], [0], [1], [0, 0, 1, 1], [], []>} : vector<112x32xf32>, vector<32x14xf32>, vector<112x14xf32> -> vector<112x14xf32>
    %24 = arith.addf %17, %23 : vector<112x14xf32>
    %c3 = arith.constant 3 : index
    %c0_25 = arith.constant 0 : index
    %c0_26 = arith.constant 0 : index
    %25 = vector.load %arg2[%c3, %c0_25, %c0_26] : memref<4x28x14xf32, #tpu.memory_space<vmem>>, vector<1x28x14xf32>
    %26 = vector.shape_cast %25 : vector<1x28x14xf32> to vector<28x14xf32>
    %cst_27 = arith.constant dense<0.000000e+00> : vector<32x14xf32>
    %27 = tpu.matmul %1, %26, %cst_27 {dimension_numbers = #tpu.dot_dimension_numbers<[1], [0], [0], [1], [0, 0, 1, 1], [], []>} : vector<32x28xf32>, vector<28x14xf32>, vector<32x14xf32> -> vector<32x14xf32>
    %c3_28 = arith.constant 3 : index
    %c0_29 = arith.constant 0 : index
    %c0_30 = arith.constant 0 : index
    %28 = vector.load %arg3[%c3_28, %c0_29, %c0_30] : memref<4x112x32xf32, #tpu.memory_space<vmem>>, vector<1x112x32xf32>
    %29 = vector.shape_cast %28 : vector<1x112x32xf32> to vector<112x32xf32>
    %cst_31 = arith.constant dense<0.000000e+00> : vector<112x14xf32>
    %30 = tpu.matmul %29, %27, %cst_31 {dimension_numbers = #tpu.dot_dimension_numbers<[1], [0], [0], [1], [0, 0, 1, 1], [], []>} : vector<112x32xf32>, vector<32x14xf32>, vector<112x14xf32> -> vector<112x14xf32>
    %31 = arith.addf %24, %30 : vector<112x14xf32>
    %cst_32 = arith.constant 0.000000e+00 : f32
    %32 = vector.broadcast %cst_32 : f32 to vector<112x14xf32>
    %33 = arith.maximumf %31, %32 : vector<112x14xf32>
    %c0_33 = arith.constant 0 : index
    %c0_34 = arith.constant 0 : index
    %34 = vector.load %arg7[%c0_33, %c0_34] : memref<112x1xf32, #tpu.memory_space<vmem>>, vector<112x1xf32>
    %c0_35 = arith.constant 0 : index
    %c0_36 = arith.constant 0 : index
    %c0_37 = arith.constant 0 : index
    %35 = vector.load %arg5[%c0_35, %c0_36, %c0_37] : memref<4x14x7xf32, #tpu.memory_space<vmem>>, vector<1x14x7xf32>
    %36 = vector.shape_cast %35 : vector<1x14x7xf32> to vector<14x7xf32>
    %cst_38 = arith.constant dense<0.000000e+00> : vector<112x7xf32>
    %37 = tpu.matmul %33, %36, %cst_38 {dimension_numbers = #tpu.dot_dimension_numbers<[1], [0], [0], [1], [0, 0, 1, 1], [], []>} : vector<112x14xf32>, vector<14x7xf32>, vector<112x7xf32> -> vector<112x7xf32>
    %c0_39 = arith.constant 0 : index
    %c0_40 = arith.constant 0 : index
    %c0_41 = arith.constant 0 : index
    %38 = vector.load %arg6[%c0_39, %c0_40, %c0_41] : memref<4x112x112xf32, #tpu.memory_space<vmem>>, vector<1x112x112xf32>
    %39 = vector.shape_cast %38 : vector<1x112x112xf32> to vector<112x112xf32>
    %cst_42 = arith.constant dense<0.000000e+00> : vector<112x7xf32>
    %40 = tpu.matmul %39, %37, %cst_42 {dimension_numbers = #tpu.dot_dimension_numbers<[1], [0], [0], [1], [0, 0, 1, 1], [], []>} : vector<112x112xf32>, vector<112x7xf32>, vector<112x7xf32> -> vector<112x7xf32>
    %41 = vector.broadcast %34 : vector<112x1xf32> to vector<112x7xf32>
    %42 = arith.addf %41, %40 : vector<112x7xf32>
    %c1_43 = arith.constant 1 : index
    %c0_44 = arith.constant 0 : index
    %c0_45 = arith.constant 0 : index
    %43 = vector.load %arg5[%c1_43, %c0_44, %c0_45] : memref<4x14x7xf32, #tpu.memory_space<vmem>>, vector<1x14x7xf32>
    %44 = vector.shape_cast %43 : vector<1x14x7xf32> to vector<14x7xf32>
    %cst_46 = arith.constant dense<0.000000e+00> : vector<112x7xf32>
    %45 = tpu.matmul %33, %44, %cst_46 {dimension_numbers = #tpu.dot_dimension_numbers<[1], [0], [0], [1], [0, 0, 1, 1], [], []>} : vector<112x14xf32>, vector<14x7xf32>, vector<112x7xf32> -> vector<112x7xf32>
    %c1_47 = arith.constant 1 : index
    %c0_48 = arith.constant 0 : index
    %c0_49 = arith.constant 0 : index
    %46 = vector.load %arg6[%c1_47, %c0_48, %c0_49] : memref<4x112x112xf32, #tpu.memory_space<vmem>>, vector<1x112x112xf32>
    %47 = vector.shape_cast %46 : vector<1x112x112xf32> to vector<112x112xf32>
    %cst_50 = arith.constant dense<0.000000e+00> : vector<112x7xf32>
    %48 = tpu.matmul %47, %45, %cst_50 {dimension_numbers = #tpu.dot_dimension_numbers<[1], [0], [0], [1], [0, 0, 1, 1], [], []>} : vector<112x112xf32>, vector<112x7xf32>, vector<112x7xf32> -> vector<112x7xf32>
    %49 = arith.addf %42, %48 : vector<112x7xf32>
    %c2_51 = arith.constant 2 : index
    %c0_52 = arith.constant 0 : index
    %c0_53 = arith.constant 0 : index
    %50 = vector.load %arg5[%c2_51, %c0_52, %c0_53] : memref<4x14x7xf32, #tpu.memory_space<vmem>>, vector<1x14x7xf32>
    %51 = vector.shape_cast %50 : vector<1x14x7xf32> to vector<14x7xf32>
    %cst_54 = arith.constant dense<0.000000e+00> : vector<112x7xf32>
    %52 = tpu.matmul %33, %51, %cst_54 {dimension_numbers = #tpu.dot_dimension_numbers<[1], [0], [0], [1], [0, 0, 1, 1], [], []>} : vector<112x14xf32>, vector<14x7xf32>, vector<112x7xf32> -> vector<112x7xf32>
    %c2_55 = arith.constant 2 : index
    %c0_56 = arith.constant 0 : index
    %c0_57 = arith.constant 0 : index
    %53 = vector.load %arg6[%c2_55, %c0_56, %c0_57] : memref<4x112x112xf32, #tpu.memory_space<vmem>>, vector<1x112x112xf32>
    %54 = vector.shape_cast %53 : vector<1x112x112xf32> to vector<112x112xf32>
    %cst_58 = arith.constant dense<0.000000e+00> : vector<112x7xf32>
    %55 = tpu.matmul %54, %52, %cst_58 {dimension_numbers = #tpu.dot_dimension_numbers<[1], [0], [0], [1], [0, 0, 1, 1], [], []>} : vector<112x112xf32>, vector<112x7xf32>, vector<112x7xf32> -> vector<112x7xf32>
    %56 = arith.addf %49, %55 : vector<112x7xf32>
    %c3_59 = arith.constant 3 : index
    %c0_60 = arith.constant 0 : index
    %c0_61 = arith.constant 0 : index
    %57 = vector.load %arg5[%c3_59, %c0_60, %c0_61] : memref<4x14x7xf32, #tpu.memory_space<vmem>>, vector<1x14x7xf32>
    %58 = vector.shape_cast %57 : vector<1x14x7xf32> to vector<14x7xf32>
    %cst_62 = arith.constant dense<0.000000e+00> : vector<112x7xf32>
    %59 = tpu.matmul %33, %58, %cst_62 {dimension_numbers = #tpu.dot_dimension_numbers<[1], [0], [0], [1], [0, 0, 1, 1], [], []>} : vector<112x14xf32>, vector<14x7xf32>, vector<112x7xf32> -> vector<112x7xf32>
    %c3_63 = arith.constant 3 : index
    %c0_64 = arith.constant 0 : index
    %c0_65 = arith.constant 0 : index
    %60 = vector.load %arg6[%c3_63, %c0_64, %c0_65] : memref<4x112x112xf32, #tpu.memory_space<vmem>>, vector<1x112x112xf32>
    %61 = vector.shape_cast %60 : vector<1x112x112xf32> to vector<112x112xf32>
    %cst_66 = arith.constant dense<0.000000e+00> : vector<112x7xf32>
    %62 = tpu.matmul %61, %59, %cst_66 {dimension_numbers = #tpu.dot_dimension_numbers<[1], [0], [0], [1], [0, 0, 1, 1], [], []>} : vector<112x112xf32>, vector<112x7xf32>, vector<112x7xf32> -> vector<112x7xf32>
    %63 = arith.addf %56, %62 : vector<112x7xf32>
    %cst_67 = arith.constant 0.000000e+00 : f32
    %64 = vector.broadcast %cst_67 : f32 to vector<112x7xf32>
    %65 = arith.maximumf %63, %64 : vector<112x7xf32>
    %c0_68 = arith.constant 0 : index
    %c0_69 = arith.constant 0 : index
    %66 = vector.load %arg9[%c0_68, %c0_69] : memref<256x1xf32, #tpu.memory_space<vmem>>, vector<256x1xf32>
    %c0_70 = arith.constant 0 : index
    %c0_71 = arith.constant 0 : index
    %c0_72 = arith.constant 0 : index
    %67 = vector.load %arg8[%c0_70, %c0_71, %c0_72] : memref<7x256x112xf32, #tpu.memory_space<vmem>>, vector<1x256x112xf32>
    %68 = vector.shape_cast %67 : vector<1x256x112xf32> to vector<256x112xf32>
    %69 = vector.extract_strided_slice %65 {offsets = [0, 0], sizes = [112, 1], strides = [1, 1]} : vector<112x7xf32> to vector<112x1xf32>
    %cst_73 = arith.constant dense<0.000000e+00> : vector<256x1xf32>
    %70 = tpu.matmul %68, %69, %cst_73 {dimension_numbers = #tpu.dot_dimension_numbers<[1], [0], [0], [1], [0, 0, 1, 1], [], []>} : vector<256x112xf32>, vector<112x1xf32>, vector<256x1xf32> -> vector<256x1xf32>
    %71 = arith.addf %66, %70 : vector<256x1xf32>
    %c1_74 = arith.constant 1 : index
    %c0_75 = arith.constant 0 : index
    %c0_76 = arith.constant 0 : index
    %72 = vector.load %arg8[%c1_74, %c0_75, %c0_76] : memref<7x256x112xf32, #tpu.memory_space<vmem>>, vector<1x256x112xf32>
    %73 = vector.shape_cast %72 : vector<1x256x112xf32> to vector<256x112xf32>
    %74 = vector.extract_strided_slice %65 {offsets = [0, 1], sizes = [112, 1], strides = [1, 1]} : vector<112x7xf32> to vector<112x1xf32>
    %cst_77 = arith.constant dense<0.000000e+00> : vector<256x1xf32>
    %75 = tpu.matmul %73, %74, %cst_77 {dimension_numbers = #tpu.dot_dimension_numbers<[1], [0], [0], [1], [0, 0, 1, 1], [], []>} : vector<256x112xf32>, vector<112x1xf32>, vector<256x1xf32> -> vector<256x1xf32>
    %76 = arith.addf %71, %75 : vector<256x1xf32>
    %c2_78 = arith.constant 2 : index
    %c0_79 = arith.constant 0 : index
    %c0_80 = arith.constant 0 : index
    %77 = vector.load %arg8[%c2_78, %c0_79, %c0_80] : memref<7x256x112xf32, #tpu.memory_space<vmem>>, vector<1x256x112xf32>
    %78 = vector.shape_cast %77 : vector<1x256x112xf32> to vector<256x112xf32>
    %79 = vector.extract_strided_slice %65 {offsets = [0, 2], sizes = [112, 1], strides = [1, 1]} : vector<112x7xf32> to vector<112x1xf32>
    %cst_81 = arith.constant dense<0.000000e+00> : vector<256x1xf32>
    %80 = tpu.matmul %78, %79, %cst_81 {dimension_numbers = #tpu.dot_dimension_numbers<[1], [0], [0], [1], [0, 0, 1, 1], [], []>} : vector<256x112xf32>, vector<112x1xf32>, vector<256x1xf32> -> vector<256x1xf32>
    %81 = arith.addf %76, %80 : vector<256x1xf32>
    %c3_82 = arith.constant 3 : index
    %c0_83 = arith.constant 0 : index
    %c0_84 = arith.constant 0 : index
    %82 = vector.load %arg8[%c3_82, %c0_83, %c0_84] : memref<7x256x112xf32, #tpu.memory_space<vmem>>, vector<1x256x112xf32>
    %83 = vector.shape_cast %82 : vector<1x256x112xf32> to vector<256x112xf32>
    %84 = vector.extract_strided_slice %65 {offsets = [0, 3], sizes = [112, 1], strides = [1, 1]} : vector<112x7xf32> to vector<112x1xf32>
    %cst_85 = arith.constant dense<0.000000e+00> : vector<256x1xf32>
    %85 = tpu.matmul %83, %84, %cst_85 {dimension_numbers = #tpu.dot_dimension_numbers<[1], [0], [0], [1], [0, 0, 1, 1], [], []>} : vector<256x112xf32>, vector<112x1xf32>, vector<256x1xf32> -> vector<256x1xf32>
    %86 = arith.addf %81, %85 : vector<256x1xf32>
    %c4 = arith.constant 4 : index
    %c0_86 = arith.constant 0 : index
    %c0_87 = arith.constant 0 : index
    %87 = vector.load %arg8[%c4, %c0_86, %c0_87] : memref<7x256x112xf32, #tpu.memory_space<vmem>>, vector<1x256x112xf32>
    %88 = vector.shape_cast %87 : vector<1x256x112xf32> to vector<256x112xf32>
    %89 = vector.extract_strided_slice %65 {offsets = [0, 4], sizes = [112, 1], strides = [1, 1]} : vector<112x7xf32> to vector<112x1xf32>
    %cst_88 = arith.constant dense<0.000000e+00> : vector<256x1xf32>
    %90 = tpu.matmul %88, %89, %cst_88 {dimension_numbers = #tpu.dot_dimension_numbers<[1], [0], [0], [1], [0, 0, 1, 1], [], []>} : vector<256x112xf32>, vector<112x1xf32>, vector<256x1xf32> -> vector<256x1xf32>
    %91 = arith.addf %86, %90 : vector<256x1xf32>
    %c5 = arith.constant 5 : index
    %c0_89 = arith.constant 0 : index
    %c0_90 = arith.constant 0 : index
    %92 = vector.load %arg8[%c5, %c0_89, %c0_90] : memref<7x256x112xf32, #tpu.memory_space<vmem>>, vector<1x256x112xf32>
    %93 = vector.shape_cast %92 : vector<1x256x112xf32> to vector<256x112xf32>
    %94 = vector.extract_strided_slice %65 {offsets = [0, 5], sizes = [112, 1], strides = [1, 1]} : vector<112x7xf32> to vector<112x1xf32>
    %cst_91 = arith.constant dense<0.000000e+00> : vector<256x1xf32>
    %95 = tpu.matmul %93, %94, %cst_91 {dimension_numbers = #tpu.dot_dimension_numbers<[1], [0], [0], [1], [0, 0, 1, 1], [], []>} : vector<256x112xf32>, vector<112x1xf32>, vector<256x1xf32> -> vector<256x1xf32>
    %96 = arith.addf %91, %95 : vector<256x1xf32>
    %c6 = arith.constant 6 : index
    %c0_92 = arith.constant 0 : index
    %c0_93 = arith.constant 0 : index
    %97 = vector.load %arg8[%c6, %c0_92, %c0_93] : memref<7x256x112xf32, #tpu.memory_space<vmem>>, vector<1x256x112xf32>
    %98 = vector.shape_cast %97 : vector<1x256x112xf32> to vector<256x112xf32>
    %99 = vector.extract_strided_slice %65 {offsets = [0, 6], sizes = [112, 1], strides = [1, 1]} : vector<112x7xf32> to vector<112x1xf32>
    %cst_94 = arith.constant dense<0.000000e+00> : vector<256x1xf32>
    %100 = tpu.matmul %98, %99, %cst_94 {dimension_numbers = #tpu.dot_dimension_numbers<[1], [0], [0], [1], [0, 0, 1, 1], [], []>} : vector<256x112xf32>, vector<112x1xf32>, vector<256x1xf32> -> vector<256x1xf32>
    %101 = arith.addf %96, %100 : vector<256x1xf32>
    %cst_95 = arith.constant 0.000000e+00 : f32
    %102 = vector.broadcast %cst_95 : f32 to vector<256x1xf32>
    %103 = arith.maximumf %101, %102 : vector<256x1xf32>
    %c0_96 = arith.constant 0 : index
    %c0_97 = arith.constant 0 : index
    %104 = vector.load %arg10[%c0_96, %c0_97] : memref<16x256xf32, #tpu.memory_space<vmem>>, vector<16x256xf32>
    %cst_98 = arith.constant dense<0.000000e+00> : vector<16x1xf32>
    %105 = tpu.matmul %104, %103, %cst_98 {dimension_numbers = #tpu.dot_dimension_numbers<[1], [0], [0], [1], [0, 0, 1, 1], [], []>} : vector<16x256xf32>, vector<256x1xf32>, vector<16x1xf32> -> vector<16x1xf32>
    %c0_99 = arith.constant 0 : index
    %c0_100 = arith.constant 0 : index
    %106 = vector.load %arg11[%c0_99, %c0_100] : memref<16x1xf32, #tpu.memory_space<vmem>>, vector<16x1xf32>
    %107 = arith.addf %105, %106 : vector<16x1xf32>
    %c0_101 = arith.constant 0 : index
    %c0_102 = arith.constant 0 : index
    %c0_103 = arith.constant 0 : index
    %108 = vector.load %arg12[%c0_101, %c0_102, %c0_103] : memref<1x16x1xf32, #tpu.memory_space<vmem>>, vector<1x16x1xf32>
    %109 = vector.shape_cast %108 : vector<1x16x1xf32> to vector<16x1xf32>
    %110 = vector.shape_cast %107 : vector<16x1xf32> to vector<1x16x1xf32>
    tpu.vector_store %arg12[%c0_101, %c0_102, %c0_103], %110 {strides = array<i32>} : memref<1x16x1xf32, #tpu.memory_space<vmem>>, vector<1x16x1xf32>,
    return
  }
  func.func @transform_0(%arg0: i32) -> (i32, i32, i32) {
    %c0_i32 = arith.constant 0 : i32
    %c0_i32_0 = arith.constant 0 : i32
    %c0_i32_1 = arith.constant 0 : i32
    return %arg0, %c0_i32, %c0_i32_0 : i32, i32, i32
  }
  func.func @transform_1(%arg0: i32) -> (i32, i32, i32) {
    %c0_i32 = arith.constant 0 : i32
    %c0_i32_0 = arith.constant 0 : i32
    %c0_i32_1 = arith.constant 0 : i32
    %c0_i32_2 = arith.constant 0 : i32
    return %c0_i32, %c0_i32_0, %c0_i32_1 : i32, i32, i32
  }
  func.func @transform_2(%arg0: i32) -> (i32, i32, i32) {
    %c0_i32 = arith.constant 0 : i32
    %c0_i32_0 = arith.constant 0 : i32
    %c0_i32_1 = arith.constant 0 : i32
    %c0_i32_2 = arith.constant 0 : i32
    return %c0_i32, %c0_i32_0, %c0_i32_1 : i32, i32, i32
  }
  func.func @transform_3(%arg0: i32) -> (i32, i32) {
    %c0_i32 = arith.constant 0 : i32
    %c0_i32_0 = arith.constant 0 : i32
    %c0_i32_1 = arith.constant 0 : i32
    return %c0_i32, %c0_i32_0 : i32, i32
  }
  func.func @transform_4(%arg0: i32) -> (i32, i32, i32) {
    %c0_i32 = arith.constant 0 : i32
    %c0_i32_0 = arith.constant 0 : i32
    %c0_i32_1 = arith.constant 0 : i32
    %c0_i32_2 = arith.constant 0 : i32
    return %c0_i32, %c0_i32_0, %c0_i32_1 : i32, i32, i32
  }
  func.func @transform_5(%arg0: i32) -> (i32, i32, i32) {
    %c0_i32 = arith.constant 0 : i32
    %c0_i32_0 = arith.constant 0 : i32
    %c0_i32_1 = arith.constant 0 : i32
    %c0_i32_2 = arith.constant 0 : i32
    return %c0_i32, %c0_i32_0, %c0_i32_1 : i32, i32, i32
  }
  func.func @transform_6(%arg0: i32) -> (i32, i32) {
    %c0_i32 = arith.constant 0 : i32
    %c0_i32_0 = arith.constant 0 : i32
    %c0_i32_1 = arith.constant 0 : i32
    return %c0_i32, %c0_i32_0 : i32, i32
  }
  func.func @transform_7(%arg0: i32) -> (i32, i32, i32) {
    %c0_i32 = arith.constant 0 : i32
    %c0_i32_0 = arith.constant 0 : i32
    %c0_i32_1 = arith.constant 0 : i32
    %c0_i32_2 = arith.constant 0 : i32
    return %c0_i32, %c0_i32_0, %c0_i32_1 : i32, i32, i32
  }
  func.func @transform_8(%arg0: i32) -> (i32, i32) {
    %c0_i32 = arith.constant 0 : i32
    %c0_i32_0 = arith.constant 0 : i32
    %c0_i32_1 = arith.constant 0 : i32
    return %c0_i32, %c0_i32_0 : i32, i32
  }
  func.func @transform_9(%arg0: i32) -> (i32, i32) {
    %c0_i32 = arith.constant 0 : i32
    %c0_i32_0 = arith.constant 0 : i32
    %c0_i32_1 = arith.constant 0 : i32
    return %c0_i32, %c0_i32_0 : i32, i32
  }
  func.func @transform_10(%arg0: i32) -> (i32, i32) {
    %c0_i32 = arith.constant 0 : i32
    %c0_i32_0 = arith.constant 0 : i32
    %c0_i32_1 = arith.constant 0 : i32
    return %c0_i32, %c0_i32_0 : i32, i32
  }
  func.func @transform_11(%arg0: i32) -> (i32, i32, i32) {
    %c0_i32 = arith.constant 0 : i32
    %c0_i32_0 = arith.constant 0 : i32
    %c0_i32_1 = arith.constant 0 : i32
    return %arg0, %c0_i32, %c0_i32_0 : i32, i32, i32
  }
}

</mosaic_0001>

<llo_original>
// kernel: cnn_mnist_forward.1
$region0: #{cnn_mnist_forward.1}
  #allocation0 [shape = 'u32[]', space=smem, size = 0x4, offset = 0x4, fixed_abs, tag = 'smem constant byte address 0x4 - core index']
  #allocation1 [shape = 'u32[72,128]{1,0:T(1,128)}', space=vmem, size = 0x9000, scoped, tag = 'internal scratch']
  %s0 = inlined_call_operand.vmem [shape: f32[2,32,28], index: 0, kind: input, shape index: {}]
  %s1 = inlined_call_operand.vmem [shape: f32[4,28,14], index: 1, kind: input, shape index: {}]
  %s2 = inlined_call_operand.vmem [shape: f32[4,112,32], index: 2, kind: input, shape index: {}]
  %s3 = inlined_call_operand.vmem [shape: f32[112,1], index: 3, kind: input, shape index: {}]
  %s4 = inlined_call_operand.vmem [shape: f32[4,14,7], index: 4, kind: input, shape index: {}]
  %s5 = inlined_call_operand.vmem [shape: f32[4,112,112], index: 5, kind: input, shape index: {}]
  %s6 = inlined_call_operand.vmem [shape: f32[112,1], index: 6, kind: input, shape index: {}]
  %s7 = inlined_call_operand.vmem [shape: f32[7,256,112], index: 7, kind: input, shape index: {}]
  %s8 = inlined_call_operand.vmem [shape: f32[256,1], index: 8, kind: input, shape index: {}]
  %s9 = inlined_call_operand.vmem [shape: f32[16,256], index: 9, kind: input, shape index: {}]
  %s10 = inlined_call_operand.vmem [shape: f32[16,1], index: 10, kind: input, shape index: {}]
  %s11 = inlined_call_operand.vmem [shape: f32[2,16,1], index: 11, kind: output, shape index: {}]
  %s12 = sld [smem:[#allocation0]]
  $region77: #{cnn_mnist_forward.1} parent=0
    _
  %s14 = ssub.s32 1, %s12
  %s15 = scalar_select 0, %s14, %s12
  loop: start=0, step=1, limit=4
  $region2: #{cnn_mnist_forward.1} parent=0 // loop_pre_header
    _
  $region3: #{cnn_mnist_forward.1} parent=0 // loop_header
    %s17 = sphi 0, %s21
    %p18 = scmp.ge.s32.totalorder %s17, 4
    %s27 = sphi 0, %s29
    %s30 = sphi 0, %s27
    %s31 = sphi 0, %s30
    %s47 = sphi 0, %s31
    %s51 = sphi 0, %s51
    %s53 = sphi 0, %s51
    %s54 = sphi 0, %s53
    %s68 = sphi 0, %s54
    %s72 = sphi 0, %s72
    %s74 = sphi 0, %s72
    %s75 = sphi 0, %s74
    %s89 = sphi 0, %s75
    %s93 = sphi 0, %s93
    %s95 = sphi 0, %s93
    %s96 = sphi 0, %s95
    %s110 = sphi 0, %s96
    %s114 = sphi 0, %s114
    %s116 = sphi 0, %s114
    %s117 = sphi 0, %s116
    %s131 = sphi 0, %s117
    %s135 = sphi 0, %s135
    %s137 = sphi 0, %s135
    %s138 = sphi 0, %s137
    %s152 = sphi 0, %s138
    %s156 = sphi 0, %s156
    %s158 = sphi 0, %s156
    %s159 = sphi 0, %s158
    %s173 = sphi 0, %s159
    %s177 = sphi 0, %s177
    %s179 = sphi 0, %s177
    %s180 = sphi 0, %s179
    %s194 = sphi 0, %s180
    %s198 = sphi 0, %s198
    %s200 = sphi 0, %s198
    %s201 = sphi 0, %s200
    %s215 = sphi 0, %s201
    %s219 = sphi 0, %s219
    %s221 = sphi 0, %s219
    %s222 = sphi 0, %s221
    %s236 = sphi 0, %s222
    %s240 = sphi 0, %s240
    %s242 = sphi 0, %s240
    %s243 = sphi 0, %s242
    %s257 = sphi 0, %s243
    %s263 = sphi 0, %s265
    %s266 = sphi 0, %s263
    %s267 = sphi 0, %s266
    %s283 = sphi 0, %s267
  $region4: #{cnn_mnist_forward.1} parent=0 // loop_header_branch
    %20 = sbr.rel (%p18) target = $region8
  $region5: #{cnn_mnist_forward.1} parent=0 // loop_body
    %s22 = ssub.s32 %s17, 1
    %s23 = ssub.s32 %s17, 2
    %s24 = sadd.s32 %s17, 1
    %s25 = ssub.s32 %s17, %s24
    %p26 = scmp.eq.s32.totalorder %s25, 0
    %s28 = sadd.s32 %s27, 1
    %s29 = scalar_select %p26, %s27, %s28
    %p32 = pneg %p26
    %p33 = scmp.eq.s32.totalorder %s17, 1
    %p34 = por %p32, %p33
    %p35 = scmp.ne.s32.totalorder %s27, %s30
    %p36 = scmp.eq.s32.totalorder %s17, 0
    %p37 = por %p35, %p36
    %p38 = scmp.ne.s32.totalorder %s27, %s30
    %p39 = scmp.eq.s32.totalorder %s22, 1
    %p40 = por %p38, %p39
    %p41 = scmp.ne.s32.totalorder %s30, %s31
    %p42 = scmp.eq.s32.totalorder %s22, 0
    %p43 = por %p41, %p42
    %p44 = scmp.ne.s32.totalorder %s30, %s31
    %p45 = scmp.eq.s32.totalorder %s23, 1
    %p46 = por %p44, %p45
    %p48 = scmp.ne.s32.totalorder %s31, %s47
    %p49 = scmp.eq.s32.totalorder %s23, 0
    %p50 = por %p48, %p49
    %s52 = sadd.s32 %s51, 1
    %p55 = scmp.eq.s32.totalorder %s17, 1
    %p56 = scmp.ne.s32.totalorder %s51, %s53
    %p57 = scmp.eq.s32.totalorder %s17, 0
    %p58 = por %p56, %p57
    %p59 = scmp.ne.s32.totalorder %s51, %s53
    %p60 = scmp.eq.s32.totalorder %s22, 1
    %p61 = por %p59, %p60
    %p62 = scmp.ne.s32.totalorder %s53, %s54
    %p63 = scmp.eq.s32.totalorder %s22, 0
    %p64 = por %p62, %p63
    %p65 = scmp.ne.s32.totalorder %s53, %s54
    %p66 = scmp.eq.s32.totalorder %s23, 1
    %p67 = por %p65, %p66
    %p69 = scmp.ne.s32.totalorder %s54, %s68
    %p70 = scmp.eq.s32.totalorder %s23, 0
    %p71 = por %p69, %p70
    %s73 = sadd.s32 %s72, 1
    %p76 = scmp.eq.s32.totalorder %s17, 1
    %p77 = scmp.ne.s32.totalorder %s72, %s74
    %p78 = scmp.eq.s32.totalorder %s17, 0
    %p79 = por %p77, %p78
    %p80 = scmp.ne.s32.totalorder %s72, %s74
    %p81 = scmp.eq.s32.totalorder %s22, 1
    %p82 = por %p80, %p81
    %p83 = scmp.ne.s32.totalorder %s74, %s75
    %p84 = scmp.eq.s32.totalorder %s22, 0
    %p85 = por %p83, %p84
    %p86 = scmp.ne.s32.totalorder %s74, %s75
    %p87 = scmp.eq.s32.totalorder %s23, 1
    %p88 = por %p86, %p87
    %p90 = scmp.ne.s32.totalorder %s75, %s89
    %p91 = scmp.eq.s32.totalorder %s23, 0
    %p92 = por %p90, %p91
    %s94 = sadd.s32 %s93, 1
    %p97 = scmp.eq.s32.totalorder %s17, 1
    %p98 = scmp.ne.s32.totalorder %s93, %s95
    %p99 = scmp.eq.s32.totalorder %s17, 0
    %p100 = por %p98, %p99
    %p101 = scmp.ne.s32.totalorder %s93, %s95
    %p102 = scmp.eq.s32.totalorder %s22, 1
    %p103 = por %p101, %p102
    %p104 = scmp.ne.s32.totalorder %s95, %s96
    %p105 = scmp.eq.s32.totalorder %s22, 0
    %p106 = por %p104, %p105
    %p107 = scmp.ne.s32.totalorder %s95, %s96
    %p108 = scmp.eq.s32.totalorder %s23, 1
    %p109 = por %p107, %p108
    %p111 = scmp.ne.s32.totalorder %s96, %s110
    %p112 = scmp.eq.s32.totalorder %s23, 0
    %p113 = por %p111, %p112
    %s115 = sadd.s32 %s114, 1
    %p118 = scmp.eq.s32.totalorder %s17, 1
    %p119 = scmp.ne.s32.totalorder %s114, %s116
    %p120 = scmp.eq.s32.totalorder %s17, 0
    %p121 = por %p119, %p120
    %p122 = scmp.ne.s32.totalorder %s114, %s116
    %p123 = scmp.eq.s32.totalorder %s22, 1
    %p124 = por %p122, %p123
    %p125 = scmp.ne.s32.totalorder %s116, %s117
    %p126 = scmp.eq.s32.totalorder %s22, 0
    %p127 = por %p125, %p126
    %p128 = scmp.ne.s32.totalorder %s116, %s117
    %p129 = scmp.eq.s32.totalorder %s23, 1
    %p130 = por %p128, %p129
    %p132 = scmp.ne.s32.totalorder %s117, %s131
    %p133 = scmp.eq.s32.totalorder %s23, 0
    %p134 = por %p132, %p133
    %s136 = sadd.s32 %s135, 1
    %p139 = scmp.eq.s32.totalorder %s17, 1
    %p140 = scmp.ne.s32.totalorder %s135, %s137
    %p141 = scmp.eq.s32.totalorder %s17, 0
    %p142 = por %p140, %p141
    %p143 = scmp.ne.s32.totalorder %s135, %s137
    %p144 = scmp.eq.s32.totalorder %s22, 1
    %p145 = por %p143, %p144
    %p146 = scmp.ne.s32.totalorder %s137, %s138
    %p147 = scmp.eq.s32.totalorder %s22, 0
    %p148 = por %p146, %p147
    %p149 = scmp.ne.s32.totalorder %s137, %s138
    %p150 = scmp.eq.s32.totalorder %s23, 1
    %p151 = por %p149, %p150
    %p153 = scmp.ne.s32.totalorder %s138, %s152
    %p154 = scmp.eq.s32.totalorder %s23, 0
    %p155 = por %p153, %p154
    %s157 = sadd.s32 %s156, 1
    %p160 = scmp.eq.s32.totalorder %s17, 1
    %p161 = scmp.ne.s32.totalorder %s156, %s158
    %p162 = scmp.eq.s32.totalorder %s17, 0
    %p163 = por %p161, %p162
    %p164 = scmp.ne.s32.totalorder %s156, %s158
    %p165 = scmp.eq.s32.totalorder %s22, 1
    %p166 = por %p164, %p165
    %p167 = scmp.ne.s32.totalorder %s158, %s159
    %p168 = scmp.eq.s32.totalorder %s22, 0
    %p169 = por %p167, %p168
    %p170 = scmp.ne.s32.totalorder %s158, %s159
    %p171 = scmp.eq.s32.totalorder %s23, 1
    %p172 = por %p170, %p171
    %p174 = scmp.ne.s32.totalorder %s159, %s173
    %p175 = scmp.eq.s32.totalorder %s23, 0
    %p176 = por %p174, %p175
    %s178 = sadd.s32 %s177, 1
    %p181 = scmp.eq.s32.totalorder %s17, 1
    %p182 = scmp.ne.s32.totalorder %s177, %s179
    %p183 = scmp.eq.s32.totalorder %s17, 0
    %p184 = por %p182, %p183
    %p185 = scmp.ne.s32.totalorder %s177, %s179
    %p186 = scmp.eq.s32.totalorder %s22, 1
    %p187 = por %p185, %p186
    %p188 = scmp.ne.s32.totalorder %s179, %s180
    %p189 = scmp.eq.s32.totalorder %s22, 0
    %p190 = por %p188, %p189
    %p191 = scmp.ne.s32.totalorder %s179, %s180
    %p192 = scmp.eq.s32.totalorder %s23, 1
    %p193 = por %p191, %p192
    %p195 = scmp.ne.s32.totalorder %s180, %s194
    %p196 = scmp.eq.s32.totalorder %s23, 0
    %p197 = por %p195, %p196
    %s199 = sadd.s32 %s198, 1
    %p202 = scmp.eq.s32.totalorder %s17, 1
    %p203 = scmp.ne.s32.totalorder %s198, %s200
    %p204 = scmp.eq.s32.totalorder %s17, 0
    %p205 = por %p203, %p204
    %p206 = scmp.ne.s32.totalorder %s198, %s200
    %p207 = scmp.eq.s32.totalorder %s22, 1
    %p208 = por %p206, %p207
    %p209 = scmp.ne.s32.totalorder %s200, %s201
    %p210 = scmp.eq.s32.totalorder %s22, 0
    %p211 = por %p209, %p210
    %p212 = scmp.ne.s32.totalorder %s200, %s201
    %p213 = scmp.eq.s32.totalorder %s23, 1
    %p214 = por %p212, %p213
    %p216 = scmp.ne.s32.totalorder %s201, %s215
    %p217 = scmp.eq.s32.totalorder %s23, 0
    %p218 = por %p216, %p217
    %s220 = sadd.s32 %s219, 1
    %p223 = scmp.eq.s32.totalorder %s17, 1
    %p224 = scmp.ne.s32.totalorder %s219, %s221
    %p225 = scmp.eq.s32.totalorder %s17, 0
    %p226 = por %p224, %p225
    %p227 = scmp.ne.s32.totalorder %s219, %s221
    %p228 = scmp.eq.s32.totalorder %s22, 1
    %p229 = por %p227, %p228
    %p230 = scmp.ne.s32.totalorder %s221, %s222
    %p231 = scmp.eq.s32.totalorder %s22, 0
    %p232 = por %p230, %p231
    %p233 = scmp.ne.s32.totalorder %s221, %s222
    %p234 = scmp.eq.s32.totalorder %s23, 1
    %p235 = por %p233, %p234
    %p237 = scmp.ne.s32.totalorder %s222, %s236
    %p238 = scmp.eq.s32.totalorder %s23, 0
    %p239 = por %p237, %p238
    %s241 = sadd.s32 %s240, 1
    %p244 = scmp.eq.s32.totalorder %s17, 1
    %p245 = scmp.ne.s32.totalorder %s240, %s242
    %p246 = scmp.eq.s32.totalorder %s17, 0
    %p247 = por %p245, %p246
    %p248 = scmp.ne.s32.totalorder %s240, %s242
    %p249 = scmp.eq.s32.totalorder %s22, 1
    %p250 = por %p248, %p249
    %p251 = scmp.ne.s32.totalorder %s242, %s243
    %p252 = scmp.eq.s32.totalorder %s22, 0
    %p253 = por %p251, %p252
    %p254 = scmp.ne.s32.totalorder %s242, %s243
    %p255 = scmp.eq.s32.totalorder %s23, 1
    %p256 = por %p254, %p255
    %p258 = scmp.ne.s32.totalorder %s243, %s257
    %p259 = scmp.eq.s32.totalorder %s23, 0
    %p260 = por %p258, %p259
    %s261 = ssub.s32 %s17, %s24
    %p262 = scmp.eq.s32.totalorder %s261, 0
    %s264 = sadd.s32 %s263, 1
    %s265 = scalar_select %p262, %s263, %s264
    %p268 = pneg %p262
    %p269 = scmp.eq.s32.totalorder %s17, 1
    %p270 = por %p268, %p269
    %p271 = scmp.ne.s32.totalorder %s263, %s266
    %p272 = scmp.eq.s32.totalorder %s17, 0
    %p273 = por %p271, %p272
    %p274 = scmp.ne.s32.totalorder %s263, %s266
    %p275 = scmp.eq.s32.totalorder %s22, 1
    %p276 = por %p274, %p275
    %p277 = scmp.ne.s32.totalorder %s266, %s267
    %p278 = scmp.eq.s32.totalorder %s22, 0
    %p279 = por %p277, %p278
    %p280 = scmp.ne.s32.totalorder %s266, %s267
    %p281 = scmp.eq.s32.totalorder %s23, 1
    %p282 = por %p280, %p281
    %p284 = scmp.ne.s32.totalorder %s267, %s283
    %p285 = scmp.eq.s32.totalorder %s23, 0
    %p286 = por %p284, %p285
    %p287 = scmp.le.s32.totalorder 1, %s17
    %p288 = scmp.lt.s32.totalorder %s17, 3
    %p289 = pnand %p287, %p288
    %p290 = pneg %p289
    // Predicated region
    $region9: #{cnn_mnist_forward.1} parent=5 // pred_check
      _
    $region10: #{cnn_mnist_forward.1} parent=5 // pred_check_branch
      %292 = sbr.rel (%p289) target = $region12
    $region11: #{cnn_mnist_forward.1} parent=5 // pred_region
      %s293 = ssub.s32 %s17, 1
      // Predicated region
      $region13: #{cnn_mnist_forward.1} parent=11 // pred_check
        %p294 = pneg %p64
      $region14: #{cnn_mnist_forward.1} parent=11 // pred_check_branch
        %296 = sbr.rel (%p294) target = $region16
      $region15: #{cnn_mnist_forward.1} parent=11 // pred_region
        _
      $region16: #{cnn_mnist_forward.1} parent=11 // pred_fallthru
        _
      // Predicated region
      $region17: #{cnn_mnist_forward.1} parent=11 // pred_check
        %p297 = pneg %p85
      $region18: #{cnn_mnist_forward.1} parent=11 // pred_check_branch
        %299 = sbr.rel (%p297) target = $region20
      $region19: #{cnn_mnist_forward.1} parent=11 // pred_region
        _
      $region20: #{cnn_mnist_forward.1} parent=11 // pred_fallthru
        _
      // Predicated region
      $region21: #{cnn_mnist_forward.1} parent=11 // pred_check
        %p300 = pneg %p106
      $region22: #{cnn_mnist_forward.1} parent=11 // pred_check_branch
        %302 = sbr.rel (%p300) target = $region24
      $region23: #{cnn_mnist_forward.1} parent=11 // pred_region
        _
      $region24: #{cnn_mnist_forward.1} parent=11 // pred_fallthru
        _
      // Predicated region
      $region25: #{cnn_mnist_forward.1} parent=11 // pred_check
        %p303 = pneg %p127
      $region26: #{cnn_mnist_forward.1} parent=11 // pred_check_branch
        %305 = sbr.rel (%p303) target = $region28
      $region27: #{cnn_mnist_forward.1} parent=11 // pred_region
        _
      $region28: #{cnn_mnist_forward.1} parent=11 // pred_fallthru
        _
      // Predicated region
      $region29: #{cnn_mnist_forward.1} parent=11 // pred_check
        %p306 = pneg %p148
      $region30: #{cnn_mnist_forward.1} parent=11 // pred_check_branch
        %308 = sbr.rel (%p306) target = $region32
      $region31: #{cnn_mnist_forward.1} parent=11 // pred_region
        _
      $region32: #{cnn_mnist_forward.1} parent=11 // pred_fallthru
        _
      // Predicated region
      $region33: #{cnn_mnist_forward.1} parent=11 // pred_check
        %p309 = pneg %p169
      $region34: #{cnn_mnist_forward.1} parent=11 // pred_check_branch
        %311 = sbr.rel (%p309) target = $region36
      $region35: #{cnn_mnist_forward.1} parent=11 // pred_region
        _
      $region36: #{cnn_mnist_forward.1} parent=11 // pred_fallthru
        _
      // Predicated region
      $region37: #{cnn_mnist_forward.1} parent=11 // pred_check
        %p312 = pneg %p190
      $region38: #{cnn_mnist_forward.1} parent=11 // pred_check_branch
        %314 = sbr.rel (%p312) target = $region40
      $region39: #{cnn_mnist_forward.1} parent=11 // pred_region
        _
      $region40: #{cnn_mnist_forward.1} parent=11 // pred_fallthru
        _
      // Predicated region
      $region41: #{cnn_mnist_forward.1} parent=11 // pred_check
        %p315 = pneg %p211
      $region42: #{cnn_mnist_forward.1} parent=11 // pred_check_branch
        %317 = sbr.rel (%p315) target = $region44
      $region43: #{cnn_mnist_forward.1} parent=11 // pred_region
        _
      $region44: #{cnn_mnist_forward.1} parent=11 // pred_fallthru
        _
      // Predicated region
      $region45: #{cnn_mnist_forward.1} parent=11 // pred_check
        %p318 = pneg %p232
      $region46: #{cnn_mnist_forward.1} parent=11 // pred_check_branch
        %320 = sbr.rel (%p318) target = $region48
      $region47: #{cnn_mnist_forward.1} parent=11 // pred_region
        _
      $region48: #{cnn_mnist_forward.1} parent=11 // pred_fallthru
        _
      // Predicated region
      $region49: #{cnn_mnist_forward.1} parent=11 // pred_check
        %p321 = pneg %p253
      $region50: #{cnn_mnist_forward.1} parent=11 // pred_check_branch
        %323 = sbr.rel (%p321) target = $region52
      $region51: #{cnn_mnist_forward.1} parent=11 // pred_region
        _
      $region52: #{cnn_mnist_forward.1} parent=11 // pred_fallthru
        _
    $region12: #{cnn_mnist_forward.1} parent=5 // pred_fallthru
      _
    %p324 = scmp.lt.s32.totalorder %s17, 2
    // Predicated region
    $region53: #{cnn_mnist_forward.1} parent=5 // pred_check
      %p325 = pneg %p324
    $region54: #{cnn_mnist_forward.1} parent=5 // pred_check_branch
      %327 = sbr.rel (%p325) target = $region56
    $region55: #{cnn_mnist_forward.1} parent=5 // pred_region
      // Predicated region
      $region57: #{cnn_mnist_forward.1} parent=55 // pred_check
        %p328 = pneg %p37
      $region58: #{cnn_mnist_forward.1} parent=55 // pred_check_branch
        %330 = sbr.rel (%p328) target = $region60
      $region59: #{cnn_mnist_forward.1} parent=55 // pred_region
        %p331 = scmp.lt.s32.totalorder %s17, 1
        %s332 = scalar_select %p331, %s17, 1
        %s333 = smul.addr %s332, 4
        %s334 = smul.addr %s333, 8
        %s335 = scalar_lea.vmem %s0, %s334
      $region60: #{cnn_mnist_forward.1} parent=55 // pred_fallthru
        _
    $region56: #{cnn_mnist_forward.1} parent=5 // pred_fallthru
      _
    %p336 = scmp.le.s32.totalorder 1, %s17
    %p337 = scmp.lt.s32.totalorder %s17, 3
    %p338 = pnand %p336, %p337
    %p339 = pneg %p338
    // Predicated region
    $region61: #{cnn_mnist_forward.1} parent=5 // pred_check
      _
    $region62: #{cnn_mnist_forward.1} parent=5 // pred_check_branch
      %341 = sbr.rel (%p338) target = $region64
    $region63: #{cnn_mnist_forward.1} parent=5 // pred_region
      %s342 = ssub.s32 %s17, 1
      %p343 = scmp.lt.s32.totalorder %s22, 1
      %s344 = scalar_select %p343, %s22, 1
      %s345 = smul.addr %s344, 4
      %s346 = smul.addr %s345, 8
      %s347 = scalar_lea.vmem %s0, %s346
      %p348 = pneg %p43
      %p349 = pneg %p40
      %p350 = pneg %p64
      %p351 = pneg %p61
      %p352 = pneg %p85
      %p353 = pneg %p82
      %p354 = pneg %p106
      %p355 = pneg %p103
      %p356 = pneg %p127
      %p357 = pneg %p124
      %p358 = pneg %p148
      %p359 = pneg %p145
      %p360 = pneg %p169
      %p361 = pneg %p166
      %p362 = pneg %p190
      %p363 = pneg %p187
      %p364 = pneg %p211
      %p365 = pneg %p208
      %p366 = pneg %p232
      %p367 = pneg %p229
      %p368 = pneg %p253
      %p369 = pneg %p250
      %p370 = pneg %p279
      %p371 = pneg %p276
      %p372 = scmp.lt.s32.totalorder %s22, 1
      %s373 = scalar_select %p372, %s22, 1
      %s374 = smul.addr %s373, 2
      %s375 = smul.addr %s374, 8
      %s376 = scalar_lea.vmem %s11, %s375
      %p377 = scmp.lt.s32.totalorder %s22, 1
      %s378 = scalar_select %p377, %s22, 1
      %s379 = smul.addr %s378, 4
      %s380 = smul.addr %s379, 8
      %s381 = scalar_lea.vmem %s0, %s380
      %p382 = scmp.lt.s32.totalorder %s22, 1
      %s383 = scalar_select %p382, %s22, 1
      %s384 = smul.addr %s383, 2
      %s385 = smul.addr %s384, 8
      %s386 = scalar_lea.vmem %s11, %s385
      %v387 = vld [vmem:[%s381] sm:$0xff]
      %v388 = vld [vmem:[%s381 + $0x8] sm:$0xff]
      %v389 = vld [vmem:[%s381 + $0x10] sm:$0xff]
      %v390 = vld [vmem:[%s381 + $0x18] sm:$0xff]
      %v391 = vld [vmem:[%s3] sm:$0xff]
      %v392 = vld [vmem:[%s3 + $0x8] sm:$0xff]
      %v393 = vld [vmem:[%s3 + $0x10] sm:$0xff]
      %v394 = vld [vmem:[%s3 + $0x18] sm:$0xff]
      %v395 = vld [vmem:[%s3 + $0x20] sm:$0xff]
      %v396 = vld [vmem:[%s3 + $0x28] sm:$0xff]
      %v397 = vld [vmem:[%s3 + $0x30] sm:$0xff]
      %v398 = vld [vmem:[%s3 + $0x38] sm:$0xff]
      %v399 = vld [vmem:[%s3 + $0x40] sm:$0xff]
      %v400 = vld [vmem:[%s3 + $0x48] sm:$0xff]
      %v401 = vld [vmem:[%s3 + $0x50] sm:$0xff]
      %v402 = vld [vmem:[%s3 + $0x58] sm:$0xff]
      %v403 = vld [vmem:[%s3 + $0x60] sm:$0xff]
      %v404 = vld [vmem:[%s3 + $0x68] sm:$0xff]
      %v405 = vld [vmem:[%s1] sm:$0xff]
      %v406 = vld [vmem:[%s1 + $0x8] sm:$0xff]
      %v407 = vld [vmem:[%s1 + $0x10] sm:$0xff]
      %v408 = vld [vmem:[%s1 + $0x18] sm:$0xf]
      %vm409 = vcmask 228352
      %v411 = vsel %vm409, %v387, 0
      %v414 = vsel %vm409, %v388, 0
      %v417 = vsel %vm409, %v389, 0
      %v420 = vsel %vm409, %v390, 0
      %vm422 = vcmask 1043456
      %v424 = vsel %vm422, %v408, 0
      %426 = vmatpush.msra.mxu0 0.0
      %427 = vmatpush.msra.mxu0 0.0
      %428 = vmatpush.msra.mxu0 0.0
      %429 = vmatpush.msra.mxu0 0.0
      %430 = vmatpush.msra.mxu0 0.0
      %431 = vmatpush.msra.mxu0 0.0
      %432 = vmatpush.msra.mxu0 0.0
      %433 = vmatpush.msra.mxu0 0.0
      %434 = vmatpush.msra.mxu0 0.0
      %435 = vmatpush.msra.mxu0 0.0
      %436 = vmatpush.msra.mxu0 0.0
      %437 = vmatpush.msra.mxu0 0.0
      %438 = vmatpush.msra.mxu0 %v424
      %439 = vmatpush.msra.mxu0 %v407
      %440 = vmatpush.msra.mxu0 %v406
      %441 = vmatpush.msra.mxu0 %v405
      %442 = vmatmul.f32.gmra.mxu0 %v411
      %v443 = vpop.f32.mrf.mxu0
      %v444 = vadd.f32 0.0, %v443
      %445 = vmatmul.f32.gmra.mxu0 %v414
      %v446 = vpop.f32.mrf.mxu0
      %v447 = vadd.f32 0.0, %v446
      %448 = vmatmul.f32.gmra.mxu0 %v417
      %v449 = vpop.f32.mrf.mxu0
      %v450 = vadd.f32 0.0, %v449
      %451 = vmatmul.f32.gmra.mxu0 %v420
      %v452 = vpop.f32.mrf.mxu0
      %v453 = vadd.f32 0.0, %v452
      %454 = vdwg.mxu0
      %v455 = vld [vmem:[%s2] sm:$0xff]
      %v456 = vld [vmem:[%s2 + $0x8] sm:$0xff]
      %v457 = vld [vmem:[%s2 + $0x10] sm:$0xff]
      %v458 = vld [vmem:[%s2 + $0x18] sm:$0xff]
      %v459 = vld [vmem:[%s2 + $0x20] sm:$0xff]
      %v460 = vld [vmem:[%s2 + $0x28] sm:$0xff]
      %v461 = vld [vmem:[%s2 + $0x30] sm:$0xff]
      %v462 = vld [vmem:[%s2 + $0x38] sm:$0xff]
      %v463 = vld [vmem:[%s2 + $0x40] sm:$0xff]
      %v464 = vld [vmem:[%s2 + $0x48] sm:$0xff]
      %v465 = vld [vmem:[%s2 + $0x50] sm:$0xff]
      %v466 = vld [vmem:[%s2 + $0x58] sm:$0xff]
      %v467 = vld [vmem:[%s2 + $0x60] sm:$0xff]
      %v468 = vld [vmem:[%s2 + $0x68] sm:$0xff]
      %vm469 = vcmask 261120
      %v471 = vsel %vm469, %v455, 0
      %v474 = vsel %vm469, %v456, 0
      %v477 = vsel %vm469, %v457, 0
      %v480 = vsel %vm469, %v458, 0
      %v483 = vsel %vm469, %v459, 0
      %v486 = vsel %vm469, %v460, 0
      %v489 = vsel %vm469, %v461, 0
      %v492 = vsel %vm469, %v462, 0
      %v495 = vsel %vm469, %v463, 0
      %v498 = vsel %vm469, %v464, 0
      %v501 = vsel %vm469, %v465, 0
      %v504 = vsel %vm469, %v466, 0
      %v507 = vsel %vm469, %v467, 0
      %v510 = vsel %vm469, %v468, 0
      %512 = vmatpush.msra.mxu0 0.0
      %513 = vmatpush.msra.mxu0 0.0
      %514 = vmatpush.msra.mxu0 0.0
      %515 = vmatpush.msra.mxu0 0.0
      %516 = vmatpush.msra.mxu0 0.0
      %517 = vmatpush.msra.mxu0 0.0
      %518 = vmatpush.msra.mxu0 0.0
      %519 = vmatpush.msra.mxu0 0.0
      %520 = vmatpush.msra.mxu0 0.0
      %521 = vmatpush.msra.mxu0 0.0
      %522 = vmatpush.msra.mxu0 0.0
      %523 = vmatpush.msra.mxu0 0.0
      %524 = vmatpush.msra.mxu0 %v453
      %525 = vmatpush.msra.mxu0 %v450
      %526 = vmatpush.msra.mxu0 %v447
      %527 = vmatpush.msra.mxu0 %v444
      %528 = vmatmul.f32.gmra.mxu0 %v471
      %v529 = vpop.f32.mrf.mxu0
      %v530 = vadd.f32 0.0, %v529
      %531 = vmatmul.f32.gmra.mxu0 %v474
      %v532 = vpop.f32.mrf.mxu0
      %v533 = vadd.f32 0.0, %v532
      %534 = vmatmul.f32.gmra.mxu0 %v477
      %v535 = vpop.f32.mrf.mxu0
      %v536 = vadd.f32 0.0, %v535
      %537 = vmatmul.f32.gmra.mxu0 %v480
      %v538 = vpop.f32.mrf.mxu0
      %v539 = vadd.f32 0.0, %v538
      %540 = vmatmul.f32.gmra.mxu0 %v483
      %v541 = vpop.f32.mrf.mxu0
      %v542 = vadd.f32 0.0, %v541
      %543 = vmatmul.f32.gmra.mxu0 %v486
      %v544 = vpop.f32.mrf.mxu0
      %v545 = vadd.f32 0.0, %v544
      %546 = vmatmul.f32.gmra.mxu0 %v489
      %v547 = vpop.f32.mrf.mxu0
      %v548 = vadd.f32 0.0, %v547
      %549 = vmatmul.f32.gmra.mxu0 %v492
      %v550 = vpop.f32.mrf.mxu0
      %v551 = vadd.f32 0.0, %v550
      %552 = vmatmul.f32.gmra.mxu0 %v495
      %v553 = vpop.f32.mrf.mxu0
      %v554 = vadd.f32 0.0, %v553
      %555 = vmatmul.f32.gmra.mxu0 %v498
      %v556 = vpop.f32.mrf.mxu0
      %v557 = vadd.f32 0.0, %v556
      %558 = vmatmul.f32.gmra.mxu0 %v501
      %v559 = vpop.f32.mrf.mxu0
      %v560 = vadd.f32 0.0, %v559
      %561 = vmatmul.f32.gmra.mxu0 %v504
      %v562 = vpop.f32.mrf.mxu0
      %v563 = vadd.f32 0.0, %v562
      %564 = vmatmul.f32.gmra.mxu0 %v507
      %v565 = vpop.f32.mrf.mxu0
      %v566 = vadd.f32 0.0, %v565
      %567 = vmatmul.f32.gmra.mxu0 %v510
      %v568 = vpop.f32.mrf.mxu0
      %v569 = vadd.f32 0.0, %v568
      %570 = vdwg.mxu0
      %572 = vset.pattern.permute.xlu0 0
      %573 = vperm.xlu0 %572, %v391
      %v574 = vpop.permute.xlu0 %573
      %577 = vset.pattern.permute.xlu0 0
      %578 = vperm.xlu0 %577, %v392
      %v579 = vpop.permute.xlu0 %578
      %582 = vset.pattern.permute.xlu0 0
      %583 = vperm.xlu0 %582, %v393
      %v584 = vpop.permute.xlu0 %583
      %587 = vset.pattern.permute.xlu0 0
      %588 = vperm.xlu0 %587, %v394
      %v589 = vpop.permute.xlu0 %588
      %592 = vset.pattern.permute.xlu0 0
      %593 = vperm.xlu0 %592, %v395
      %v594 = vpop.permute.xlu0 %593
      %597 = vset.pattern.permute.xlu0 0
      %598 = vperm.xlu0 %597, %v396
      %v599 = vpop.permute.xlu0 %598
      %602 = vset.pattern.permute.xlu0 0
      %603 = vperm.xlu0 %602, %v397
      %v604 = vpop.permute.xlu0 %603
      %607 = vset.pattern.permute.xlu0 0
      %608 = vperm.xlu0 %607, %v398
      %v609 = vpop.permute.xlu0 %608
      %612 = vset.pattern.permute.xlu0 0
      %613 = vperm.xlu0 %612, %v399
      %v614 = vpop.permute.xlu0 %613
      %617 = vset.pattern.permute.xlu0 0
      %618 = vperm.xlu0 %617, %v400
      %v619 = vpop.permute.xlu0 %618
      %622 = vset.pattern.permute.xlu0 0
      %623 = vperm.xlu0 %622, %v401
      %v624 = vpop.permute.xlu0 %623
      %627 = vset.pattern.permute.xlu0 0
      %628 = vperm.xlu0 %627, %v402
      %v629 = vpop.permute.xlu0 %628
      %632 = vset.pattern.permute.xlu0 0
      %633 = vperm.xlu0 %632, %v403
      %v634 = vpop.permute.xlu0 %633
      %637 = vset.pattern.permute.xlu0 0
      %638 = vperm.xlu0 %637, %v404
      %v639 = vpop.permute.xlu0 %638
      %v641 = vadd.f32 %v574, %v530
      %v642 = vadd.f32 %v579, %v533
      %v643 = vadd.f32 %v584, %v536
      %v644 = vadd.f32 %v589, %v539
      %v645 = vadd.f32 %v594, %v542
      %v646 = vadd.f32 %v599, %v545
      %v647 = vadd.f32 %v604, %v548
      %v648 = vadd.f32 %v609, %v551
      %v649 = vadd.f32 %v614, %v554
      %v650 = vadd.f32 %v619, %v557
      %v651 = vadd.f32 %v624, %v560
      %v652 = vadd.f32 %v629, %v563
      %v653 = vadd.f32 %v634, %v566
      %v654 = vadd.f32 %v639, %v569
      %s655 = scalar_lea.vmem %s1, 32
      %v656 = vld [vmem:[%s655] sm:$0xff]
      %v657 = vld [vmem:[%s655 + $0x8] sm:$0xff]
      %v658 = vld [vmem:[%s655 + $0x10] sm:$0xff]
      %v659 = vld [vmem:[%s655 + $0x18] sm:$0xf]
      %v661 = vsel %vm422, %v659, 0
      %663 = vmatpush.msra.mxu0 0.0
      %664 = vmatpush.msra.mxu0 0.0
      %665 = vmatpush.msra.mxu0 0.0
      %666 = vmatpush.msra.mxu0 0.0
      %667 = vmatpush.msra.mxu0 0.0
      %668 = vmatpush.msra.mxu0 0.0
      %669 = vmatpush.msra.mxu0 0.0
      %670 = vmatpush.msra.mxu0 0.0
      %671 = vmatpush.msra.mxu0 0.0
      %672 = vmatpush.msra.mxu0 0.0
      %673 = vmatpush.msra.mxu0 0.0
      %674 = vmatpush.msra.mxu0 0.0
      %675 = vmatpush.msra.mxu0 %v661
      %676 = vmatpush.msra.mxu0 %v658
      %677 = vmatpush.msra.mxu0 %v657
      %678 = vmatpush.msra.mxu0 %v656
      %679 = vmatmul.f32.gmra.mxu0 %v411
      %v680 = vpop.f32.mrf.mxu0
      %v681 = vadd.f32 0.0, %v680
      %682 = vmatmul.f32.gmra.mxu0 %v414
      %v683 = vpop.f32.mrf.mxu0
      %v684 = vadd.f32 0.0, %v683
      %685 = vmatmul.f32.gmra.mxu0 %v417
      %v686 = vpop.f32.mrf.mxu0
      %v687 = vadd.f32 0.0, %v686
      %688 = vmatmul.f32.gmra.mxu0 %v420
      %v689 = vpop.f32.mrf.mxu0
      %v690 = vadd.f32 0.0, %v689
      %691 = vdwg.mxu0
      %s692 = scalar_lea.vmem %s2, 112
      %v693 = vld [vmem:[%s692] sm:$0xff]
      %v694 = vld [vmem:[%s692 + $0x8] sm:$0xff]
      %v695 = vld [vmem:[%s692 + $0x10] sm:$0xff]
      %v696 = vld [vmem:[%s692 + $0x18] sm:$0xff]
      %v697 = vld [vmem:[%s692 + $0x20] sm:$0xff]
      %v698 = vld [vmem:[%s692 + $0x28] sm:$0xff]
      %v699 = vld [vmem:[%s692 + $0x30] sm:$0xff]
      %v700 = vld [vmem:[%s692 + $0x38] sm:$0xff]
      %v701 = vld [vmem:[%s692 + $0x40] sm:$0xff]
      %v702 = vld [vmem:[%s692 + $0x48] sm:$0xff]
      %v703 = vld [vmem:[%s692 + $0x50] sm:$0xff]
      %v704 = vld [vmem:[%s692 + $0x58] sm:$0xff]
      %v705 = vld [vmem:[%s692 + $0x60] sm:$0xff]
      %v706 = vld [vmem:[%s692 + $0x68] sm:$0xff]
      %v708 = vsel %vm469, %v693, 0
      %v711 = vsel %vm469, %v694, 0
      %v714 = vsel %vm469, %v695, 0
      %v717 = vsel %vm469, %v696, 0
      %v720 = vsel %vm469, %v697, 0
      %v723 = vsel %vm469, %v698, 0
      %v726 = vsel %vm469, %v699, 0
      %v729 = vsel %vm469, %v700, 0
      %v732 = vsel %vm469, %v701, 0
      %v735 = vsel %vm469, %v702, 0
      %v738 = vsel %vm469, %v703, 0
      %v741 = vsel %vm469, %v704, 0
      %v744 = vsel %vm469, %v705, 0
      %v747 = vsel %vm469, %v706, 0
      %749 = vmatpush.msra.mxu0 0.0
      %750 = vmatpush.msra.mxu0 0.0
      %751 = vmatpush.msra.mxu0 0.0
      %752 = vmatpush.msra.mxu0 0.0
      %753 = vmatpush.msra.mxu0 0.0
      %754 = vmatpush.msra.mxu0 0.0
      %755 = vmatpush.msra.mxu0 0.0
      %756 = vmatpush.msra.mxu0 0.0
      %757 = vmatpush.msra.mxu0 0.0
      %758 = vmatpush.msra.mxu0 0.0
      %759 = vmatpush.msra.mxu0 0.0
      %760 = vmatpush.msra.mxu0 0.0
      %761 = vmatpush.msra.mxu0 %v690
      %762 = vmatpush.msra.mxu0 %v687
      %763 = vmatpush.msra.mxu0 %v684
      %764 = vmatpush.msra.mxu0 %v681
      %765 = vmatmul.f32.gmra.mxu0 %v708
      %v766 = vpop.f32.mrf.mxu0
      %v767 = vadd.f32 0.0, %v766
      %768 = vmatmul.f32.gmra.mxu0 %v711
      %v769 = vpop.f32.mrf.mxu0
      %v770 = vadd.f32 0.0, %v769
      %771 = vmatmul.f32.gmra.mxu0 %v714
      %v772 = vpop.f32.mrf.mxu0
      %v773 = vadd.f32 0.0, %v772
      %774 = vmatmul.f32.gmra.mxu0 %v717
      %v775 = vpop.f32.mrf.mxu0
      %v776 = vadd.f32 0.0, %v775
      %777 = vmatmul.f32.gmra.mxu0 %v720
      %v778 = vpop.f32.mrf.mxu0
      %v779 = vadd.f32 0.0, %v778
      %780 = vmatmul.f32.gmra.mxu0 %v723
      %v781 = vpop.f32.mrf.mxu0
      %v782 = vadd.f32 0.0, %v781
      %783 = vmatmul.f32.gmra.mxu0 %v726
      %v784 = vpop.f32.mrf.mxu0
      %v785 = vadd.f32 0.0, %v784
      %786 = vmatmul.f32.gmra.mxu0 %v729
      %v787 = vpop.f32.mrf.mxu0
      %v788 = vadd.f32 0.0, %v787
      %789 = vmatmul.f32.gmra.mxu0 %v732
      %v790 = vpop.f32.mrf.mxu0
      %v791 = vadd.f32 0.0, %v790
      %792 = vmatmul.f32.gmra.mxu0 %v735
      %v793 = vpop.f32.mrf.mxu0
      %v794 = vadd.f32 0.0, %v793
      %795 = vmatmul.f32.gmra.mxu0 %v738
      %v796 = vpop.f32.mrf.mxu0
      %v797 = vadd.f32 0.0, %v796
      %798 = vmatmul.f32.gmra.mxu0 %v741
      %v799 = vpop.f32.mrf.mxu0
      %v800 = vadd.f32 0.0, %v799
      %801 = vmatmul.f32.gmra.mxu0 %v744
      %v802 = vpop.f32.mrf.mxu0
      %v803 = vadd.f32 0.0, %v802
      %804 = vmatmul.f32.gmra.mxu0 %v747
      %v805 = vpop.f32.mrf.mxu0
      %v806 = vadd.f32 0.0, %v805
      %807 = vdwg.mxu0
      %v808 = vadd.f32 %v641, %v767
      %v809 = vadd.f32 %v642, %v770
      %v810 = vadd.f32 %v643, %v773
      %v811 = vadd.f32 %v644, %v776
      %v812 = vadd.f32 %v645, %v779
      %v813 = vadd.f32 %v646, %v782
      %v814 = vadd.f32 %v647, %v785
      %v815 = vadd.f32 %v648, %v788
      %v816 = vadd.f32 %v649, %v791
      %v817 = vadd.f32 %v650, %v794
      %v818 = vadd.f32 %v651, %v797
      %v819 = vadd.f32 %v652, %v800
      %v820 = vadd.f32 %v653, %v803
      %v821 = vadd.f32 %v654, %v806
      %s822 = scalar_lea.vmem %s1, 64
      %v823 = vld [vmem:[%s822] sm:$0xff]
      %v824 = vld [vmem:[%s822 + $0x8] sm:$0xff]
      %v825 = vld [vmem:[%s822 + $0x10] sm:$0xff]
      %v826 = vld [vmem:[%s822 + $0x18] sm:$0xf]
      %v828 = vsel %vm422, %v826, 0
      %830 = vmatpush.msra.mxu0 0.0
      %831 = vmatpush.msra.mxu0 0.0
      %832 = vmatpush.msra.mxu0 0.0
      %833 = vmatpush.msra.mxu0 0.0
      %834 = vmatpush.msra.mxu0 0.0
      %835 = vmatpush.msra.mxu0 0.0
      %836 = vmatpush.msra.mxu0 0.0
      %837 = vmatpush.msra.mxu0 0.0
      %838 = vmatpush.msra.mxu0 0.0
      %839 = vmatpush.msra.mxu0 0.0
      %840 = vmatpush.msra.mxu0 0.0
      %841 = vmatpush.msra.mxu0 0.0
      %842 = vmatpush.msra.mxu0 %v828
      %843 = vmatpush.msra.mxu0 %v825
      %844 = vmatpush.msra.mxu0 %v824
      %845 = vmatpush.msra.mxu0 %v823
      %846 = vmatmul.f32.gmra.mxu0 %v411
      %v847 = vpop.f32.mrf.mxu0
      %v848 = vadd.f32 0.0, %v847
      %849 = vmatmul.f32.gmra.mxu0 %v414
      %v850 = vpop.f32.mrf.mxu0
      %v851 = vadd.f32 0.0, %v850
      %852 = vmatmul.f32.gmra.mxu0 %v417
      %v853 = vpop.f32.mrf.mxu0
      %v854 = vadd.f32 0.0, %v853
      %855 = vmatmul.f32.gmra.mxu0 %v420
      %v856 = vpop.f32.mrf.mxu0
      %v857 = vadd.f32 0.0, %v856
      %858 = vdwg.mxu0
      %s859 = scalar_lea.vmem %s2, 224
      %v860 = vld [vmem:[%s859] sm:$0xff]
      %v861 = vld [vmem:[%s859 + $0x8] sm:$0xff]
      %v862 = vld [vmem:[%s859 + $0x10] sm:$0xff]
      %v863 = vld [vmem:[%s859 + $0x18] sm:$0xff]
      %v864 = vld [vmem:[%s859 + $0x20] sm:$0xff]
      %v865 = vld [vmem:[%s859 + $0x28] sm:$0xff]
      %v866 = vld [vmem:[%s859 + $0x30] sm:$0xff]
      %v867 = vld [vmem:[%s859 + $0x38] sm:$0xff]
      %v868 = vld [vmem:[%s859 + $0x40] sm:$0xff]
      %v869 = vld [vmem:[%s859 + $0x48] sm:$0xff]
      %v870 = vld [vmem:[%s859 + $0x50] sm:$0xff]
      %v871 = vld [vmem:[%s859 + $0x58] sm:$0xff]
      %v872 = vld [vmem:[%s859 + $0x60] sm:$0xff]
      %v873 = vld [vmem:[%s859 + $0x68] sm:$0xff]
      %v875 = vsel %vm469, %v860, 0
      %v878 = vsel %vm469, %v861, 0
      %v881 = vsel %vm469, %v862, 0
      %v884 = vsel %vm469, %v863, 0
      %v887 = vsel %vm469, %v864, 0
      %v890 = vsel %vm469, %v865, 0
      %v893 = vsel %vm469, %v866, 0
      %v896 = vsel %vm469, %v867, 0
      %v899 = vsel %vm469, %v868, 0
      %v902 = vsel %vm469, %v869, 0
      %v905 = vsel %vm469, %v870, 0
      %v908 = vsel %vm469, %v871, 0
      %v911 = vsel %vm469, %v872, 0
      %v914 = vsel %vm469, %v873, 0
      %916 = vmatpush.msra.mxu0 0.0
      %917 = vmatpush.msra.mxu0 0.0
      %918 = vmatpush.msra.mxu0 0.0
      %919 = vmatpush.msra.mxu0 0.0
      %920 = vmatpush.msra.mxu0 0.0
      %921 = vmatpush.msra.mxu0 0.0
      %922 = vmatpush.msra.mxu0 0.0
      %923 = vmatpush.msra.mxu0 0.0
      %924 = vmatpush.msra.mxu0 0.0
      %925 = vmatpush.msra.mxu0 0.0
      %926 = vmatpush.msra.mxu0 0.0
      %927 = vmatpush.msra.mxu0 0.0
      %928 = vmatpush.msra.mxu0 %v857
      %929 = vmatpush.msra.mxu0 %v854
      %930 = vmatpush.msra.mxu0 %v851
      %931 = vmatpush.msra.mxu0 %v848
      %932 = vmatmul.f32.gmra.mxu0 %v875
      %v933 = vpop.f32.mrf.mxu0
      %v934 = vadd.f32 0.0, %v933
      %935 = vmatmul.f32.gmra.mxu0 %v878
      %v936 = vpop.f32.mrf.mxu0
      %v937 = vadd.f32 0.0, %v936
      %938 = vmatmul.f32.gmra.mxu0 %v881
      %v939 = vpop.f32.mrf.mxu0
      %v940 = vadd.f32 0.0, %v939
      %941 = vmatmul.f32.gmra.mxu0 %v884
      %v942 = vpop.f32.mrf.mxu0
      %v943 = vadd.f32 0.0, %v942
      %944 = vmatmul.f32.gmra.mxu0 %v887
      %v945 = vpop.f32.mrf.mxu0
      %v946 = vadd.f32 0.0, %v945
      %947 = vmatmul.f32.gmra.mxu0 %v890
      %v948 = vpop.f32.mrf.mxu0
      %v949 = vadd.f32 0.0, %v948
      %950 = vmatmul.f32.gmra.mxu0 %v893
      %v951 = vpop.f32.mrf.mxu0
      %v952 = vadd.f32 0.0, %v951
      %953 = vmatmul.f32.gmra.mxu0 %v896
      %v954 = vpop.f32.mrf.mxu0
      %v955 = vadd.f32 0.0, %v954
      %956 = vmatmul.f32.gmra.mxu0 %v899
      %v957 = vpop.f32.mrf.mxu0
      %v958 = vadd.f32 0.0, %v957
      %959 = vmatmul.f32.gmra.mxu0 %v902
      %v960 = vpop.f32.mrf.mxu0
      %v961 = vadd.f32 0.0, %v960
      %962 = vmatmul.f32.gmra.mxu0 %v905
      %v963 = vpop.f32.mrf.mxu0
      %v964 = vadd.f32 0.0, %v963
      %965 = vmatmul.f32.gmra.mxu0 %v908
      %v966 = vpop.f32.mrf.mxu0
      %v967 = vadd.f32 0.0, %v966
      %968 = vmatmul.f32.gmra.mxu0 %v911
      %v969 = vpop.f32.mrf.mxu0
      %v970 = vadd.f32 0.0, %v969
      %971 = vmatmul.f32.gmra.mxu0 %v914
      %v972 = vpop.f32.mrf.mxu0
      %v973 = vadd.f32 0.0, %v972
      %974 = vdwg.mxu0
      %v975 = vadd.f32 %v808, %v934
      %v976 = vadd.f32 %v809, %v937
      %v977 = vadd.f32 %v810, %v940
      %v978 = vadd.f32 %v811, %v943
      %v979 = vadd.f32 %v812, %v946
      %v980 = vadd.f32 %v813, %v949
      %v981 = vadd.f32 %v814, %v952
      %v982 = vadd.f32 %v815, %v955
      %v983 = vadd.f32 %v816, %v958
      %v984 = vadd.f32 %v817, %v961
      %v985 = vadd.f32 %v818, %v964
      %v986 = vadd.f32 %v819, %v967
      %v987 = vadd.f32 %v820, %v970
      %v988 = vadd.f32 %v821, %v973
      %s989 = scalar_lea.vmem %s1, 96
      %v990 = vld [vmem:[%s989] sm:$0xff]
      %v991 = vld [vmem:[%s989 + $0x8] sm:$0xff]
      %v992 = vld [vmem:[%s989 + $0x10] sm:$0xff]
      %v993 = vld [vmem:[%s989 + $0x18] sm:$0xf]
      %v995 = vsel %vm422, %v993, 0
      %997 = vmatpush.msra.mxu0 0.0
      %998 = vmatpush.msra.mxu0 0.0
      %999 = vmatpush.msra.mxu0 0.0
      %1000 = vmatpush.msra.mxu0 0.0
      %1001 = vmatpush.msra.mxu0 0.0
      %1002 = vmatpush.msra.mxu0 0.0
      %1003 = vmatpush.msra.mxu0 0.0
      %1004 = vmatpush.msra.mxu0 0.0
      %1005 = vmatpush.msra.mxu0 0.0
      %1006 = vmatpush.msra.mxu0 0.0
      %1007 = vmatpush.msra.mxu0 0.0
      %1008 = vmatpush.msra.mxu0 0.0
      %1009 = vmatpush.msra.mxu0 %v995
      %1010 = vmatpush.msra.mxu0 %v992
      %1011 = vmatpush.msra.mxu0 %v991
      %1012 = vmatpush.msra.mxu0 %v990
      %1013 = vmatmul.f32.gmra.mxu0 %v411
      %v1014 = vpop.f32.mrf.mxu0
      %v1015 = vadd.f32 0.0, %v1014
      %1016 = vmatmul.f32.gmra.mxu0 %v414
      %v1017 = vpop.f32.mrf.mxu0
      %v1018 = vadd.f32 0.0, %v1017
      %1019 = vmatmul.f32.gmra.mxu0 %v417
      %v1020 = vpop.f32.mrf.mxu0
      %v1021 = vadd.f32 0.0, %v1020
      %1022 = vmatmul.f32.gmra.mxu0 %v420
      %v1023 = vpop.f32.mrf.mxu0
      %v1024 = vadd.f32 0.0, %v1023
      %1025 = vdwg.mxu0
      %s1026 = scalar_lea.vmem %s2, 336
      %v1027 = vld [vmem:[%s1026] sm:$0xff]
      %v1028 = vld [vmem:[%s1026 + $0x8] sm:$0xff]
      %v1029 = vld [vmem:[%s1026 + $0x10] sm:$0xff]
      %v1030 = vld [vmem:[%s1026 + $0x18] sm:$0xff]
      %v1031 = vld [vmem:[%s1026 + $0x20] sm:$0xff]
      %v1032 = vld [vmem:[%s1026 + $0x28] sm:$0xff]
      %v1033 = vld [vmem:[%s1026 + $0x30] sm:$0xff]
      %v1034 = vld [vmem:[%s1026 + $0x38] sm:$0xff]
      %v1035 = vld [vmem:[%s1026 + $0x40] sm:$0xff]
      %v1036 = vld [vmem:[%s1026 + $0x48] sm:$0xff]
      %v1037 = vld [vmem:[%s1026 + $0x50] sm:$0xff]
      %v1038 = vld [vmem:[%s1026 + $0x58] sm:$0xff]
      %v1039 = vld [vmem:[%s1026 + $0x60] sm:$0xff]
      %v1040 = vld [vmem:[%s1026 + $0x68] sm:$0xff]
      %v1042 = vsel %vm469, %v1027, 0
      %v1045 = vsel %vm469, %v1028, 0
      %v1048 = vsel %vm469, %v1029, 0
      %v1051 = vsel %vm469, %v1030, 0
      %v1054 = vsel %vm469, %v1031, 0
      %v1057 = vsel %vm469, %v1032, 0
      %v1060 = vsel %vm469, %v1033, 0
      %v1063 = vsel %vm469, %v1034, 0
      %v1066 = vsel %vm469, %v1035, 0
      %v1069 = vsel %vm469, %v1036, 0
      %v1072 = vsel %vm469, %v1037, 0
      %v1075 = vsel %vm469, %v1038, 0
      %v1078 = vsel %vm469, %v1039, 0
      %v1081 = vsel %vm469, %v1040, 0
      %1083 = vmatpush.msra.mxu0 0.0
      %1084 = vmatpush.msra.mxu0 0.0
      %1085 = vmatpush.msra.mxu0 0.0
      %1086 = vmatpush.msra.mxu0 0.0
      %1087 = vmatpush.msra.mxu0 0.0
      %1088 = vmatpush.msra.mxu0 0.0
      %1089 = vmatpush.msra.mxu0 0.0
      %1090 = vmatpush.msra.mxu0 0.0
      %1091 = vmatpush.msra.mxu0 0.0
      %1092 = vmatpush.msra.mxu0 0.0
      %1093 = vmatpush.msra.mxu0 0.0
      %1094 = vmatpush.msra.mxu0 0.0
      %1095 = vmatpush.msra.mxu0 %v1024
      %1096 = vmatpush.msra.mxu0 %v1021
      %1097 = vmatpush.msra.mxu0 %v1018
      %1098 = vmatpush.msra.mxu0 %v1015
      %1099 = vmatmul.f32.gmra.mxu0 %v1042
      %v1100 = vpop.f32.mrf.mxu0
      %v1101 = vadd.f32 0.0, %v1100
      %1102 = vmatmul.f32.gmra.mxu0 %v1045
      %v1103 = vpop.f32.mrf.mxu0
      %v1104 = vadd.f32 0.0, %v1103
      %1105 = vmatmul.f32.gmra.mxu0 %v1048
      %v1106 = vpop.f32.mrf.mxu0
      %v1107 = vadd.f32 0.0, %v1106
      %1108 = vmatmul.f32.gmra.mxu0 %v1051
      %v1109 = vpop.f32.mrf.mxu0
      %v1110 = vadd.f32 0.0, %v1109
      %1111 = vmatmul.f32.gmra.mxu0 %v1054
      %v1112 = vpop.f32.mrf.mxu0
      %v1113 = vadd.f32 0.0, %v1112
      %1114 = vmatmul.f32.gmra.mxu0 %v1057
      %v1115 = vpop.f32.mrf.mxu0
      %v1116 = vadd.f32 0.0, %v1115
      %1117 = vmatmul.f32.gmra.mxu0 %v1060
      %v1118 = vpop.f32.mrf.mxu0
      %v1119 = vadd.f32 0.0, %v1118
      %1120 = vmatmul.f32.gmra.mxu0 %v1063
      %v1121 = vpop.f32.mrf.mxu0
      %v1122 = vadd.f32 0.0, %v1121
      %1123 = vmatmul.f32.gmra.mxu0 %v1066
      %v1124 = vpop.f32.mrf.mxu0
      %v1125 = vadd.f32 0.0, %v1124
      %1126 = vmatmul.f32.gmra.mxu0 %v1069
      %v1127 = vpop.f32.mrf.mxu0
      %v1128 = vadd.f32 0.0, %v1127
      %1129 = vmatmul.f32.gmra.mxu0 %v1072
      %v1130 = vpop.f32.mrf.mxu0
      %v1131 = vadd.f32 0.0, %v1130
      %1132 = vmatmul.f32.gmra.mxu0 %v1075
      %v1133 = vpop.f32.mrf.mxu0
      %v1134 = vadd.f32 0.0, %v1133
      %1135 = vmatmul.f32.gmra.mxu0 %v1078
      %v1136 = vpop.f32.mrf.mxu0
      %v1137 = vadd.f32 0.0, %v1136
      %1138 = vmatmul.f32.gmra.mxu0 %v1081
      %v1139 = vpop.f32.mrf.mxu0
      %v1140 = vadd.f32 0.0, %v1139
      %1141 = vdwg.mxu0
      %v1142 = vadd.f32 %v975, %v1101
      %v1143 = vadd.f32 %v976, %v1104
      %v1144 = vadd.f32 %v977, %v1107
      %v1145 = vadd.f32 %v978, %v1110
      %v1146 = vadd.f32 %v979, %v1113
      %v1147 = vadd.f32 %v980, %v1116
      %v1148 = vadd.f32 %v981, %v1119
      %v1149 = vadd.f32 %v982, %v1122
      %v1150 = vadd.f32 %v983, %v1125
      %v1151 = vadd.f32 %v984, %v1128
      %v1152 = vadd.f32 %v985, %v1131
      %v1153 = vadd.f32 %v986, %v1134
      %v1154 = vadd.f32 %v987, %v1137
      %v1155 = vadd.f32 %v988, %v1140
      %v1156 = vmax.f32 %v1142, 0.0
      %v1157 = vmax.f32 %v1143, 0.0
      %v1158 = vmax.f32 %v1144, 0.0
      %v1159 = vmax.f32 %v1145, 0.0
      %v1160 = vmax.f32 %v1146, 0.0
      %v1161 = vmax.f32 %v1147, 0.0
      %v1162 = vmax.f32 %v1148, 0.0
      %v1163 = vmax.f32 %v1149, 0.0
      %v1164 = vmax.f32 %v1150, 0.0
      %v1165 = vmax.f32 %v1151, 0.0
      %v1166 = vmax.f32 %v1152, 0.0
      %v1167 = vmax.f32 %v1153, 0.0
      %v1168 = vmax.f32 %v1154, 0.0
      %v1169 = vmax.f32 %v1155, 0.0
      %v1170 = vld [vmem:[%s6] sm:$0xff]
      %v1171 = vld [vmem:[%s6 + $0x8] sm:$0xff]
      %v1172 = vld [vmem:[%s6 + $0x10] sm:$0xff]
      %v1173 = vld [vmem:[%s6 + $0x18] sm:$0xff]
      %v1174 = vld [vmem:[%s6 + $0x20] sm:$0xff]
      %v1175 = vld [vmem:[%s6 + $0x28] sm:$0xff]
      %v1176 = vld [vmem:[%s6 + $0x30] sm:$0xff]
      %v1177 = vld [vmem:[%s6 + $0x38] sm:$0xff]
      %v1178 = vld [vmem:[%s6 + $0x40] sm:$0xff]
      %v1179 = vld [vmem:[%s6 + $0x48] sm:$0xff]
      %v1180 = vld [vmem:[%s6 + $0x50] sm:$0xff]
      %v1181 = vld [vmem:[%s6 + $0x58] sm:$0xff]
      %v1182 = vld [vmem:[%s6 + $0x60] sm:$0xff]
      %v1183 = vld [vmem:[%s6 + $0x68] sm:$0xff]
      %v1184 = vld [vmem:[%s4] sm:$0xff]
      %v1185 = vld [vmem:[%s4 + $0x8] sm:$0x3f]
      %vm1186 = vcmask 113664
      %v1188 = vsel %vm1186, %v1156, 0
      %v1191 = vsel %vm1186, %v1157, 0
      %v1194 = vsel %vm1186, %v1158, 0
      %v1197 = vsel %vm1186, %v1159, 0
      %v1200 = vsel %vm1186, %v1160, 0
      %v1203 = vsel %vm1186, %v1161, 0
      %v1206 = vsel %vm1186, %v1162, 0
      %v1209 = vsel %vm1186, %v1163, 0
      %v1212 = vsel %vm1186, %v1164, 0
      %v1215 = vsel %vm1186, %v1165, 0
      %v1218 = vsel %vm1186, %v1166, 0
      %v1221 = vsel %vm1186, %v1167, 0
      %v1224 = vsel %vm1186, %v1168, 0
      %v1227 = vsel %vm1186, %v1169, 0
      %vm1229 = vcmask 1045504
      %v1231 = vsel %vm1229, %v1185, 0
      %1233 = vmatpush.msra.mxu0 0.0
      %1234 = vmatpush.msra.mxu0 0.0
      %1235 = vmatpush.msra.mxu0 0.0
      %1236 = vmatpush.msra.mxu0 0.0
      %1237 = vmatpush.msra.mxu0 0.0
      %1238 = vmatpush.msra.mxu0 0.0
      %1239 = vmatpush.msra.mxu0 0.0
      %1240 = vmatpush.msra.mxu0 0.0
      %1241 = vmatpush.msra.mxu0 0.0
      %1242 = vmatpush.msra.mxu0 0.0
      %1243 = vmatpush.msra.mxu0 0.0
      %1244 = vmatpush.msra.mxu0 0.0
      %1245 = vmatpush.msra.mxu0 0.0
      %1246 = vmatpush.msra.mxu0 0.0
      %1247 = vmatpush.msra.mxu0 %v1231
      %1248 = vmatpush.msra.mxu0 %v1184
      %1249 = vmatmul.f32.gmra.mxu0 %v1188
      %v1250 = vpop.f32.mrf.mxu0
      %v1251 = vadd.f32 0.0, %v1250
      %1252 = vmatmul.f32.gmra.mxu0 %v1191
      %v1253 = vpop.f32.mrf.mxu0
      %v1254 = vadd.f32 0.0, %v1253
      %1255 = vmatmul.f32.gmra.mxu0 %v1194
      %v1256 = vpop.f32.mrf.mxu0
      %v1257 = vadd.f32 0.0, %v1256
      %1258 = vmatmul.f32.gmra.mxu0 %v1197
      %v1259 = vpop.f32.mrf.mxu0
      %v1260 = vadd.f32 0.0, %v1259
      %1261 = vmatmul.f32.gmra.mxu0 %v1200
      %v1262 = vpop.f32.mrf.mxu0
      %v1263 = vadd.f32 0.0, %v1262
      %1264 = vmatmul.f32.gmra.mxu0 %v1203
      %v1265 = vpop.f32.mrf.mxu0
      %v1266 = vadd.f32 0.0, %v1265
      %1267 = vmatmul.f32.gmra.mxu0 %v1206
      %v1268 = vpop.f32.mrf.mxu0
      %v1269 = vadd.f32 0.0, %v1268
      %1270 = vmatmul.f32.gmra.mxu0 %v1209
      %v1271 = vpop.f32.mrf.mxu0
      %v1272 = vadd.f32 0.0, %v1271
      %1273 = vmatmul.f32.gmra.mxu0 %v1212
      %v1274 = vpop.f32.mrf.mxu0
      %v1275 = vadd.f32 0.0, %v1274
      %1276 = vmatmul.f32.gmra.mxu0 %v1215
      %v1277 = vpop.f32.mrf.mxu0
      %v1278 = vadd.f32 0.0, %v1277
      %1279 = vmatmul.f32.gmra.mxu0 %v1218
      %v1280 = vpop.f32.mrf.mxu0
      %v1281 = vadd.f32 0.0, %v1280
      %1282 = vmatmul.f32.gmra.mxu0 %v1221
      %v1283 = vpop.f32.mrf.mxu0
      %v1284 = vadd.f32 0.0, %v1283
      %1285 = vmatmul.f32.gmra.mxu0 %v1224
      %v1286 = vpop.f32.mrf.mxu0
      %v1287 = vadd.f32 0.0, %v1286
      %1288 = vmatmul.f32.gmra.mxu0 %v1227
      %v1289 = vpop.f32.mrf.mxu0
      %v1290 = vadd.f32 0.0, %v1289
      %1291 = vdwg.mxu0
      %v1292 = vld [vmem:[%s5] sm:$0xff]
      %v1293 = vld [vmem:[%s5 + $0x8] sm:$0xff]
      %v1294 = vld [vmem:[%s5 + $0x10] sm:$0xff]
      %v1295 = vld [vmem:[%s5 + $0x18] sm:$0xff]
      %v1296 = vld [vmem:[%s5 + $0x20] sm:$0xff]
      %v1297 = vld [vmem:[%s5 + $0x28] sm:$0xff]
      %v1298 = vld [vmem:[%s5 + $0x30] sm:$0xff]
      %v1299 = vld [vmem:[%s5 + $0x38] sm:$0xff]
      %v1300 = vld [vmem:[%s5 + $0x40] sm:$0xff]
      %v1301 = vld [vmem:[%s5 + $0x48] sm:$0xff]
      %v1302 = vld [vmem:[%s5 + $0x50] sm:$0xff]
      %v1303 = vld [vmem:[%s5 + $0x58] sm:$0xff]
      %v1304 = vld [vmem:[%s5 + $0x60] sm:$0xff]
      %v1305 = vld [vmem:[%s5 + $0x68] sm:$0xff]
      %vm1306 = vcmask 916480
      %v1308 = vsel %vm1306, %v1292, 0
      %v1311 = vsel %vm1306, %v1293, 0
      %v1314 = vsel %vm1306, %v1294, 0
      %v1317 = vsel %vm1306, %v1295, 0
      %v1320 = vsel %vm1306, %v1296, 0
      %v1323 = vsel %vm1306, %v1297, 0
      %v1326 = vsel %vm1306, %v1298, 0
      %v1329 = vsel %vm1306, %v1299, 0
      %v1332 = vsel %vm1306, %v1300, 0
      %v1335 = vsel %vm1306, %v1301, 0
      %v1338 = vsel %vm1306, %v1302, 0
      %v1341 = vsel %vm1306, %v1303, 0
      %v1344 = vsel %vm1306, %v1304, 0
      %v1347 = vsel %vm1306, %v1305, 0
      %1349 = vmatpush.msra.mxu0 0.0
      %1350 = vmatpush.msra.mxu0 0.0
      %1351 = vmatpush.msra.mxu0 %v1290
      %1352 = vmatpush.msra.mxu0 %v1287
      %1353 = vmatpush.msra.mxu0 %v1284
      %1354 = vmatpush.msra.mxu0 %v1281
      %1355 = vmatpush.msra.mxu0 %v1278
      %1356 = vmatpush.msra.mxu0 %v1275
      %1357 = vmatpush.msra.mxu0 %v1272
      %1358 = vmatpush.msra.mxu0 %v1269
      %1359 = vmatpush.msra.mxu0 %v1266
      %1360 = vmatpush.msra.mxu0 %v1263
      %1361 = vmatpush.msra.mxu0 %v1260
      %1362 = vmatpush.msra.mxu0 %v1257
      %1363 = vmatpush.msra.mxu0 %v1254
      %1364 = vmatpush.msra.mxu0 %v1251
      %1365 = vmatmul.f32.gmra.mxu0 %v1308
      %v1366 = vpop.f32.mrf.mxu0
      %v1367 = vadd.f32 0.0, %v1366
      %1368 = vmatmul.f32.gmra.mxu0 %v1311
      %v1369 = vpop.f32.mrf.mxu0
      %v1370 = vadd.f32 0.0, %v1369
      %1371 = vmatmul.f32.gmra.mxu0 %v1314
      %v1372 = vpop.f32.mrf.mxu0
      %v1373 = vadd.f32 0.0, %v1372
      %1374 = vmatmul.f32.gmra.mxu0 %v1317
      %v1375 = vpop.f32.mrf.mxu0
      %v1376 = vadd.f32 0.0, %v1375
      %1377 = vmatmul.f32.gmra.mxu0 %v1320
      %v1378 = vpop.f32.mrf.mxu0
      %v1379 = vadd.f32 0.0, %v1378
      %1380 = vmatmul.f32.gmra.mxu0 %v1323
      %v1381 = vpop.f32.mrf.mxu0
      %v1382 = vadd.f32 0.0, %v1381
      %1383 = vmatmul.f32.gmra.mxu0 %v1326
      %v1384 = vpop.f32.mrf.mxu0
      %v1385 = vadd.f32 0.0, %v1384
      %1386 = vmatmul.f32.gmra.mxu0 %v1329
      %v1387 = vpop.f32.mrf.mxu0
      %v1388 = vadd.f32 0.0, %v1387
      %1389 = vmatmul.f32.gmra.mxu0 %v1332
      %v1390 = vpop.f32.mrf.mxu0
      %v1391 = vadd.f32 0.0, %v1390
      %1392 = vmatmul.f32.gmra.mxu0 %v1335
      %v1393 = vpop.f32.mrf.mxu0
      %v1394 = vadd.f32 0.0, %v1393
      %1395 = vmatmul.f32.gmra.mxu0 %v1338
      %v1396 = vpop.f32.mrf.mxu0
      %v1397 = vadd.f32 0.0, %v1396
      %1398 = vmatmul.f32.gmra.mxu0 %v1341
      %v1399 = vpop.f32.mrf.mxu0
      %v1400 = vadd.f32 0.0, %v1399
      %1401 = vmatmul.f32.gmra.mxu0 %v1344
      %v1402 = vpop.f32.mrf.mxu0
      %v1403 = vadd.f32 0.0, %v1402
      %1404 = vmatmul.f32.gmra.mxu0 %v1347
      %v1405 = vpop.f32.mrf.mxu0
      %v1406 = vadd.f32 0.0, %v1405
      %1407 = vdwg.mxu0
      %1409 = vset.pattern.permute.xlu0 0
      %1410 = vperm.xlu0 %1409, %v1170
      %v1411 = vpop.permute.xlu0 %1410
      %1414 = vset.pattern.permute.xlu0 0
      %1415 = vperm.xlu0 %1414, %v1171
      %v1416 = vpop.permute.xlu0 %1415
      %1419 = vset.pattern.permute.xlu0 0
      %1420 = vperm.xlu0 %1419, %v1172
      %v1421 = vpop.permute.xlu0 %1420
      %1424 = vset.pattern.permute.xlu0 0
      %1425 = vperm.xlu0 %1424, %v1173
      %v1426 = vpop.permute.xlu0 %1425
      %1429 = vset.pattern.permute.xlu0 0
      %1430 = vperm.xlu0 %1429, %v1174
      %v1431 = vpop.permute.xlu0 %1430
      %1434 = vset.pattern.permute.xlu0 0
      %1435 = vperm.xlu0 %1434, %v1175
      %v1436 = vpop.permute.xlu0 %1435
      %1439 = vset.pattern.permute.xlu0 0
      %1440 = vperm.xlu0 %1439, %v1176
      %v1441 = vpop.permute.xlu0 %1440
      %1444 = vset.pattern.permute.xlu0 0
      %1445 = vperm.xlu0 %1444, %v1177
      %v1446 = vpop.permute.xlu0 %1445
      %1449 = vset.pattern.permute.xlu0 0
      %1450 = vperm.xlu0 %1449, %v1178
      %v1451 = vpop.permute.xlu0 %1450
      %1454 = vset.pattern.permute.xlu0 0
      %1455 = vperm.xlu0 %1454, %v1179
      %v1456 = vpop.permute.xlu0 %1455
      %1459 = vset.pattern.permute.xlu0 0
      %1460 = vperm.xlu0 %1459, %v1180
      %v1461 = vpop.permute.xlu0 %1460
      %1464 = vset.pattern.permute.xlu0 0
      %1465 = vperm.xlu0 %1464, %v1181
      %v1466 = vpop.permute.xlu0 %1465
      %1469 = vset.pattern.permute.xlu0 0
      %1470 = vperm.xlu0 %1469, %v1182
      %v1471 = vpop.permute.xlu0 %1470
      %1474 = vset.pattern.permute.xlu0 0
      %1475 = vperm.xlu0 %1474, %v1183
      %v1476 = vpop.permute.xlu0 %1475
      %v1478 = vadd.f32 %v1411, %v1367
      %v1479 = vadd.f32 %v1416, %v1370
      %v1480 = vadd.f32 %v1421, %v1373
      %v1481 = vadd.f32 %v1426, %v1376
      %v1482 = vadd.f32 %v1431, %v1379
      %v1483 = vadd.f32 %v1436, %v1382
      %v1484 = vadd.f32 %v1441, %v1385
      %v1485 = vadd.f32 %v1446, %v1388
      %v1486 = vadd.f32 %v1451, %v1391
      %v1487 = vadd.f32 %v1456, %v1394
      %v1488 = vadd.f32 %v1461, %v1397
      %v1489 = vadd.f32 %v1466, %v1400
      %v1490 = vadd.f32 %v1471, %v1403
      %v1491 = vadd.f32 %v1476, %v1406
      %s1492 = scalar_lea.vmem %s4, 16
      %v1493 = vld [vmem:[%s1492] sm:$0xff]
      %v1494 = vld [vmem:[%s1492 + $0x8] sm:$0x3f]
      %v1496 = vsel %vm1229, %v1494, 0
      %1498 = vmatpush.msra.mxu0 0.0
      %1499 = vmatpush.msra.mxu0 0.0
      %1500 = vmatpush.msra.mxu0 0.0
      %1501 = vmatpush.msra.mxu0 0.0
      %1502 = vmatpush.msra.mxu0 0.0
      %1503 = vmatpush.msra.mxu0 0.0
      %1504 = vmatpush.msra.mxu0 0.0
      %1505 = vmatpush.msra.mxu0 0.0
      %1506 = vmatpush.msra.mxu0 0.0
      %1507 = vmatpush.msra.mxu0 0.0
      %1508 = vmatpush.msra.mxu0 0.0
      %1509 = vmatpush.msra.mxu0 0.0
      %1510 = vmatpush.msra.mxu0 0.0
      %1511 = vmatpush.msra.mxu0 0.0
      %1512 = vmatpush.msra.mxu0 %v1496
      %1513 = vmatpush.msra.mxu0 %v1493
      %1514 = vmatmul.f32.gmra.mxu0 %v1188
      %v1515 = vpop.f32.mrf.mxu0
      %v1516 = vadd.f32 0.0, %v1515
      %1517 = vmatmul.f32.gmra.mxu0 %v1191
      %v1518 = vpop.f32.mrf.mxu0
      %v1519 = vadd.f32 0.0, %v1518
      %1520 = vmatmul.f32.gmra.mxu0 %v1194
      %v1521 = vpop.f32.mrf.mxu0
      %v1522 = vadd.f32 0.0, %v1521
      %1523 = vmatmul.f32.gmra.mxu0 %v1197
      %v1524 = vpop.f32.mrf.mxu0
      %v1525 = vadd.f32 0.0, %v1524
      %1526 = vmatmul.f32.gmra.mxu0 %v1200
      %v1527 = vpop.f32.mrf.mxu0
      %v1528 = vadd.f32 0.0, %v1527
      %1529 = vmatmul.f32.gmra.mxu0 %v1203
      %v1530 = vpop.f32.mrf.mxu0
      %v1531 = vadd.f32 0.0, %v1530
      %1532 = vmatmul.f32.gmra.mxu0 %v1206
      %v1533 = vpop.f32.mrf.mxu0
      %v1534 = vadd.f32 0.0, %v1533
      %1535 = vmatmul.f32.gmra.mxu0 %v1209
      %v1536 = vpop.f32.mrf.mxu0
      %v1537 = vadd.f32 0.0, %v1536
      %1538 = vmatmul.f32.gmra.mxu0 %v1212
      %v1539 = vpop.f32.mrf.mxu0
      %v1540 = vadd.f32 0.0, %v1539
      %1541 = vmatmul.f32.gmra.mxu0 %v1215
      %v1542 = vpop.f32.mrf.mxu0
      %v1543 = vadd.f32 0.0, %v1542
      %1544 = vmatmul.f32.gmra.mxu0 %v1218
      %v1545 = vpop.f32.mrf.mxu0
      %v1546 = vadd.f32 0.0, %v1545
      %1547 = vmatmul.f32.gmra.mxu0 %v1221
      %v1548 = vpop.f32.mrf.mxu0
      %v1549 = vadd.f32 0.0, %v1548
      %1550 = vmatmul.f32.gmra.mxu0 %v1224
      %v1551 = vpop.f32.mrf.mxu0
      %v1552 = vadd.f32 0.0, %v1551
      %1553 = vmatmul.f32.gmra.mxu0 %v1227
      %v1554 = vpop.f32.mrf.mxu0
      %v1555 = vadd.f32 0.0, %v1554
      %1556 = vdwg.mxu0
      %s1557 = scalar_lea.vmem %s5, 112
      %v1558 = vld [vmem:[%s1557] sm:$0xff]
      %v1559 = vld [vmem:[%s1557 + $0x8] sm:$0xff]
      %v1560 = vld [vmem:[%s1557 + $0x10] sm:$0xff]
      %v1561 = vld [vmem:[%s1557 + $0x18] sm:$0xff]
      %v1562 = vld [vmem:[%s1557 + $0x20] sm:$0xff]
      %v1563 = vld [vmem:[%s1557 + $0x28] sm:$0xff]
      %v1564 = vld [vmem:[%s1557 + $0x30] sm:$0xff]
      %v1565 = vld [vmem:[%s1557 + $0x38] sm:$0xff]
      %v1566 = vld [vmem:[%s1557 + $0x40] sm:$0xff]
      %v1567 = vld [vmem:[%s1557 + $0x48] sm:$0xff]
      %v1568 = vld [vmem:[%s1557 + $0x50] sm:$0xff]
      %v1569 = vld [vmem:[%s1557 + $0x58] sm:$0xff]
      %v1570 = vld [vmem:[%s1557 + $0x60] sm:$0xff]
      %v1571 = vld [vmem:[%s1557 + $0x68] sm:$0xff]
      %v1573 = vsel %vm1306, %v1558, 0
      %v1576 = vsel %vm1306, %v1559, 0
      %v1579 = vsel %vm1306, %v1560, 0
      %v1582 = vsel %vm1306, %v1561, 0
      %v1585 = vsel %vm1306, %v1562, 0
      %v1588 = vsel %vm1306, %v1563, 0
      %v1591 = vsel %vm1306, %v1564, 0
      %v1594 = vsel %vm1306, %v1565, 0
      %v1597 = vsel %vm1306, %v1566, 0
      %v1600 = vsel %vm1306, %v1567, 0
      %v1603 = vsel %vm1306, %v1568, 0
      %v1606 = vsel %vm1306, %v1569, 0
      %v1609 = vsel %vm1306, %v1570, 0
      %v1612 = vsel %vm1306, %v1571, 0
      %1614 = vmatpush.msra.mxu0 0.0
      %1615 = vmatpush.msra.mxu0 0.0
      %1616 = vmatpush.msra.mxu0 %v1555
      %1617 = vmatpush.msra.mxu0 %v1552
      %1618 = vmatpush.msra.mxu0 %v1549
      %1619 = vmatpush.msra.mxu0 %v1546
      %1620 = vmatpush.msra.mxu0 %v1543
      %1621 = vmatpush.msra.mxu0 %v1540
      %1622 = vmatpush.msra.mxu0 %v1537
      %1623 = vmatpush.msra.mxu0 %v1534
      %1624 = vmatpush.msra.mxu0 %v1531
      %1625 = vmatpush.msra.mxu0 %v1528
      %1626 = vmatpush.msra.mxu0 %v1525
      %1627 = vmatpush.msra.mxu0 %v1522
      %1628 = vmatpush.msra.mxu0 %v1519
      %1629 = vmatpush.msra.mxu0 %v1516
      %1630 = vmatmul.f32.gmra.mxu0 %v1573
      %v1631 = vpop.f32.mrf.mxu0
      %v1632 = vadd.f32 0.0, %v1631
      %1633 = vmatmul.f32.gmra.mxu0 %v1576
      %v1634 = vpop.f32.mrf.mxu0
      %v1635 = vadd.f32 0.0, %v1634
      %1636 = vmatmul.f32.gmra.mxu0 %v1579
      %v1637 = vpop.f32.mrf.mxu0
      %v1638 = vadd.f32 0.0, %v1637
      %1639 = vmatmul.f32.gmra.mxu0 %v1582
      %v1640 = vpop.f32.mrf.mxu0
      %v1641 = vadd.f32 0.0, %v1640
      %1642 = vmatmul.f32.gmra.mxu0 %v1585
      %v1643 = vpop.f32.mrf.mxu0
      %v1644 = vadd.f32 0.0, %v1643
      %1645 = vmatmul.f32.gmra.mxu0 %v1588
      %v1646 = vpop.f32.mrf.mxu0
      %v1647 = vadd.f32 0.0, %v1646
      %1648 = vmatmul.f32.gmra.mxu0 %v1591
      %v1649 = vpop.f32.mrf.mxu0
      %v1650 = vadd.f32 0.0, %v1649
      %1651 = vmatmul.f32.gmra.mxu0 %v1594
      %v1652 = vpop.f32.mrf.mxu0
      %v1653 = vadd.f32 0.0, %v1652
      %1654 = vmatmul.f32.gmra.mxu0 %v1597
      %v1655 = vpop.f32.mrf.mxu0
      %v1656 = vadd.f32 0.0, %v1655
      %1657 = vmatmul.f32.gmra.mxu0 %v1600
      %v1658 = vpop.f32.mrf.mxu0
      %v1659 = vadd.f32 0.0, %v1658
      %1660 = vmatmul.f32.gmra.mxu0 %v1603
      %v1661 = vpop.f32.mrf.mxu0
      %v1662 = vadd.f32 0.0, %v1661
      %1663 = vmatmul.f32.gmra.mxu0 %v1606
      %v1664 = vpop.f32.mrf.mxu0
      %v1665 = vadd.f32 0.0, %v1664
      %1666 = vmatmul.f32.gmra.mxu0 %v1609
      %v1667 = vpop.f32.mrf.mxu0
      %v1668 = vadd.f32 0.0, %v1667
      %1669 = vmatmul.f32.gmra.mxu0 %v1612
      %v1670 = vpop.f32.mrf.mxu0
      %v1671 = vadd.f32 0.0, %v1670
      %1672 = vdwg.mxu0
      %v1673 = vadd.f32 %v1478, %v1632
      %v1674 = vadd.f32 %v1479, %v1635
      %v1675 = vadd.f32 %v1480, %v1638
      %v1676 = vadd.f32 %v1481, %v1641
      %v1677 = vadd.f32 %v1482, %v1644
      %v1678 = vadd.f32 %v1483, %v1647
      %v1679 = vadd.f32 %v1484, %v1650
      %v1680 = vadd.f32 %v1485, %v1653
      %v1681 = vadd.f32 %v1486, %v1656
      %v1682 = vadd.f32 %v1487, %v1659
      %v1683 = vadd.f32 %v1488, %v1662
      %v1684 = vadd.f32 %v1489, %v1665
      %v1685 = vadd.f32 %v1490, %v1668
      %v1686 = vadd.f32 %v1491, %v1671
      %s1687 = scalar_lea.vmem %s4, 32
      %v1688 = vld [vmem:[%s1687] sm:$0xff]
      %v1689 = vld [vmem:[%s1687 + $0x8] sm:$0x3f]
      %v1691 = vsel %vm1229, %v1689, 0
      %1693 = vmatpush.msra.mxu0 0.0
      %1694 = vmatpush.msra.mxu0 0.0
      %1695 = vmatpush.msra.mxu0 0.0
      %1696 = vmatpush.msra.mxu0 0.0
      %1697 = vmatpush.msra.mxu0 0.0
      %1698 = vmatpush.msra.mxu0 0.0
      %1699 = vmatpush.msra.mxu0 0.0
      %1700 = vmatpush.msra.mxu0 0.0
      %1701 = vmatpush.msra.mxu0 0.0
      %1702 = vmatpush.msra.mxu0 0.0
      %1703 = vmatpush.msra.mxu0 0.0
      %1704 = vmatpush.msra.mxu0 0.0
      %1705 = vmatpush.msra.mxu0 0.0
      %1706 = vmatpush.msra.mxu0 0.0
      %1707 = vmatpush.msra.mxu0 %v1691
      %1708 = vmatpush.msra.mxu0 %v1688
      %1709 = vmatmul.f32.gmra.mxu0 %v1188
      %v1710 = vpop.f32.mrf.mxu0
      %v1711 = vadd.f32 0.0, %v1710
      %1712 = vmatmul.f32.gmra.mxu0 %v1191
      %v1713 = vpop.f32.mrf.mxu0
      %v1714 = vadd.f32 0.0, %v1713
      %1715 = vmatmul.f32.gmra.mxu0 %v1194
      %v1716 = vpop.f32.mrf.mxu0
      %v1717 = vadd.f32 0.0, %v1716
      %1718 = vmatmul.f32.gmra.mxu0 %v1197
      %v1719 = vpop.f32.mrf.mxu0
      %v1720 = vadd.f32 0.0, %v1719
      %1721 = vmatmul.f32.gmra.mxu0 %v1200
      %v1722 = vpop.f32.mrf.mxu0
      %v1723 = vadd.f32 0.0, %v1722
      %1724 = vmatmul.f32.gmra.mxu0 %v1203
      %v1725 = vpop.f32.mrf.mxu0
      %v1726 = vadd.f32 0.0, %v1725
      %1727 = vmatmul.f32.gmra.mxu0 %v1206
      %v1728 = vpop.f32.mrf.mxu0
      %v1729 = vadd.f32 0.0, %v1728
      %1730 = vmatmul.f32.gmra.mxu0 %v1209
      %v1731 = vpop.f32.mrf.mxu0
      %v1732 = vadd.f32 0.0, %v1731
      %1733 = vmatmul.f32.gmra.mxu0 %v1212
      %v1734 = vpop.f32.mrf.mxu0
      %v1735 = vadd.f32 0.0, %v1734
      %1736 = vmatmul.f32.gmra.mxu0 %v1215
      %v1737 = vpop.f32.mrf.mxu0
      %v1738 = vadd.f32 0.0, %v1737
      %1739 = vmatmul.f32.gmra.mxu0 %v1218
      %v1740 = vpop.f32.mrf.mxu0
      %v1741 = vadd.f32 0.0, %v1740
      %1742 = vmatmul.f32.gmra.mxu0 %v1221
      %v1743 = vpop.f32.mrf.mxu0
      %v1744 = vadd.f32 0.0, %v1743
      %1745 = vmatmul.f32.gmra.mxu0 %v1224
      %v1746 = vpop.f32.mrf.mxu0
      %v1747 = vadd.f32 0.0, %v1746
      %1748 = vmatmul.f32.gmra.mxu0 %v1227
      %v1749 = vpop.f32.mrf.mxu0
      %v1750 = vadd.f32 0.0, %v1749
      %1751 = vdwg.mxu0
      %s1752 = scalar_lea.vmem %s5, 224
      %v1753 = vld [vmem:[%s1752] sm:$0xff]
      %v1754 = vld [vmem:[%s1752 + $0x8] sm:$0xff]
      %v1755 = vld [vmem:[%s1752 + $0x10] sm:$0xff]
      %v1756 = vld [vmem:[%s1752 + $0x18] sm:$0xff]
      %v1757 = vld [vmem:[%s1752 + $0x20] sm:$0xff]
      %v1758 = vld [vmem:[%s1752 + $0x28] sm:$0xff]
      %v1759 = vld [vmem:[%s1752 + $0x30] sm:$0xff]
      %v1760 = vld [vmem:[%s1752 + $0x38] sm:$0xff]
      %v1761 = vld [vmem:[%s1752 + $0x40] sm:$0xff]
      %v1762 = vld [vmem:[%s1752 + $0x48] sm:$0xff]
      %v1763 = vld [vmem:[%s1752 + $0x50] sm:$0xff]
      %v1764 = vld [vmem:[%s1752 + $0x58] sm:$0xff]
      %v1765 = vld [vmem:[%s1752 + $0x60] sm:$0xff]
      %v1766 = vld [vmem:[%s1752 + $0x68] sm:$0xff]
      %v1768 = vsel %vm1306, %v1753, 0
      %v1771 = vsel %vm1306, %v1754, 0
      %v1774 = vsel %vm1306, %v1755, 0
      %v1777 = vsel %vm1306, %v1756, 0
      %v1780 = vsel %vm1306, %v1757, 0
      %v1783 = vsel %vm1306, %v1758, 0
      %v1786 = vsel %vm1306, %v1759, 0
      %v1789 = vsel %vm1306, %v1760, 0
      %v1792 = vsel %vm1306, %v1761, 0
      %v1795 = vsel %vm1306, %v1762, 0
      %v1798 = vsel %vm1306, %v1763, 0
      %v1801 = vsel %vm1306, %v1764, 0
      %v1804 = vsel %vm1306, %v1765, 0
      %v1807 = vsel %vm1306, %v1766, 0
      %1809 = vmatpush.msra.mxu0 0.0
      %1810 = vmatpush.msra.mxu0 0.0
      %1811 = vmatpush.msra.mxu0 %v1750
      %1812 = vmatpush.msra.mxu0 %v1747
      %1813 = vmatpush.msra.mxu0 %v1744
      %1814 = vmatpush.msra.mxu0 %v1741
      %1815 = vmatpush.msra.mxu0 %v1738
      %1816 = vmatpush.msra.mxu0 %v1735
      %1817 = vmatpush.msra.mxu0 %v1732
      %1818 = vmatpush.msra.mxu0 %v1729
      %1819 = vmatpush.msra.mxu0 %v1726
      %1820 = vmatpush.msra.mxu0 %v1723
      %1821 = vmatpush.msra.mxu0 %v1720
      %1822 = vmatpush.msra.mxu0 %v1717
      %1823 = vmatpush.msra.mxu0 %v1714
      %1824 = vmatpush.msra.mxu0 %v1711
      %1825 = vmatmul.f32.gmra.mxu0 %v1768
      %v1826 = vpop.f32.mrf.mxu0
      %v1827 = vadd.f32 0.0, %v1826
      %1828 = vmatmul.f32.gmra.mxu0 %v1771
      %v1829 = vpop.f32.mrf.mxu0
      %v1830 = vadd.f32 0.0, %v1829
      %1831 = vmatmul.f32.gmra.mxu0 %v1774
      %v1832 = vpop.f32.mrf.mxu0
      %v1833 = vadd.f32 0.0, %v1832
      %1834 = vmatmul.f32.gmra.mxu0 %v1777
      %v1835 = vpop.f32.mrf.mxu0
      %v1836 = vadd.f32 0.0, %v1835
      %1837 = vmatmul.f32.gmra.mxu0 %v1780
      %v1838 = vpop.f32.mrf.mxu0
      %v1839 = vadd.f32 0.0, %v1838
      %1840 = vmatmul.f32.gmra.mxu0 %v1783
      %v1841 = vpop.f32.mrf.mxu0
      %v1842 = vadd.f32 0.0, %v1841
      %1843 = vmatmul.f32.gmra.mxu0 %v1786
      %v1844 = vpop.f32.mrf.mxu0
      %v1845 = vadd.f32 0.0, %v1844
      %1846 = vmatmul.f32.gmra.mxu0 %v1789
      %v1847 = vpop.f32.mrf.mxu0
      %v1848 = vadd.f32 0.0, %v1847
      %1849 = vmatmul.f32.gmra.mxu0 %v1792
      %v1850 = vpop.f32.mrf.mxu0
      %v1851 = vadd.f32 0.0, %v1850
      %1852 = vmatmul.f32.gmra.mxu0 %v1795
      %v1853 = vpop.f32.mrf.mxu0
      %v1854 = vadd.f32 0.0, %v1853
      %1855 = vmatmul.f32.gmra.mxu0 %v1798
      %v1856 = vpop.f32.mrf.mxu0
      %v1857 = vadd.f32 0.0, %v1856
      %1858 = vmatmul.f32.gmra.mxu0 %v1801
      %v1859 = vpop.f32.mrf.mxu0
      %v1860 = vadd.f32 0.0, %v1859
      %1861 = vmatmul.f32.gmra.mxu0 %v1804
      %v1862 = vpop.f32.mrf.mxu0
      %v1863 = vadd.f32 0.0, %v1862
      %1864 = vmatmul.f32.gmra.mxu0 %v1807
      %v1865 = vpop.f32.mrf.mxu0
      %v1866 = vadd.f32 0.0, %v1865
      %1867 = vdwg.mxu0
      %v1868 = vadd.f32 %v1673, %v1827
      %v1869 = vadd.f32 %v1674, %v1830
      %v1870 = vadd.f32 %v1675, %v1833
      %v1871 = vadd.f32 %v1676, %v1836
      %v1872 = vadd.f32 %v1677, %v1839
      %v1873 = vadd.f32 %v1678, %v1842
      %v1874 = vadd.f32 %v1679, %v1845
      %v1875 = vadd.f32 %v1680, %v1848
      %v1876 = vadd.f32 %v1681, %v1851
      %v1877 = vadd.f32 %v1682, %v1854
      %v1878 = vadd.f32 %v1683, %v1857
      %v1879 = vadd.f32 %v1684, %v1860
      %v1880 = vadd.f32 %v1685, %v1863
      %v1881 = vadd.f32 %v1686, %v1866
      %s1882 = scalar_lea.vmem %s4, 48
      %v1883 = vld [vmem:[%s1882] sm:$0xff]
      %v1884 = vld [vmem:[%s1882 + $0x8] sm:$0x3f]
      %v1886 = vsel %vm1229, %v1884, 0
      %1888 = vmatpush.msra.mxu0 0.0
      %1889 = vmatpush.msra.mxu0 0.0
      %1890 = vmatpush.msra.mxu0 0.0
      %1891 = vmatpush.msra.mxu0 0.0
      %1892 = vmatpush.msra.mxu0 0.0
      %1893 = vmatpush.msra.mxu0 0.0
      %1894 = vmatpush.msra.mxu0 0.0
      %1895 = vmatpush.msra.mxu0 0.0
      %1896 = vmatpush.msra.mxu0 0.0
      %1897 = vmatpush.msra.mxu0 0.0
      %1898 = vmatpush.msra.mxu0 0.0
      %1899 = vmatpush.msra.mxu0 0.0
      %1900 = vmatpush.msra.mxu0 0.0
      %1901 = vmatpush.msra.mxu0 0.0
      %1902 = vmatpush.msra.mxu0 %v1886
      %1903 = vmatpush.msra.mxu0 %v1883
      %1904 = vmatmul.f32.gmra.mxu0 %v1188
      %v1905 = vpop.f32.mrf.mxu0
      %v1906 = vadd.f32 0.0, %v1905
      %1907 = vmatmul.f32.gmra.mxu0 %v1191
      %v1908 = vpop.f32.mrf.mxu0
      %v1909 = vadd.f32 0.0, %v1908
      %1910 = vmatmul.f32.gmra.mxu0 %v1194
      %v1911 = vpop.f32.mrf.mxu0
      %v1912 = vadd.f32 0.0, %v1911
      %1913 = vmatmul.f32.gmra.mxu0 %v1197
      %v1914 = vpop.f32.mrf.mxu0
      %v1915 = vadd.f32 0.0, %v1914
      %1916 = vmatmul.f32.gmra.mxu0 %v1200
      %v1917 = vpop.f32.mrf.mxu0
      %v1918 = vadd.f32 0.0, %v1917
      %1919 = vmatmul.f32.gmra.mxu0 %v1203
      %v1920 = vpop.f32.mrf.mxu0
      %v1921 = vadd.f32 0.0, %v1920
      %1922 = vmatmul.f32.gmra.mxu0 %v1206
      %v1923 = vpop.f32.mrf.mxu0
      %v1924 = vadd.f32 0.0, %v1923
      %1925 = vmatmul.f32.gmra.mxu0 %v1209
      %v1926 = vpop.f32.mrf.mxu0
      %v1927 = vadd.f32 0.0, %v1926
      %1928 = vmatmul.f32.gmra.mxu0 %v1212
      %v1929 = vpop.f32.mrf.mxu0
      %v1930 = vadd.f32 0.0, %v1929
      %1931 = vmatmul.f32.gmra.mxu0 %v1215
      %v1932 = vpop.f32.mrf.mxu0
      %v1933 = vadd.f32 0.0, %v1932
      %1934 = vmatmul.f32.gmra.mxu0 %v1218
      %v1935 = vpop.f32.mrf.mxu0
      %v1936 = vadd.f32 0.0, %v1935
      %1937 = vmatmul.f32.gmra.mxu0 %v1221
      %v1938 = vpop.f32.mrf.mxu0
      %v1939 = vadd.f32 0.0, %v1938
      %1940 = vmatmul.f32.gmra.mxu0 %v1224
      %v1941 = vpop.f32.mrf.mxu0
      %v1942 = vadd.f32 0.0, %v1941
      %1943 = vmatmul.f32.gmra.mxu0 %v1227
      %v1944 = vpop.f32.mrf.mxu0
      %v1945 = vadd.f32 0.0, %v1944
      %1946 = vdwg.mxu0
      %s1947 = scalar_lea.vmem %s5, 336
      %v1948 = vld [vmem:[%s1947] sm:$0xff]
      %v1949 = vld [vmem:[%s1947 + $0x8] sm:$0xff]
      %v1950 = vld [vmem:[%s1947 + $0x10] sm:$0xff]
      %v1951 = vld [vmem:[%s1947 + $0x18] sm:$0xff]
      %v1952 = vld [vmem:[%s1947 + $0x20] sm:$0xff]
      %v1953 = vld [vmem:[%s1947 + $0x28] sm:$0xff]
      %v1954 = vld [vmem:[%s1947 + $0x30] sm:$0xff]
      %v1955 = vld [vmem:[%s1947 + $0x38] sm:$0xff]
      %v1956 = vld [vmem:[%s1947 + $0x40] sm:$0xff]
      %v1957 = vld [vmem:[%s1947 + $0x48] sm:$0xff]
      %v1958 = vld [vmem:[%s1947 + $0x50] sm:$0xff]
      %v1959 = vld [vmem:[%s1947 + $0x58] sm:$0xff]
      %v1960 = vld [vmem:[%s1947 + $0x60] sm:$0xff]
      %v1961 = vld [vmem:[%s1947 + $0x68] sm:$0xff]
      %v1963 = vsel %vm1306, %v1948, 0
      %v1966 = vsel %vm1306, %v1949, 0
      %v1969 = vsel %vm1306, %v1950, 0
      %v1972 = vsel %vm1306, %v1951, 0
      %v1975 = vsel %vm1306, %v1952, 0
      %v1978 = vsel %vm1306, %v1953, 0
      %v1981 = vsel %vm1306, %v1954, 0
      %v1984 = vsel %vm1306, %v1955, 0
      %v1987 = vsel %vm1306, %v1956, 0
      %v1990 = vsel %vm1306, %v1957, 0
      %v1993 = vsel %vm1306, %v1958, 0
      %v1996 = vsel %vm1306, %v1959, 0
      %v1999 = vsel %vm1306, %v1960, 0
      %v2002 = vsel %vm1306, %v1961, 0
      %2004 = vmatpush.msra.mxu0 0.0
      %2005 = vmatpush.msra.mxu0 0.0
      %2006 = vmatpush.msra.mxu0 %v1945
      %2007 = vmatpush.msra.mxu0 %v1942
      %2008 = vmatpush.msra.mxu0 %v1939
      %2009 = vmatpush.msra.mxu0 %v1936
      %2010 = vmatpush.msra.mxu0 %v1933
      %2011 = vmatpush.msra.mxu0 %v1930
      %2012 = vmatpush.msra.mxu0 %v1927
      %2013 = vmatpush.msra.mxu0 %v1924
      %2014 = vmatpush.msra.mxu0 %v1921
      %2015 = vmatpush.msra.mxu0 %v1918
      %2016 = vmatpush.msra.mxu0 %v1915
      %2017 = vmatpush.msra.mxu0 %v1912
      %2018 = vmatpush.msra.mxu0 %v1909
      %2019 = vmatpush.msra.mxu0 %v1906
      %2020 = vmatmul.f32.gmra.mxu0 %v1963
      %v2021 = vpop.f32.mrf.mxu0
      %v2022 = vadd.f32 0.0, %v2021
      %2023 = vmatmul.f32.gmra.mxu0 %v1966
      %v2024 = vpop.f32.mrf.mxu0
      %v2025 = vadd.f32 0.0, %v2024
      %2026 = vmatmul.f32.gmra.mxu0 %v1969
      %v2027 = vpop.f32.mrf.mxu0
      %v2028 = vadd.f32 0.0, %v2027
      %2029 = vmatmul.f32.gmra.mxu0 %v1972
      %v2030 = vpop.f32.mrf.mxu0
      %v2031 = vadd.f32 0.0, %v2030
      %2032 = vmatmul.f32.gmra.mxu0 %v1975
      %v2033 = vpop.f32.mrf.mxu0
      %v2034 = vadd.f32 0.0, %v2033
      %2035 = vmatmul.f32.gmra.mxu0 %v1978
      %v2036 = vpop.f32.mrf.mxu0
      %v2037 = vadd.f32 0.0, %v2036
      %2038 = vmatmul.f32.gmra.mxu0 %v1981
      %v2039 = vpop.f32.mrf.mxu0
      %v2040 = vadd.f32 0.0, %v2039
      %2041 = vmatmul.f32.gmra.mxu0 %v1984
      %v2042 = vpop.f32.mrf.mxu0
      %v2043 = vadd.f32 0.0, %v2042
      %2044 = vmatmul.f32.gmra.mxu0 %v1987
      %v2045 = vpop.f32.mrf.mxu0
      %v2046 = vadd.f32 0.0, %v2045
      %2047 = vmatmul.f32.gmra.mxu0 %v1990
      %v2048 = vpop.f32.mrf.mxu0
      %v2049 = vadd.f32 0.0, %v2048
      %2050 = vmatmul.f32.gmra.mxu0 %v1993
      %v2051 = vpop.f32.mrf.mxu0
      %v2052 = vadd.f32 0.0, %v2051
      %2053 = vmatmul.f32.gmra.mxu0 %v1996
      %v2054 = vpop.f32.mrf.mxu0
      %v2055 = vadd.f32 0.0, %v2054
      %2056 = vmatmul.f32.gmra.mxu0 %v1999
      %v2057 = vpop.f32.mrf.mxu0
      %v2058 = vadd.f32 0.0, %v2057
      %2059 = vmatmul.f32.gmra.mxu0 %v2002
      %v2060 = vpop.f32.mrf.mxu0
      %v2061 = vadd.f32 0.0, %v2060
      %2062 = vdwg.mxu0
      %v2063 = vadd.f32 %v1868, %v2022
      %v2064 = vadd.f32 %v1869, %v2025
      %v2065 = vadd.f32 %v1870, %v2028
      %v2066 = vadd.f32 %v1871, %v2031
      %v2067 = vadd.f32 %v1872, %v2034
      %v2068 = vadd.f32 %v1873, %v2037
      %v2069 = vadd.f32 %v1874, %v2040
      %v2070 = vadd.f32 %v1875, %v2043
      %v2071 = vadd.f32 %v1876, %v2046
      %v2072 = vadd.f32 %v1877, %v2049
      %v2073 = vadd.f32 %v1878, %v2052
      %v2074 = vadd.f32 %v1879, %v2055
      %v2075 = vadd.f32 %v1880, %v2058
      %v2076 = vadd.f32 %v1881, %v2061
      %v2077 = vmax.f32 %v2063, 0.0
      %v2078 = vmax.f32 %v2064, 0.0
      %v2079 = vmax.f32 %v2065, 0.0
      %v2080 = vmax.f32 %v2066, 0.0
      %v2081 = vmax.f32 %v2067, 0.0
      %v2082 = vmax.f32 %v2068, 0.0
      %v2083 = vmax.f32 %v2069, 0.0
      %v2084 = vmax.f32 %v2070, 0.0
      %v2085 = vmax.f32 %v2071, 0.0
      %v2086 = vmax.f32 %v2072, 0.0
      %v2087 = vmax.f32 %v2073, 0.0
      %v2088 = vmax.f32 %v2074, 0.0
      %v2089 = vmax.f32 %v2075, 0.0
      %v2090 = vmax.f32 %v2076, 0.0
      %v2091 = vld [vmem:[%s8] sm:$0xff]
      %v2092 = vld [vmem:[%s8 + $0x8] sm:$0xff]
      %v2093 = vld [vmem:[%s8 + $0x10] sm:$0xff]
      %v2094 = vld [vmem:[%s8 + $0x18] sm:$0xff]
      %v2095 = vld [vmem:[%s8 + $0x20] sm:$0xff]
      %v2096 = vld [vmem:[%s8 + $0x28] sm:$0xff]
      %v2097 = vld [vmem:[%s8 + $0x30] sm:$0xff]
      %v2098 = vld [vmem:[%s8 + $0x38] sm:$0xff]
      %v2099 = vld [vmem:[%s8 + $0x40] sm:$0xff]
      %v2100 = vld [vmem:[%s8 + $0x48] sm:$0xff]
      %v2101 = vld [vmem:[%s8 + $0x50] sm:$0xff]
      %v2102 = vld [vmem:[%s8 + $0x58] sm:$0xff]
      %v2103 = vld [vmem:[%s8 + $0x60] sm:$0xff]
      %v2104 = vld [vmem:[%s8 + $0x68] sm:$0xff]
      %v2105 = vld [vmem:[%s8 + $0x70] sm:$0xff]
      %v2106 = vld [vmem:[%s8 + $0x78] sm:$0xff]
      %v2107 = vld [vmem:[%s8 + $0x80] sm:$0xff]
      %v2108 = vld [vmem:[%s8 + $0x88] sm:$0xff]
      %v2109 = vld [vmem:[%s8 + $0x90] sm:$0xff]
      %v2110 = vld [vmem:[%s8 + $0x98] sm:$0xff]
      %v2111 = vld [vmem:[%s8 + $0xa0] sm:$0xff]
      %v2112 = vld [vmem:[%s8 + $0xa8] sm:$0xff]
      %v2113 = vld [vmem:[%s8 + $0xb0] sm:$0xff]
      %v2114 = vld [vmem:[%s8 + $0xb8] sm:$0xff]
      %v2115 = vld [vmem:[%s8 + $0xc0] sm:$0xff]
      %v2116 = vld [vmem:[%s8 + $0xc8] sm:$0xff]
      %v2117 = vld [vmem:[%s8 + $0xd0] sm:$0xff]
      %v2118 = vld [vmem:[%s8 + $0xd8] sm:$0xff]
      %v2119 = vld [vmem:[%s8 + $0xe0] sm:$0xff]
      %v2120 = vld [vmem:[%s8 + $0xe8] sm:$0xff]
      %v2121 = vld [vmem:[%s8 + $0xf0] sm:$0xff]
      %v2122 = vld [vmem:[%s8 + $0xf8] sm:$0xff]
      %v2123 = vld [vmem:[%s7] sm:$0xff]
      %v2124 = vld [vmem:[%s7 + $0x8] sm:$0xff]
      %v2125 = vld [vmem:[%s7 + $0x10] sm:$0xff]
      %v2126 = vld [vmem:[%s7 + $0x18] sm:$0xff]
      %v2127 = vld [vmem:[%s7 + $0x20] sm:$0xff]
      %v2128 = vld [vmem:[%s7 + $0x28] sm:$0xff]
      %v2129 = vld [vmem:[%s7 + $0x30] sm:$0xff]
      %v2130 = vld [vmem:[%s7 + $0x38] sm:$0xff]
      %v2131 = vld [vmem:[%s7 + $0x40] sm:$0xff]
      %v2132 = vld [vmem:[%s7 + $0x48] sm:$0xff]
      %v2133 = vld [vmem:[%s7 + $0x50] sm:$0xff]
      %v2134 = vld [vmem:[%s7 + $0x58] sm:$0xff]
      %v2135 = vld [vmem:[%s7 + $0x60] sm:$0xff]
      %v2136 = vld [vmem:[%s7 + $0x68] sm:$0xff]
      %v2137 = vld [vmem:[%s7 + $0x70] sm:$0xff]
      %v2138 = vld [vmem:[%s7 + $0x78] sm:$0xff]
      %v2139 = vld [vmem:[%s7 + $0x80] sm:$0xff]
      %v2140 = vld [vmem:[%s7 + $0x88] sm:$0xff]
      %v2141 = vld [vmem:[%s7 + $0x90] sm:$0xff]
      %v2142 = vld [vmem:[%s7 + $0x98] sm:$0xff]
      %v2143 = vld [vmem:[%s7 + $0xa0] sm:$0xff]
      %v2144 = vld [vmem:[%s7 + $0xa8] sm:$0xff]
      %v2145 = vld [vmem:[%s7 + $0xb0] sm:$0xff]
      %v2146 = vld [vmem:[%s7 + $0xb8] sm:$0xff]
      %v2147 = vld [vmem:[%s7 + $0xc0] sm:$0xff]
      %v2148 = vld [vmem:[%s7 + $0xc8] sm:$0xff]
      %v2149 = vld [vmem:[%s7 + $0xd0] sm:$0xff]
      %v2150 = vld [vmem:[%s7 + $0xd8] sm:$0xff]
      %v2151 = vld [vmem:[%s7 + $0xe0] sm:$0xff]
      %v2152 = vld [vmem:[%s7 + $0xe8] sm:$0xff]
      %v2153 = vld [vmem:[%s7 + $0xf0] sm:$0xff]
      %v2154 = vld [vmem:[%s7 + $0xf8] sm:$0xff]
      %v2156 = vsel %vm1306, %v2123, 0
      %v2159 = vsel %vm1306, %v2124, 0
      %v2162 = vsel %vm1306, %v2125, 0
      %v2165 = vsel %vm1306, %v2126, 0
      %v2168 = vsel %vm1306, %v2127, 0
      %v2171 = vsel %vm1306, %v2128, 0
      %v2174 = vsel %vm1306, %v2129, 0
      %v2177 = vsel %vm1306, %v2130, 0
      %v2180 = vsel %vm1306, %v2131, 0
      %v2183 = vsel %vm1306, %v2132, 0
      %v2186 = vsel %vm1306, %v2133, 0
      %v2189 = vsel %vm1306, %v2134, 0
      %v2192 = vsel %vm1306, %v2135, 0
      %v2195 = vsel %vm1306, %v2136, 0
      %v2198 = vsel %vm1306, %v2137, 0
      %v2201 = vsel %vm1306, %v2138, 0
      %v2204 = vsel %vm1306, %v2139, 0
      %v2207 = vsel %vm1306, %v2140, 0
      %v2210 = vsel %vm1306, %v2141, 0
      %v2213 = vsel %vm1306, %v2142, 0
      %v2216 = vsel %vm1306, %v2143, 0
      %v2219 = vsel %vm1306, %v2144, 0
      %v2222 = vsel %vm1306, %v2145, 0
      %v2225 = vsel %vm1306, %v2146, 0
      %v2228 = vsel %vm1306, %v2147, 0
      %v2231 = vsel %vm1306, %v2148, 0
      %v2234 = vsel %vm1306, %v2149, 0
      %v2237 = vsel %vm1306, %v2150, 0
      %v2240 = vsel %vm1306, %v2151, 0
      %v2243 = vsel %vm1306, %v2152, 0
      %v2246 = vsel %vm1306, %v2153, 0
      %v2249 = vsel %vm1306, %v2154, 0
      %2251 = vmatpush.msra.mxu0 0.0
      %2252 = vmatpush.msra.mxu0 0.0
      %2253 = vmatpush.msra.mxu0 %v2090
      %2254 = vmatpush.msra.mxu0 %v2089
      %2255 = vmatpush.msra.mxu0 %v2088
      %2256 = vmatpush.msra.mxu0 %v2087
      %2257 = vmatpush.msra.mxu0 %v2086
      %2258 = vmatpush.msra.mxu0 %v2085
      %2259 = vmatpush.msra.mxu0 %v2084
      %2260 = vmatpush.msra.mxu0 %v2083
      %2261 = vmatpush.msra.mxu0 %v2082
      %2262 = vmatpush.msra.mxu0 %v2081
      %2263 = vmatpush.msra.mxu0 %v2080
      %2264 = vmatpush.msra.mxu0 %v2079
      %2265 = vmatpush.msra.mxu0 %v2078
      %2266 = vmatpush.msra.mxu0 %v2077
      %2267 = vmatmul.f32.gmra.mxu0 %v2156
      %v2268 = vpop.f32.mrf.mxu0
      %v2269 = vadd.f32 0.0, %v2268
      %2270 = vmatmul.f32.gmra.mxu0 %v2159
      %v2271 = vpop.f32.mrf.mxu0
      %v2272 = vadd.f32 0.0, %v2271
      %2273 = vmatmul.f32.gmra.mxu0 %v2162
      %v2274 = vpop.f32.mrf.mxu0
      %v2275 = vadd.f32 0.0, %v2274
      %2276 = vmatmul.f32.gmra.mxu0 %v2165
      %v2277 = vpop.f32.mrf.mxu0
      %v2278 = vadd.f32 0.0, %v2277
      %2279 = vmatmul.f32.gmra.mxu0 %v2168
      %v2280 = vpop.f32.mrf.mxu0
      %v2281 = vadd.f32 0.0, %v2280
      %2282 = vmatmul.f32.gmra.mxu0 %v2171
      %v2283 = vpop.f32.mrf.mxu0
      %v2284 = vadd.f32 0.0, %v2283
      %2285 = vmatmul.f32.gmra.mxu0 %v2174
      %v2286 = vpop.f32.mrf.mxu0
      %v2287 = vadd.f32 0.0, %v2286
      %2288 = vmatmul.f32.gmra.mxu0 %v2177
      %v2289 = vpop.f32.mrf.mxu0
      %v2290 = vadd.f32 0.0, %v2289
      %2291 = vmatmul.f32.gmra.mxu0 %v2180
      %v2292 = vpop.f32.mrf.mxu0
      %v2293 = vadd.f32 0.0, %v2292
      %2294 = vmatmul.f32.gmra.mxu0 %v2183
      %v2295 = vpop.f32.mrf.mxu0
      %v2296 = vadd.f32 0.0, %v2295
      %2297 = vmatmul.f32.gmra.mxu0 %v2186
      %v2298 = vpop.f32.mrf.mxu0
      %v2299 = vadd.f32 0.0, %v2298
      %2300 = vmatmul.f32.gmra.mxu0 %v2189
      %v2301 = vpop.f32.mrf.mxu0
      %v2302 = vadd.f32 0.0, %v2301
      %2303 = vmatmul.f32.gmra.mxu0 %v2192
      %v2304 = vpop.f32.mrf.mxu0
      %v2305 = vadd.f32 0.0, %v2304
      %2306 = vmatmul.f32.gmra.mxu0 %v2195
      %v2307 = vpop.f32.mrf.mxu0
      %v2308 = vadd.f32 0.0, %v2307
      %2309 = vmatmul.f32.gmra.mxu0 %v2198
      %v2310 = vpop.f32.mrf.mxu0
      %v2311 = vadd.f32 0.0, %v2310
      %2312 = vmatmul.f32.gmra.mxu0 %v2201
      %v2313 = vpop.f32.mrf.mxu0
      %v2314 = vadd.f32 0.0, %v2313
      %2315 = vmatmul.f32.gmra.mxu0 %v2204
      %v2316 = vpop.f32.mrf.mxu0
      %v2317 = vadd.f32 0.0, %v2316
      %2318 = vmatmul.f32.gmra.mxu0 %v2207
      %v2319 = vpop.f32.mrf.mxu0
      %v2320 = vadd.f32 0.0, %v2319
      %2321 = vmatmul.f32.gmra.mxu0 %v2210
      %v2322 = vpop.f32.mrf.mxu0
      %v2323 = vadd.f32 0.0, %v2322
      %2324 = vmatmul.f32.gmra.mxu0 %v2213
      %v2325 = vpop.f32.mrf.mxu0
      %v2326 = vadd.f32 0.0, %v2325
      %2327 = vmatmul.f32.gmra.mxu0 %v2216
      %v2328 = vpop.f32.mrf.mxu0
      %v2329 = vadd.f32 0.0, %v2328
      %2330 = vmatmul.f32.gmra.mxu0 %v2219
      %v2331 = vpop.f32.mrf.mxu0
      %v2332 = vadd.f32 0.0, %v2331
      %2333 = vmatmul.f32.gmra.mxu0 %v2222
      %v2334 = vpop.f32.mrf.mxu0
      %v2335 = vadd.f32 0.0, %v2334
      %2336 = vmatmul.f32.gmra.mxu0 %v2225
      %v2337 = vpop.f32.mrf.mxu0
      %v2338 = vadd.f32 0.0, %v2337
      %2339 = vmatmul.f32.gmra.mxu0 %v2228
      %v2340 = vpop.f32.mrf.mxu0
      %v2341 = vadd.f32 0.0, %v2340
      %2342 = vmatmul.f32.gmra.mxu0 %v2231
      %v2343 = vpop.f32.mrf.mxu0
      %v2344 = vadd.f32 0.0, %v2343
      %2345 = vmatmul.f32.gmra.mxu0 %v2234
      %v2346 = vpop.f32.mrf.mxu0
      %v2347 = vadd.f32 0.0, %v2346
      %2348 = vmatmul.f32.gmra.mxu0 %v2237
      %v2349 = vpop.f32.mrf.mxu0
      %v2350 = vadd.f32 0.0, %v2349
      %2351 = vmatmul.f32.gmra.mxu0 %v2240
      %v2352 = vpop.f32.mrf.mxu0
      %v2353 = vadd.f32 0.0, %v2352
      %2354 = vmatmul.f32.gmra.mxu0 %v2243
      %v2355 = vpop.f32.mrf.mxu0
      %v2356 = vadd.f32 0.0, %v2355
      %2357 = vmatmul.f32.gmra.mxu0 %v2246
      %v2358 = vpop.f32.mrf.mxu0
      %v2359 = vadd.f32 0.0, %v2358
      %2360 = vmatmul.f32.gmra.mxu0 %v2249
      %v2361 = vpop.f32.mrf.mxu0
      %v2362 = vadd.f32 0.0, %v2361
      %2363 = vdwg.mxu0
      %v2364 = vadd.f32 %v2091, %v2269
      %v2365 = vadd.f32 %v2092, %v2272
      %v2366 = vadd.f32 %v2093, %v2275
      %v2367 = vadd.f32 %v2094, %v2278
      %v2368 = vadd.f32 %v2095, %v2281
      %v2369 = vadd.f32 %v2096, %v2284
      %v2370 = vadd.f32 %v2097, %v2287
      %v2371 = vadd.f32 %v2098, %v2290
      %v2372 = vadd.f32 %v2099, %v2293
      %v2373 = vadd.f32 %v2100, %v2296
      %v2374 = vadd.f32 %v2101, %v2299
      %v2375 = vadd.f32 %v2102, %v2302
      %v2376 = vadd.f32 %v2103, %v2305
      %v2377 = vadd.f32 %v2104, %v2308
      %v2378 = vadd.f32 %v2105, %v2311
      %v2379 = vadd.f32 %v2106, %v2314
      %v2380 = vadd.f32 %v2107, %v2317
      %v2381 = vadd.f32 %v2108, %v2320
      %v2382 = vadd.f32 %v2109, %v2323
      %v2383 = vadd.f32 %v2110, %v2326
      %v2384 = vadd.f32 %v2111, %v2329
      %v2385 = vadd.f32 %v2112, %v2332
      %v2386 = vadd.f32 %v2113, %v2335
      %v2387 = vadd.f32 %v2114, %v2338
      %v2388 = vadd.f32 %v2115, %v2341
      %v2389 = vadd.f32 %v2116, %v2344
      %v2390 = vadd.f32 %v2117, %v2347
      %v2391 = vadd.f32 %v2118, %v2350
      %v2392 = vadd.f32 %v2119, %v2353
      %v2393 = vadd.f32 %v2120, %v2356
      %v2394 = vadd.f32 %v2121, %v2359
      %v2395 = vadd.f32 %v2122, %v2362
      %s2396 = scalar_lea.vmem %s7, 256
      %v2397 = vld [vmem:[%s2396] sm:$0xff]
      %v2398 = vld [vmem:[%s2396 + $0x8] sm:$0xff]
      %v2399 = vld [vmem:[%s2396 + $0x10] sm:$0xff]
      %v2400 = vld [vmem:[%s2396 + $0x18] sm:$0xff]
      %v2401 = vld [vmem:[%s2396 + $0x20] sm:$0xff]
      %v2402 = vld [vmem:[%s2396 + $0x28] sm:$0xff]
      %v2403 = vld [vmem:[%s2396 + $0x30] sm:$0xff]
      %v2404 = vld [vmem:[%s2396 + $0x38] sm:$0xff]
      %v2405 = vld [vmem:[%s2396 + $0x40] sm:$0xff]
      %v2406 = vld [vmem:[%s2396 + $0x48] sm:$0xff]
      %v2407 = vld [vmem:[%s2396 + $0x50] sm:$0xff]
      %v2408 = vld [vmem:[%s2396 + $0x58] sm:$0xff]
      %v2409 = vld [vmem:[%s2396 + $0x60] sm:$0xff]
      %v2410 = vld [vmem:[%s2396 + $0x68] sm:$0xff]
      %v2411 = vld [vmem:[%s2396 + $0x70] sm:$0xff]
      %v2412 = vld [vmem:[%s2396 + $0x78] sm:$0xff]
      %v2413 = vld [vmem:[%s2396 + $0x80] sm:$0xff]
      %v2414 = vld [vmem:[%s2396 + $0x88] sm:$0xff]
      %v2415 = vld [vmem:[%s2396 + $0x90] sm:$0xff]
      %v2416 = vld [vmem:[%s2396 + $0x98] sm:$0xff]
      %v2417 = vld [vmem:[%s2396 + $0xa0] sm:$0xff]
      %v2418 = vld [vmem:[%s2396 + $0xa8] sm:$0xff]
      %v2419 = vld [vmem:[%s2396 + $0xb0] sm:$0xff]
      %v2420 = vld [vmem:[%s2396 + $0xb8] sm:$0xff]
      %v2421 = vld [vmem:[%s2396 + $0xc0] sm:$0xff]
      %v2422 = vld [vmem:[%s2396 + $0xc8] sm:$0xff]
      %v2423 = vld [vmem:[%s2396 + $0xd0] sm:$0xff]
      %v2424 = vld [vmem:[%s2396 + $0xd8] sm:$0xff]
      %v2425 = vld [vmem:[%s2396 + $0xe0] sm:$0xff]
      %v2426 = vld [vmem:[%s2396 + $0xe8] sm:$0xff]
      %v2427 = vld [vmem:[%s2396 + $0xf0] sm:$0xff]
      %v2428 = vld [vmem:[%s2396 + $0xf8] sm:$0xff]
      %2443 = vrot.lane.b32.xlu0 %v2077, 127
      %v2444 = vpop.permute.xlu0 %2443
      %2445 = vrot.lane.b32.xlu0 %v2078, 127
      %v2446 = vpop.permute.xlu0 %2445
      %2447 = vrot.lane.b32.xlu0 %v2079, 127
      %v2448 = vpop.permute.xlu0 %2447
      %2449 = vrot.lane.b32.xlu0 %v2080, 127
      %v2450 = vpop.permute.xlu0 %2449
      %2451 = vrot.lane.b32.xlu0 %v2081, 127
      %v2452 = vpop.permute.xlu0 %2451
      %2453 = vrot.lane.b32.xlu0 %v2082, 127
      %v2454 = vpop.permute.xlu0 %2453
      %2455 = vrot.lane.b32.xlu0 %v2083, 127
      %v2456 = vpop.permute.xlu0 %2455
      %2457 = vrot.lane.b32.xlu0 %v2084, 127
      %v2458 = vpop.permute.xlu0 %2457
      %2459 = vrot.lane.b32.xlu0 %v2085, 127
      %v2460 = vpop.permute.xlu0 %2459
      %2461 = vrot.lane.b32.xlu0 %v2086, 127
      %v2462 = vpop.permute.xlu0 %2461
      %2463 = vrot.lane.b32.xlu0 %v2087, 127
      %v2464 = vpop.permute.xlu0 %2463
      %2465 = vrot.lane.b32.xlu0 %v2088, 127
      %v2466 = vpop.permute.xlu0 %2465
      %2467 = vrot.lane.b32.xlu0 %v2089, 127
      %v2468 = vpop.permute.xlu0 %2467
      %2469 = vrot.lane.b32.xlu0 %v2090, 127
      %v2470 = vpop.permute.xlu0 %2469
      %v2486 = vsel %vm1306, %v2397, 0
      %v2489 = vsel %vm1306, %v2398, 0
      %v2492 = vsel %vm1306, %v2399, 0
      %v2495 = vsel %vm1306, %v2400, 0
      %v2498 = vsel %vm1306, %v2401, 0
      %v2501 = vsel %vm1306, %v2402, 0
      %v2504 = vsel %vm1306, %v2403, 0
      %v2507 = vsel %vm1306, %v2404, 0
      %v2510 = vsel %vm1306, %v2405, 0
      %v2513 = vsel %vm1306, %v2406, 0
      %v2516 = vsel %vm1306, %v2407, 0
      %v2519 = vsel %vm1306, %v2408, 0
      %v2522 = vsel %vm1306, %v2409, 0
      %v2525 = vsel %vm1306, %v2410, 0
      %v2528 = vsel %vm1306, %v2411, 0
      %v2531 = vsel %vm1306, %v2412, 0
      %v2534 = vsel %vm1306, %v2413, 0
      %v2537 = vsel %vm1306, %v2414, 0
      %v2540 = vsel %vm1306, %v2415, 0
      %v2543 = vsel %vm1306, %v2416, 0
      %v2546 = vsel %vm1306, %v2417, 0
      %v2549 = vsel %vm1306, %v2418, 0
      %v2552 = vsel %vm1306, %v2419, 0
      %v2555 = vsel %vm1306, %v2420, 0
      %v2558 = vsel %vm1306, %v2421, 0
      %v2561 = vsel %vm1306, %v2422, 0
      %v2564 = vsel %vm1306, %v2423, 0
      %v2567 = vsel %vm1306, %v2424, 0
      %v2570 = vsel %vm1306, %v2425, 0
      %v2573 = vsel %vm1306, %v2426, 0
      %v2576 = vsel %vm1306, %v2427, 0
      %v2579 = vsel %vm1306, %v2428, 0
      %2581 = vmatpush.msra.mxu0 0.0
      %2582 = vmatpush.msra.mxu0 0.0
      %2583 = vmatpush.msra.mxu0 %v2470
      %2584 = vmatpush.msra.mxu0 %v2468
      %2585 = vmatpush.msra.mxu0 %v2466
      %2586 = vmatpush.msra.mxu0 %v2464
      %2587 = vmatpush.msra.mxu0 %v2462
      %2588 = vmatpush.msra.mxu0 %v2460
      %2589 = vmatpush.msra.mxu0 %v2458
      %2590 = vmatpush.msra.mxu0 %v2456
      %2591 = vmatpush.msra.mxu0 %v2454
      %2592 = vmatpush.msra.mxu0 %v2452
      %2593 = vmatpush.msra.mxu0 %v2450
      %2594 = vmatpush.msra.mxu0 %v2448
      %2595 = vmatpush.msra.mxu0 %v2446
      %2596 = vmatpush.msra.mxu0 %v2444
      %2597 = vmatmul.f32.gmra.mxu0 %v2486
      %v2598 = vpop.f32.mrf.mxu0
      %v2599 = vadd.f32 0.0, %v2598
      %2600 = vmatmul.f32.gmra.mxu0 %v2489
      %v2601 = vpop.f32.mrf.mxu0
      %v2602 = vadd.f32 0.0, %v2601
      %2603 = vmatmul.f32.gmra.mxu0 %v2492
      %v2604 = vpop.f32.mrf.mxu0
      %v2605 = vadd.f32 0.0, %v2604
      %2606 = vmatmul.f32.gmra.mxu0 %v2495
      %v2607 = vpop.f32.mrf.mxu0
      %v2608 = vadd.f32 0.0, %v2607
      %2609 = vmatmul.f32.gmra.mxu0 %v2498
      %v2610 = vpop.f32.mrf.mxu0
      %v2611 = vadd.f32 0.0, %v2610
      %2612 = vmatmul.f32.gmra.mxu0 %v2501
      %v2613 = vpop.f32.mrf.mxu0
      %v2614 = vadd.f32 0.0, %v2613
      %2615 = vmatmul.f32.gmra.mxu0 %v2504
      %v2616 = vpop.f32.mrf.mxu0
      %v2617 = vadd.f32 0.0, %v2616
      %2618 = vmatmul.f32.gmra.mxu0 %v2507
      %v2619 = vpop.f32.mrf.mxu0
      %v2620 = vadd.f32 0.0, %v2619
      %2621 = vmatmul.f32.gmra.mxu0 %v2510
      %v2622 = vpop.f32.mrf.mxu0
      %v2623 = vadd.f32 0.0, %v2622
      %2624 = vmatmul.f32.gmra.mxu0 %v2513
      %v2625 = vpop.f32.mrf.mxu0
      %v2626 = vadd.f32 0.0, %v2625
      %2627 = vmatmul.f32.gmra.mxu0 %v2516
      %v2628 = vpop.f32.mrf.mxu0
      %v2629 = vadd.f32 0.0, %v2628
      %2630 = vmatmul.f32.gmra.mxu0 %v2519
      %v2631 = vpop.f32.mrf.mxu0
      %v2632 = vadd.f32 0.0, %v2631
      %2633 = vmatmul.f32.gmra.mxu0 %v2522
      %v2634 = vpop.f32.mrf.mxu0
      %v2635 = vadd.f32 0.0, %v2634
      %2636 = vmatmul.f32.gmra.mxu0 %v2525
      %v2637 = vpop.f32.mrf.mxu0
      %v2638 = vadd.f32 0.0, %v2637
      %2639 = vmatmul.f32.gmra.mxu0 %v2528
      %v2640 = vpop.f32.mrf.mxu0
      %v2641 = vadd.f32 0.0, %v2640
      %2642 = vmatmul.f32.gmra.mxu0 %v2531
      %v2643 = vpop.f32.mrf.mxu0
      %v2644 = vadd.f32 0.0, %v2643
      %2645 = vmatmul.f32.gmra.mxu0 %v2534
      %v2646 = vpop.f32.mrf.mxu0
      %v2647 = vadd.f32 0.0, %v2646
      %2648 = vmatmul.f32.gmra.mxu0 %v2537
      %v2649 = vpop.f32.mrf.mxu0
      %v2650 = vadd.f32 0.0, %v2649
      %2651 = vmatmul.f32.gmra.mxu0 %v2540
      %v2652 = vpop.f32.mrf.mxu0
      %v2653 = vadd.f32 0.0, %v2652
      %2654 = vmatmul.f32.gmra.mxu0 %v2543
      %v2655 = vpop.f32.mrf.mxu0
      %v2656 = vadd.f32 0.0, %v2655
      %2657 = vmatmul.f32.gmra.mxu0 %v2546
      %v2658 = vpop.f32.mrf.mxu0
      %v2659 = vadd.f32 0.0, %v2658
      %2660 = vmatmul.f32.gmra.mxu0 %v2549
      %v2661 = vpop.f32.mrf.mxu0
      %v2662 = vadd.f32 0.0, %v2661
      %2663 = vmatmul.f32.gmra.mxu0 %v2552
      %v2664 = vpop.f32.mrf.mxu0
      %v2665 = vadd.f32 0.0, %v2664
      %2666 = vmatmul.f32.gmra.mxu0 %v2555
      %v2667 = vpop.f32.mrf.mxu0
      %v2668 = vadd.f32 0.0, %v2667
      %2669 = vmatmul.f32.gmra.mxu0 %v2558
      %v2670 = vpop.f32.mrf.mxu0
      %v2671 = vadd.f32 0.0, %v2670
      %2672 = vmatmul.f32.gmra.mxu0 %v2561
      %v2673 = vpop.f32.mrf.mxu0
      %v2674 = vadd.f32 0.0, %v2673
      %2675 = vmatmul.f32.gmra.mxu0 %v2564
      %v2676 = vpop.f32.mrf.mxu0
      %v2677 = vadd.f32 0.0, %v2676
      %2678 = vmatmul.f32.gmra.mxu0 %v2567
      %v2679 = vpop.f32.mrf.mxu0
      %v2680 = vadd.f32 0.0, %v2679
      %2681 = vmatmul.f32.gmra.mxu0 %v2570
      %v2682 = vpop.f32.mrf.mxu0
      %v2683 = vadd.f32 0.0, %v2682
      %2684 = vmatmul.f32.gmra.mxu0 %v2573
      %v2685 = vpop.f32.mrf.mxu0
      %v2686 = vadd.f32 0.0, %v2685
      %2687 = vmatmul.f32.gmra.mxu0 %v2576
      %v2688 = vpop.f32.mrf.mxu0
      %v2689 = vadd.f32 0.0, %v2688
      %2690 = vmatmul.f32.gmra.mxu0 %v2579
      %v2691 = vpop.f32.mrf.mxu0
      %v2692 = vadd.f32 0.0, %v2691
      %2693 = vdwg.mxu0
      %v2694 = vadd.f32 %v2364, %v2599
      %v2695 = vadd.f32 %v2365, %v2602
      %v2696 = vadd.f32 %v2366, %v2605
      %v2697 = vadd.f32 %v2367, %v2608
      %v2698 = vadd.f32 %v2368, %v2611
      %v2699 = vadd.f32 %v2369, %v2614
      %v2700 = vadd.f32 %v2370, %v2617
      %v2701 = vadd.f32 %v2371, %v2620
      %v2702 = vadd.f32 %v2372, %v2623
      %v2703 = vadd.f32 %v2373, %v2626
      %v2704 = vadd.f32 %v2374, %v2629
      %v2705 = vadd.f32 %v2375, %v2632
      %v2706 = vadd.f32 %v2376, %v2635
      %v2707 = vadd.f32 %v2377, %v2638
      %v2708 = vadd.f32 %v2378, %v2641
      %v2709 = vadd.f32 %v2379, %v2644
      %v2710 = vadd.f32 %v2380, %v2647
      %v2711 = vadd.f32 %v2381, %v2650
      %v2712 = vadd.f32 %v2382, %v2653
      %v2713 = vadd.f32 %v2383, %v2656
      %v2714 = vadd.f32 %v2384, %v2659
      %v2715 = vadd.f32 %v2385, %v2662
      %v2716 = vadd.f32 %v2386, %v2665
      %v2717 = vadd.f32 %v2387, %v2668
      %v2718 = vadd.f32 %v2388, %v2671
      %v2719 = vadd.f32 %v2389, %v2674
      %v2720 = vadd.f32 %v2390, %v2677
      %v2721 = vadd.f32 %v2391, %v2680
      %v2722 = vadd.f32 %v2392, %v2683
      %v2723 = vadd.f32 %v2393, %v2686
      %v2724 = vadd.f32 %v2394, %v2689
      %v2725 = vadd.f32 %v2395, %v2692
      %s2726 = scalar_lea.vmem %s7, 512
      %v2727 = vld [vmem:[%s2726] sm:$0xff]
      %v2728 = vld [vmem:[%s2726 + $0x8] sm:$0xff]
      %v2729 = vld [vmem:[%s2726 + $0x10] sm:$0xff]
      %v2730 = vld [vmem:[%s2726 + $0x18] sm:$0xff]
      %v2731 = vld [vmem:[%s2726 + $0x20] sm:$0xff]
      %v2732 = vld [vmem:[%s2726 + $0x28] sm:$0xff]
      %v2733 = vld [vmem:[%s2726 + $0x30] sm:$0xff]
      %v2734 = vld [vmem:[%s2726 + $0x38] sm:$0xff]
      %v2735 = vld [vmem:[%s2726 + $0x40] sm:$0xff]
      %v2736 = vld [vmem:[%s2726 + $0x48] sm:$0xff]
      %v2737 = vld [vmem:[%s2726 + $0x50] sm:$0xff]
      %v2738 = vld [vmem:[%s2726 + $0x58] sm:$0xff]
      %v2739 = vld [vmem:[%s2726 + $0x60] sm:$0xff]
      %v2740 = vld [vmem:[%s2726 + $0x68] sm:$0xff]
      %v2741 = vld [vmem:[%s2726 + $0x70] sm:$0xff]
      %v2742 = vld [vmem:[%s2726 + $0x78] sm:$0xff]
      %v2743 = vld [vmem:[%s2726 + $0x80] sm:$0xff]
      %v2744 = vld [vmem:[%s2726 + $0x88] sm:$0xff]
      %v2745 = vld [vmem:[%s2726 + $0x90] sm:$0xff]
      %v2746 = vld [vmem:[%s2726 + $0x98] sm:$0xff]
      %v2747 = vld [vmem:[%s2726 + $0xa0] sm:$0xff]
      %v2748 = vld [vmem:[%s2726 + $0xa8] sm:$0xff]
      %v2749 = vld [vmem:[%s2726 + $0xb0] sm:$0xff]
      %v2750 = vld [vmem:[%s2726 + $0xb8] sm:$0xff]
      %v2751 = vld [vmem:[%s2726 + $0xc0] sm:$0xff]
      %v2752 = vld [vmem:[%s2726 + $0xc8] sm:$0xff]
      %v2753 = vld [vmem:[%s2726 + $0xd0] sm:$0xff]
      %v2754 = vld [vmem:[%s2726 + $0xd8] sm:$0xff]
      %v2755 = vld [vmem:[%s2726 + $0xe0] sm:$0xff]
      %v2756 = vld [vmem:[%s2726 + $0xe8] sm:$0xff]
      %v2757 = vld [vmem:[%s2726 + $0xf0] sm:$0xff]
      %v2758 = vld [vmem:[%s2726 + $0xf8] sm:$0xff]
      %2759 = vrot.lane.b32.xlu0 %v2077, 126
      %v2760 = vpop.permute.xlu0 %2759
      %2761 = vrot.lane.b32.xlu0 %v2078, 126
      %v2762 = vpop.permute.xlu0 %2761
      %2763 = vrot.lane.b32.xlu0 %v2079, 126
      %v2764 = vpop.permute.xlu0 %2763
      %2765 = vrot.lane.b32.xlu0 %v2080, 126
      %v2766 = vpop.permute.xlu0 %2765
      %2767 = vrot.lane.b32.xlu0 %v2081, 126
      %v2768 = vpop.permute.xlu0 %2767
      %2769 = vrot.lane.b32.xlu0 %v2082, 126
      %v2770 = vpop.permute.xlu0 %2769
      %2771 = vrot.lane.b32.xlu0 %v2083, 126
      %v2772 = vpop.permute.xlu0 %2771
      %2773 = vrot.lane.b32.xlu0 %v2084, 126
      %v2774 = vpop.permute.xlu0 %2773
      %2775 = vrot.lane.b32.xlu0 %v2085, 126
      %v2776 = vpop.permute.xlu0 %2775
      %2777 = vrot.lane.b32.xlu0 %v2086, 126
      %v2778 = vpop.permute.xlu0 %2777
      %2779 = vrot.lane.b32.xlu0 %v2087, 126
      %v2780 = vpop.permute.xlu0 %2779
      %2781 = vrot.lane.b32.xlu0 %v2088, 126
      %v2782 = vpop.permute.xlu0 %2781
      %2783 = vrot.lane.b32.xlu0 %v2089, 126
      %v2784 = vpop.permute.xlu0 %2783
      %2785 = vrot.lane.b32.xlu0 %v2090, 126
      %v2786 = vpop.permute.xlu0 %2785
      %v2802 = vsel %vm1306, %v2727, 0
      %v2805 = vsel %vm1306, %v2728, 0
      %v2808 = vsel %vm1306, %v2729, 0
      %v2811 = vsel %vm1306, %v2730, 0
      %v2814 = vsel %vm1306, %v2731, 0
      %v2817 = vsel %vm1306, %v2732, 0
      %v2820 = vsel %vm1306, %v2733, 0
      %v2823 = vsel %vm1306, %v2734, 0
      %v2826 = vsel %vm1306, %v2735, 0
      %v2829 = vsel %vm1306, %v2736, 0
      %v2832 = vsel %vm1306, %v2737, 0
      %v2835 = vsel %vm1306, %v2738, 0
      %v2838 = vsel %vm1306, %v2739, 0
      %v2841 = vsel %vm1306, %v2740, 0
      %v2844 = vsel %vm1306, %v2741, 0
      %v2847 = vsel %vm1306, %v2742, 0
      %v2850 = vsel %vm1306, %v2743, 0
      %v2853 = vsel %vm1306, %v2744, 0
      %v2856 = vsel %vm1306, %v2745, 0
      %v2859 = vsel %vm1306, %v2746, 0
      %v2862 = vsel %vm1306, %v2747, 0
      %v2865 = vsel %vm1306, %v2748, 0
      %v2868 = vsel %vm1306, %v2749, 0
      %v2871 = vsel %vm1306, %v2750, 0
      %v2874 = vsel %vm1306, %v2751, 0
      %v2877 = vsel %vm1306, %v2752, 0
      %v2880 = vsel %vm1306, %v2753, 0
      %v2883 = vsel %vm1306, %v2754, 0
      %v2886 = vsel %vm1306, %v2755, 0
      %v2889 = vsel %vm1306, %v2756, 0
      %v2892 = vsel %vm1306, %v2757, 0
      %v2895 = vsel %vm1306, %v2758, 0
      %2897 = vmatpush.msra.mxu0 0.0
      %2898 = vmatpush.msra.mxu0 0.0
      %2899 = vmatpush.msra.mxu0 %v2786
      %2900 = vmatpush.msra.mxu0 %v2784
      %2901 = vmatpush.msra.mxu0 %v2782
      %2902 = vmatpush.msra.mxu0 %v2780
      %2903 = vmatpush.msra.mxu0 %v2778
      %2904 = vmatpush.msra.mxu0 %v2776
      %2905 = vmatpush.msra.mxu0 %v2774
      %2906 = vmatpush.msra.mxu0 %v2772
      %2907 = vmatpush.msra.mxu0 %v2770
      %2908 = vmatpush.msra.mxu0 %v2768
      %2909 = vmatpush.msra.mxu0 %v2766
      %2910 = vmatpush.msra.mxu0 %v2764
      %2911 = vmatpush.msra.mxu0 %v2762
      %2912 = vmatpush.msra.mxu0 %v2760
      %2913 = vmatmul.f32.gmra.mxu0 %v2802
      %v2914 = vpop.f32.mrf.mxu0
      %v2915 = vadd.f32 0.0, %v2914
      %2916 = vmatmul.f32.gmra.mxu0 %v2805
      %v2917 = vpop.f32.mrf.mxu0
      %v2918 = vadd.f32 0.0, %v2917
      %2919 = vmatmul.f32.gmra.mxu0 %v2808
      %v2920 = vpop.f32.mrf.mxu0
      %v2921 = vadd.f32 0.0, %v2920
      %2922 = vmatmul.f32.gmra.mxu0 %v2811
      %v2923 = vpop.f32.mrf.mxu0
      %v2924 = vadd.f32 0.0, %v2923
      %2925 = vmatmul.f32.gmra.mxu0 %v2814
      %v2926 = vpop.f32.mrf.mxu0
      %v2927 = vadd.f32 0.0, %v2926
      %2928 = vmatmul.f32.gmra.mxu0 %v2817
      %v2929 = vpop.f32.mrf.mxu0
      %v2930 = vadd.f32 0.0, %v2929
      %2931 = vmatmul.f32.gmra.mxu0 %v2820
      %v2932 = vpop.f32.mrf.mxu0
      %v2933 = vadd.f32 0.0, %v2932
      %2934 = vmatmul.f32.gmra.mxu0 %v2823
      %v2935 = vpop.f32.mrf.mxu0
      %v2936 = vadd.f32 0.0, %v2935
      %2937 = vmatmul.f32.gmra.mxu0 %v2826
      %v2938 = vpop.f32.mrf.mxu0
      %v2939 = vadd.f32 0.0, %v2938
      %2940 = vmatmul.f32.gmra.mxu0 %v2829
      %v2941 = vpop.f32.mrf.mxu0
      %v2942 = vadd.f32 0.0, %v2941
      %2943 = vmatmul.f32.gmra.mxu0 %v2832
      %v2944 = vpop.f32.mrf.mxu0
      %v2945 = vadd.f32 0.0, %v2944
      %2946 = vmatmul.f32.gmra.mxu0 %v2835
      %v2947 = vpop.f32.mrf.mxu0
      %v2948 = vadd.f32 0.0, %v2947
      %2949 = vmatmul.f32.gmra.mxu0 %v2838
      %v2950 = vpop.f32.mrf.mxu0
      %v2951 = vadd.f32 0.0, %v2950
      %2952 = vmatmul.f32.gmra.mxu0 %v2841
      %v2953 = vpop.f32.mrf.mxu0
      %v2954 = vadd.f32 0.0, %v2953
      %2955 = vmatmul.f32.gmra.mxu0 %v2844
      %v2956 = vpop.f32.mrf.mxu0
      %v2957 = vadd.f32 0.0, %v2956
      %2958 = vmatmul.f32.gmra.mxu0 %v2847
      %v2959 = vpop.f32.mrf.mxu0
      %v2960 = vadd.f32 0.0, %v2959
      %2961 = vmatmul.f32.gmra.mxu0 %v2850
      %v2962 = vpop.f32.mrf.mxu0
      %v2963 = vadd.f32 0.0, %v2962
      %2964 = vmatmul.f32.gmra.mxu0 %v2853
      %v2965 = vpop.f32.mrf.mxu0
      %v2966 = vadd.f32 0.0, %v2965
      %2967 = vmatmul.f32.gmra.mxu0 %v2856
      %v2968 = vpop.f32.mrf.mxu0
      %v2969 = vadd.f32 0.0, %v2968
      %2970 = vmatmul.f32.gmra.mxu0 %v2859
      %v2971 = vpop.f32.mrf.mxu0
      %v2972 = vadd.f32 0.0, %v2971
      %2973 = vmatmul.f32.gmra.mxu0 %v2862
      %v2974 = vpop.f32.mrf.mxu0
      %v2975 = vadd.f32 0.0, %v2974
      %2976 = vmatmul.f32.gmra.mxu0 %v2865
      %v2977 = vpop.f32.mrf.mxu0
      %v2978 = vadd.f32 0.0, %v2977
      %2979 = vmatmul.f32.gmra.mxu0 %v2868
      %v2980 = vpop.f32.mrf.mxu0
      %v2981 = vadd.f32 0.0, %v2980
      %2982 = vmatmul.f32.gmra.mxu0 %v2871
      %v2983 = vpop.f32.mrf.mxu0
      %v2984 = vadd.f32 0.0, %v2983
      %2985 = vmatmul.f32.gmra.mxu0 %v2874
      %v2986 = vpop.f32.mrf.mxu0
      %v2987 = vadd.f32 0.0, %v2986
      %2988 = vmatmul.f32.gmra.mxu0 %v2877
      %v2989 = vpop.f32.mrf.mxu0
      %v2990 = vadd.f32 0.0, %v2989
      %2991 = vmatmul.f32.gmra.mxu0 %v2880
      %v2992 = vpop.f32.mrf.mxu0
      %v2993 = vadd.f32 0.0, %v2992
      %2994 = vmatmul.f32.gmra.mxu0 %v2883
      %v2995 = vpop.f32.mrf.mxu0
      %v2996 = vadd.f32 0.0, %v2995
      %2997 = vmatmul.f32.gmra.mxu0 %v2886
      %v2998 = vpop.f32.mrf.mxu0
      %v2999 = vadd.f32 0.0, %v2998
      %3000 = vmatmul.f32.gmra.mxu0 %v2889
      %v3001 = vpop.f32.mrf.mxu0
      %v3002 = vadd.f32 0.0, %v3001
      %3003 = vmatmul.f32.gmra.mxu0 %v2892
      %v3004 = vpop.f32.mrf.mxu0
      %v3005 = vadd.f32 0.0, %v3004
      %3006 = vmatmul.f32.gmra.mxu0 %v2895
      %v3007 = vpop.f32.mrf.mxu0
      %v3008 = vadd.f32 0.0, %v3007
      %3009 = vdwg.mxu0
      %v3010 = vadd.f32 %v2694, %v2915
      %v3011 = vadd.f32 %v2695, %v2918
      %v3012 = vadd.f32 %v2696, %v2921
      %v3013 = vadd.f32 %v2697, %v2924
      %v3014 = vadd.f32 %v2698, %v2927
      %v3015 = vadd.f32 %v2699, %v2930
      %v3016 = vadd.f32 %v2700, %v2933
      %v3017 = vadd.f32 %v2701, %v2936
      %v3018 = vadd.f32 %v2702, %v2939
      %v3019 = vadd.f32 %v2703, %v2942
      %v3020 = vadd.f32 %v2704, %v2945
      %v3021 = vadd.f32 %v2705, %v2948
      %v3022 = vadd.f32 %v2706, %v2951
      %v3023 = vadd.f32 %v2707, %v2954
      %v3024 = vadd.f32 %v2708, %v2957
      %v3025 = vadd.f32 %v2709, %v2960
      %v3026 = vadd.f32 %v2710, %v2963
      %v3027 = vadd.f32 %v2711, %v2966
      %v3028 = vadd.f32 %v2712, %v2969
      %v3029 = vadd.f32 %v2713, %v2972
      %v3030 = vadd.f32 %v2714, %v2975
      %v3031 = vadd.f32 %v2715, %v2978
      %v3032 = vadd.f32 %v2716, %v2981
      %v3033 = vadd.f32 %v2717, %v2984
      %v3034 = vadd.f32 %v2718, %v2987
      %v3035 = vadd.f32 %v2719, %v2990
      %v3036 = vadd.f32 %v2720, %v2993
      %v3037 = vadd.f32 %v2721, %v2996
      %v3038 = vadd.f32 %v2722, %v2999
      %v3039 = vadd.f32 %v2723, %v3002
      %v3040 = vadd.f32 %v2724, %v3005
      %v3041 = vadd.f32 %v2725, %v3008
      %s3042 = scalar_lea.vmem %s7, 768
      %v3043 = vld [vmem:[%s3042] sm:$0xff]
      %v3044 = vld [vmem:[%s3042 + $0x8] sm:$0xff]
      %v3045 = vld [vmem:[%s3042 + $0x10] sm:$0xff]
      %v3046 = vld [vmem:[%s3042 + $0x18] sm:$0xff]
      %v3047 = vld [vmem:[%s3042 + $0x20] sm:$0xff]
      %v3048 = vld [vmem:[%s3042 + $0x28] sm:$0xff]
      %v3049 = vld [vmem:[%s3042 + $0x30] sm:$0xff]
      %v3050 = vld [vmem:[%s3042 + $0x38] sm:$0xff]
      %v3051 = vld [vmem:[%s3042 + $0x40] sm:$0xff]
      %v3052 = vld [vmem:[%s3042 + $0x48] sm:$0xff]
      %v3053 = vld [vmem:[%s3042 + $0x50] sm:$0xff]
      %v3054 = vld [vmem:[%s3042 + $0x58] sm:$0xff]
      %v3055 = vld [vmem:[%s3042 + $0x60] sm:$0xff]
      %v3056 = vld [vmem:[%s3042 + $0x68] sm:$0xff]
      %v3057 = vld [vmem:[%s3042 + $0x70] sm:$0xff]
      %v3058 = vld [vmem:[%s3042 + $0x78] sm:$0xff]
      %v3059 = vld [vmem:[%s3042 + $0x80] sm:$0xff]
      %v3060 = vld [vmem:[%s3042 + $0x88] sm:$0xff]
      %v3061 = vld [vmem:[%s3042 + $0x90] sm:$0xff]
      %v3062 = vld [vmem:[%s3042 + $0x98] sm:$0xff]
      %v3063 = vld [vmem:[%s3042 + $0xa0] sm:$0xff]
      %v3064 = vld [vmem:[%s3042 + $0xa8] sm:$0xff]
      %v3065 = vld [vmem:[%s3042 + $0xb0] sm:$0xff]
      %v3066 = vld [vmem:[%s3042 + $0xb8] sm:$0xff]
      %v3067 = vld [vmem:[%s3042 + $0xc0] sm:$0xff]
      %v3068 = vld [vmem:[%s3042 + $0xc8] sm:$0xff]
      %v3069 = vld [vmem:[%s3042 + $0xd0] sm:$0xff]
      %v3070 = vld [vmem:[%s3042 + $0xd8] sm:$0xff]
      %v3071 = vld [vmem:[%s3042 + $0xe0] sm:$0xff]
      %v3072 = vld [vmem:[%s3042 + $0xe8] sm:$0xff]
      %v3073 = vld [vmem:[%s3042 + $0xf0] sm:$0xff]
      %v3074 = vld [vmem:[%s3042 + $0xf8] sm:$0xff]
      %3075 = vrot.lane.b32.xlu0 %v2077, 125
      %v3076 = vpop.permute.xlu0 %3075
      %3077 = vrot.lane.b32.xlu0 %v2078, 125
      %v3078 = vpop.permute.xlu0 %3077
      %3079 = vrot.lane.b32.xlu0 %v2079, 125
      %v3080 = vpop.permute.xlu0 %3079
      %3081 = vrot.lane.b32.xlu0 %v2080, 125
      %v3082 = vpop.permute.xlu0 %3081
      %3083 = vrot.lane.b32.xlu0 %v2081, 125
      %v3084 = vpop.permute.xlu0 %3083
      %3085 = vrot.lane.b32.xlu0 %v2082, 125
      %v3086 = vpop.permute.xlu0 %3085
      %3087 = vrot.lane.b32.xlu0 %v2083, 125
      %v3088 = vpop.permute.xlu0 %3087
      %3089 = vrot.lane.b32.xlu0 %v2084, 125
      %v3090 = vpop.permute.xlu0 %3089
      %3091 = vrot.lane.b32.xlu0 %v2085, 125
      %v3092 = vpop.permute.xlu0 %3091
      %3093 = vrot.lane.b32.xlu0 %v2086, 125
      %v3094 = vpop.permute.xlu0 %3093
      %3095 = vrot.lane.b32.xlu0 %v2087, 125
      %v3096 = vpop.permute.xlu0 %3095
      %3097 = vrot.lane.b32.xlu0 %v2088, 125
      %v3098 = vpop.permute.xlu0 %3097
      %3099 = vrot.lane.b32.xlu0 %v2089, 125
      %v3100 = vpop.permute.xlu0 %3099
      %3101 = vrot.lane.b32.xlu0 %v2090, 125
      %v3102 = vpop.permute.xlu0 %3101
      %v3118 = vsel %vm1306, %v3043, 0
      %v3121 = vsel %vm1306, %v3044, 0
      %v3124 = vsel %vm1306, %v3045, 0
      %v3127 = vsel %vm1306, %v3046, 0
      %v3130 = vsel %vm1306, %v3047, 0
      %v3133 = vsel %vm1306, %v3048, 0
      %v3136 = vsel %vm1306, %v3049, 0
      %v3139 = vsel %vm1306, %v3050, 0
      %v3142 = vsel %vm1306, %v3051, 0
      %v3145 = vsel %vm1306, %v3052, 0
      %v3148 = vsel %vm1306, %v3053, 0
      %v3151 = vsel %vm1306, %v3054, 0
      %v3154 = vsel %vm1306, %v3055, 0
      %v3157 = vsel %vm1306, %v3056, 0
      %v3160 = vsel %vm1306, %v3057, 0
      %v3163 = vsel %vm1306, %v3058, 0
      %v3166 = vsel %vm1306, %v3059, 0
      %v3169 = vsel %vm1306, %v3060, 0
      %v3172 = vsel %vm1306, %v3061, 0
      %v3175 = vsel %vm1306, %v3062, 0
      %v3178 = vsel %vm1306, %v3063, 0
      %v3181 = vsel %vm1306, %v3064, 0
      %v3184 = vsel %vm1306, %v3065, 0
      %v3187 = vsel %vm1306, %v3066, 0
      %v3190 = vsel %vm1306, %v3067, 0
      %v3193 = vsel %vm1306, %v3068, 0
      %v3196 = vsel %vm1306, %v3069, 0
      %v3199 = vsel %vm1306, %v3070, 0
      %v3202 = vsel %vm1306, %v3071, 0
      %v3205 = vsel %vm1306, %v3072, 0
      %v3208 = vsel %vm1306, %v3073, 0
      %v3211 = vsel %vm1306, %v3074, 0
      %3213 = vmatpush.msra.mxu0 0.0
      %3214 = vmatpush.msra.mxu0 0.0
      %3215 = vmatpush.msra.mxu0 %v3102
      %3216 = vmatpush.msra.mxu0 %v3100
      %3217 = vmatpush.msra.mxu0 %v3098
      %3218 = vmatpush.msra.mxu0 %v3096
      %3219 = vmatpush.msra.mxu0 %v3094
      %3220 = vmatpush.msra.mxu0 %v3092
      %3221 = vmatpush.msra.mxu0 %v3090
      %3222 = vmatpush.msra.mxu0 %v3088
      %3223 = vmatpush.msra.mxu0 %v3086
      %3224 = vmatpush.msra.mxu0 %v3084
      %3225 = vmatpush.msra.mxu0 %v3082
      %3226 = vmatpush.msra.mxu0 %v3080
      %3227 = vmatpush.msra.mxu0 %v3078
      %3228 = vmatpush.msra.mxu0 %v3076
      %3229 = vmatmul.f32.gmra.mxu0 %v3118
      %v3230 = vpop.f32.mrf.mxu0
      %v3231 = vadd.f32 0.0, %v3230
      %3232 = vmatmul.f32.gmra.mxu0 %v3121
      %v3233 = vpop.f32.mrf.mxu0
      %v3234 = vadd.f32 0.0, %v3233
      %3235 = vmatmul.f32.gmra.mxu0 %v3124
      %v3236 = vpop.f32.mrf.mxu0
      %v3237 = vadd.f32 0.0, %v3236
      %3238 = vmatmul.f32.gmra.mxu0 %v3127
      %v3239 = vpop.f32.mrf.mxu0
      %v3240 = vadd.f32 0.0, %v3239
      %3241 = vmatmul.f32.gmra.mxu0 %v3130
      %v3242 = vpop.f32.mrf.mxu0
      %v3243 = vadd.f32 0.0, %v3242
      %3244 = vmatmul.f32.gmra.mxu0 %v3133
      %v3245 = vpop.f32.mrf.mxu0
      %v3246 = vadd.f32 0.0, %v3245
      %3247 = vmatmul.f32.gmra.mxu0 %v3136
      %v3248 = vpop.f32.mrf.mxu0
      %v3249 = vadd.f32 0.0, %v3248
      %3250 = vmatmul.f32.gmra.mxu0 %v3139
      %v3251 = vpop.f32.mrf.mxu0
      %v3252 = vadd.f32 0.0, %v3251
      %3253 = vmatmul.f32.gmra.mxu0 %v3142
      %v3254 = vpop.f32.mrf.mxu0
      %v3255 = vadd.f32 0.0, %v3254
      %3256 = vmatmul.f32.gmra.mxu0 %v3145
      %v3257 = vpop.f32.mrf.mxu0
      %v3258 = vadd.f32 0.0, %v3257
      %3259 = vmatmul.f32.gmra.mxu0 %v3148
      %v3260 = vpop.f32.mrf.mxu0
      %v3261 = vadd.f32 0.0, %v3260
      %3262 = vmatmul.f32.gmra.mxu0 %v3151
      %v3263 = vpop.f32.mrf.mxu0
      %v3264 = vadd.f32 0.0, %v3263
      %3265 = vmatmul.f32.gmra.mxu0 %v3154
      %v3266 = vpop.f32.mrf.mxu0
      %v3267 = vadd.f32 0.0, %v3266
      %3268 = vmatmul.f32.gmra.mxu0 %v3157
      %v3269 = vpop.f32.mrf.mxu0
      %v3270 = vadd.f32 0.0, %v3269
      %3271 = vmatmul.f32.gmra.mxu0 %v3160
      %v3272 = vpop.f32.mrf.mxu0
      %v3273 = vadd.f32 0.0, %v3272
      %3274 = vmatmul.f32.gmra.mxu0 %v3163
      %v3275 = vpop.f32.mrf.mxu0
      %v3276 = vadd.f32 0.0, %v3275
      %3277 = vmatmul.f32.gmra.mxu0 %v3166
      %v3278 = vpop.f32.mrf.mxu0
      %v3279 = vadd.f32 0.0, %v3278
      %3280 = vmatmul.f32.gmra.mxu0 %v3169
      %v3281 = vpop.f32.mrf.mxu0
      %v3282 = vadd.f32 0.0, %v3281
      %3283 = vmatmul.f32.gmra.mxu0 %v3172
      %v3284 = vpop.f32.mrf.mxu0
      %v3285 = vadd.f32 0.0, %v3284
      %3286 = vmatmul.f32.gmra.mxu0 %v3175
      %v3287 = vpop.f32.mrf.mxu0
      %v3288 = vadd.f32 0.0, %v3287
      %3289 = vmatmul.f32.gmra.mxu0 %v3178
      %v3290 = vpop.f32.mrf.mxu0
      %v3291 = vadd.f32 0.0, %v3290
      %3292 = vmatmul.f32.gmra.mxu0 %v3181
      %v3293 = vpop.f32.mrf.mxu0
      %v3294 = vadd.f32 0.0, %v3293
      %3295 = vmatmul.f32.gmra.mxu0 %v3184
      %v3296 = vpop.f32.mrf.mxu0
      %v3297 = vadd.f32 0.0, %v3296
      %3298 = vmatmul.f32.gmra.mxu0 %v3187
      %v3299 = vpop.f32.mrf.mxu0
      %v3300 = vadd.f32 0.0, %v3299
      %3301 = vmatmul.f32.gmra.mxu0 %v3190
      %v3302 = vpop.f32.mrf.mxu0
      %v3303 = vadd.f32 0.0, %v3302
      %3304 = vmatmul.f32.gmra.mxu0 %v3193
      %v3305 = vpop.f32.mrf.mxu0
      %v3306 = vadd.f32 0.0, %v3305
      %3307 = vmatmul.f32.gmra.mxu0 %v3196
      %v3308 = vpop.f32.mrf.mxu0
      %v3309 = vadd.f32 0.0, %v3308
      %3310 = vmatmul.f32.gmra.mxu0 %v3199
      %v3311 = vpop.f32.mrf.mxu0
      %v3312 = vadd.f32 0.0, %v3311
      %3313 = vmatmul.f32.gmra.mxu0 %v3202
      %v3314 = vpop.f32.mrf.mxu0
      %v3315 = vadd.f32 0.0, %v3314
      %3316 = vmatmul.f32.gmra.mxu0 %v3205
      %v3317 = vpop.f32.mrf.mxu0
      %v3318 = vadd.f32 0.0, %v3317
      %3319 = vmatmul.f32.gmra.mxu0 %v3208
      %v3320 = vpop.f32.mrf.mxu0
      %v3321 = vadd.f32 0.0, %v3320
      %3322 = vmatmul.f32.gmra.mxu0 %v3211
      %v3323 = vpop.f32.mrf.mxu0
      %v3324 = vadd.f32 0.0, %v3323
      %3325 = vdwg.mxu0
      %v3326 = vadd.f32 %v3010, %v3231
      %v3327 = vadd.f32 %v3011, %v3234
      %v3328 = vadd.f32 %v3012, %v3237
      %v3329 = vadd.f32 %v3013, %v3240
      %v3330 = vadd.f32 %v3014, %v3243
      %v3331 = vadd.f32 %v3015, %v3246
      %v3332 = vadd.f32 %v3016, %v3249
      %v3333 = vadd.f32 %v3017, %v3252
      %v3334 = vadd.f32 %v3018, %v3255
      %v3335 = vadd.f32 %v3019, %v3258
      %v3336 = vadd.f32 %v3020, %v3261
      %v3337 = vadd.f32 %v3021, %v3264
      %v3338 = vadd.f32 %v3022, %v3267
      %v3339 = vadd.f32 %v3023, %v3270
      %v3340 = vadd.f32 %v3024, %v3273
      %v3341 = vadd.f32 %v3025, %v3276
      %v3342 = vadd.f32 %v3026, %v3279
      %v3343 = vadd.f32 %v3027, %v3282
      %v3344 = vadd.f32 %v3028, %v3285
      %v3345 = vadd.f32 %v3029, %v3288
      %v3346 = vadd.f32 %v3030, %v3291
      %v3347 = vadd.f32 %v3031, %v3294
      %v3348 = vadd.f32 %v3032, %v3297
      %v3349 = vadd.f32 %v3033, %v3300
      %v3350 = vadd.f32 %v3034, %v3303
      %v3351 = vadd.f32 %v3035, %v3306
      %v3352 = vadd.f32 %v3036, %v3309
      %v3353 = vadd.f32 %v3037, %v3312
      %v3354 = vadd.f32 %v3038, %v3315
      %v3355 = vadd.f32 %v3039, %v3318
      %v3356 = vadd.f32 %v3040, %v3321
      %v3357 = vadd.f32 %v3041, %v3324
      %s3358 = scalar_lea.vmem %s7, 1024
      %v3359 = vld [vmem:[%s3358] sm:$0xff]
      %v3360 = vld [vmem:[%s3358 + $0x8] sm:$0xff]
      %v3361 = vld [vmem:[%s3358 + $0x10] sm:$0xff]
      %v3362 = vld [vmem:[%s3358 + $0x18] sm:$0xff]
      %v3363 = vld [vmem:[%s3358 + $0x20] sm:$0xff]
      %v3364 = vld [vmem:[%s3358 + $0x28] sm:$0xff]
      %v3365 = vld [vmem:[%s3358 + $0x30] sm:$0xff]
      %v3366 = vld [vmem:[%s3358 + $0x38] sm:$0xff]
      %v3367 = vld [vmem:[%s3358 + $0x40] sm:$0xff]
      %v3368 = vld [vmem:[%s3358 + $0x48] sm:$0xff]
      %v3369 = vld [vmem:[%s3358 + $0x50] sm:$0xff]
      %v3370 = vld [vmem:[%s3358 + $0x58] sm:$0xff]
      %v3371 = vld [vmem:[%s3358 + $0x60] sm:$0xff]
      %v3372 = vld [vmem:[%s3358 + $0x68] sm:$0xff]
      %v3373 = vld [vmem:[%s3358 + $0x70] sm:$0xff]
      %v3374 = vld [vmem:[%s3358 + $0x78] sm:$0xff]
      %v3375 = vld [vmem:[%s3358 + $0x80] sm:$0xff]
      %v3376 = vld [vmem:[%s3358 + $0x88] sm:$0xff]
      %v3377 = vld [vmem:[%s3358 + $0x90] sm:$0xff]
      %v3378 = vld [vmem:[%s3358 + $0x98] sm:$0xff]
      %v3379 = vld [vmem:[%s3358 + $0xa0] sm:$0xff]
      %v3380 = vld [vmem:[%s3358 + $0xa8] sm:$0xff]
      %v3381 = vld [vmem:[%s3358 + $0xb0] sm:$0xff]
      %v3382 = vld [vmem:[%s3358 + $0xb8] sm:$0xff]
      %v3383 = vld [vmem:[%s3358 + $0xc0] sm:$0xff]
      %v3384 = vld [vmem:[%s3358 + $0xc8] sm:$0xff]
      %v3385 = vld [vmem:[%s3358 + $0xd0] sm:$0xff]
      %v3386 = vld [vmem:[%s3358 + $0xd8] sm:$0xff]
      %v3387 = vld [vmem:[%s3358 + $0xe0] sm:$0xff]
      %v3388 = vld [vmem:[%s3358 + $0xe8] sm:$0xff]
      %v3389 = vld [vmem:[%s3358 + $0xf0] sm:$0xff]
      %v3390 = vld [vmem:[%s3358 + $0xf8] sm:$0xff]
      %3391 = vrot.lane.b32.xlu0 %v2077, 124
      %v3392 = vpop.permute.xlu0 %3391
      %3393 = vrot.lane.b32.xlu0 %v2078, 124
      %v3394 = vpop.permute.xlu0 %3393
      %3395 = vrot.lane.b32.xlu0 %v2079, 124
      %v3396 = vpop.permute.xlu0 %3395
      %3397 = vrot.lane.b32.xlu0 %v2080, 124
      %v3398 = vpop.permute.xlu0 %3397
      %3399 = vrot.lane.b32.xlu0 %v2081, 124
      %v3400 = vpop.permute.xlu0 %3399
      %3401 = vrot.lane.b32.xlu0 %v2082, 124
      %v3402 = vpop.permute.xlu0 %3401
      %3403 = vrot.lane.b32.xlu0 %v2083, 124
      %v3404 = vpop.permute.xlu0 %3403
      %3405 = vrot.lane.b32.xlu0 %v2084, 124
      %v3406 = vpop.permute.xlu0 %3405
      %3407 = vrot.lane.b32.xlu0 %v2085, 124
      %v3408 = vpop.permute.xlu0 %3407
      %3409 = vrot.lane.b32.xlu0 %v2086, 124
      %v3410 = vpop.permute.xlu0 %3409
      %3411 = vrot.lane.b32.xlu0 %v2087, 124
      %v3412 = vpop.permute.xlu0 %3411
      %3413 = vrot.lane.b32.xlu0 %v2088, 124
      %v3414 = vpop.permute.xlu0 %3413
      %3415 = vrot.lane.b32.xlu0 %v2089, 124
      %v3416 = vpop.permute.xlu0 %3415
      %3417 = vrot.lane.b32.xlu0 %v2090, 124
      %v3418 = vpop.permute.xlu0 %3417
      %v3434 = vsel %vm1306, %v3359, 0
      %v3437 = vsel %vm1306, %v3360, 0
      %v3440 = vsel %vm1306, %v3361, 0
      %v3443 = vsel %vm1306, %v3362, 0
      %v3446 = vsel %vm1306, %v3363, 0
      %v3449 = vsel %vm1306, %v3364, 0
      %v3452 = vsel %vm1306, %v3365, 0
      %v3455 = vsel %vm1306, %v3366, 0
      %v3458 = vsel %vm1306, %v3367, 0
      %v3461 = vsel %vm1306, %v3368, 0
      %v3464 = vsel %vm1306, %v3369, 0
      %v3467 = vsel %vm1306, %v3370, 0
      %v3470 = vsel %vm1306, %v3371, 0
      %v3473 = vsel %vm1306, %v3372, 0
      %v3476 = vsel %vm1306, %v3373, 0
      %v3479 = vsel %vm1306, %v3374, 0
      %v3482 = vsel %vm1306, %v3375, 0
      %v3485 = vsel %vm1306, %v3376, 0
      %v3488 = vsel %vm1306, %v3377, 0
      %v3491 = vsel %vm1306, %v3378, 0
      %v3494 = vsel %vm1306, %v3379, 0
      %v3497 = vsel %vm1306, %v3380, 0
      %v3500 = vsel %vm1306, %v3381, 0
      %v3503 = vsel %vm1306, %v3382, 0
      %v3506 = vsel %vm1306, %v3383, 0
      %v3509 = vsel %vm1306, %v3384, 0
      %v3512 = vsel %vm1306, %v3385, 0
      %v3515 = vsel %vm1306, %v3386, 0
      %v3518 = vsel %vm1306, %v3387, 0
      %v3521 = vsel %vm1306, %v3388, 0
      %v3524 = vsel %vm1306, %v3389, 0
      %v3527 = vsel %vm1306, %v3390, 0
      %3529 = vmatpush.msra.mxu0 0.0
      %3530 = vmatpush.msra.mxu0 0.0
      %3531 = vmatpush.msra.mxu0 %v3418
      %3532 = vmatpush.msra.mxu0 %v3416
      %3533 = vmatpush.msra.mxu0 %v3414
      %3534 = vmatpush.msra.mxu0 %v3412
      %3535 = vmatpush.msra.mxu0 %v3410
      %3536 = vmatpush.msra.mxu0 %v3408
      %3537 = vmatpush.msra.mxu0 %v3406
      %3538 = vmatpush.msra.mxu0 %v3404
      %3539 = vmatpush.msra.mxu0 %v3402
      %3540 = vmatpush.msra.mxu0 %v3400
      %3541 = vmatpush.msra.mxu0 %v3398
      %3542 = vmatpush.msra.mxu0 %v3396
      %3543 = vmatpush.msra.mxu0 %v3394
      %3544 = vmatpush.msra.mxu0 %v3392
      %3545 = vmatmul.f32.gmra.mxu0 %v3434
      %v3546 = vpop.f32.mrf.mxu0
      %v3547 = vadd.f32 0.0, %v3546
      %3548 = vmatmul.f32.gmra.mxu0 %v3437
      %v3549 = vpop.f32.mrf.mxu0
      %v3550 = vadd.f32 0.0, %v3549
      %3551 = vmatmul.f32.gmra.mxu0 %v3440
      %v3552 = vpop.f32.mrf.mxu0
      %v3553 = vadd.f32 0.0, %v3552
      %3554 = vmatmul.f32.gmra.mxu0 %v3443
      %v3555 = vpop.f32.mrf.mxu0
      %v3556 = vadd.f32 0.0, %v3555
      %3557 = vmatmul.f32.gmra.mxu0 %v3446
      %v3558 = vpop.f32.mrf.mxu0
      %v3559 = vadd.f32 0.0, %v3558
      %3560 = vmatmul.f32.gmra.mxu0 %v3449
      %v3561 = vpop.f32.mrf.mxu0
      %v3562 = vadd.f32 0.0, %v3561
      %3563 = vmatmul.f32.gmra.mxu0 %v3452
      %v3564 = vpop.f32.mrf.mxu0
      %v3565 = vadd.f32 0.0, %v3564
      %3566 = vmatmul.f32.gmra.mxu0 %v3455
      %v3567 = vpop.f32.mrf.mxu0
      %v3568 = vadd.f32 0.0, %v3567
      %3569 = vmatmul.f32.gmra.mxu0 %v3458
      %v3570 = vpop.f32.mrf.mxu0
      %v3571 = vadd.f32 0.0, %v3570
      %3572 = vmatmul.f32.gmra.mxu0 %v3461
      %v3573 = vpop.f32.mrf.mxu0
      %v3574 = vadd.f32 0.0, %v3573
      %3575 = vmatmul.f32.gmra.mxu0 %v3464
      %v3576 = vpop.f32.mrf.mxu0
      %v3577 = vadd.f32 0.0, %v3576
      %3578 = vmatmul.f32.gmra.mxu0 %v3467
      %v3579 = vpop.f32.mrf.mxu0
      %v3580 = vadd.f32 0.0, %v3579
      %3581 = vmatmul.f32.gmra.mxu0 %v3470
      %v3582 = vpop.f32.mrf.mxu0
      %v3583 = vadd.f32 0.0, %v3582
      %3584 = vmatmul.f32.gmra.mxu0 %v3473
      %v3585 = vpop.f32.mrf.mxu0
      %v3586 = vadd.f32 0.0, %v3585
      %3587 = vmatmul.f32.gmra.mxu0 %v3476
      %v3588 = vpop.f32.mrf.mxu0
      %v3589 = vadd.f32 0.0, %v3588
      %3590 = vmatmul.f32.gmra.mxu0 %v3479
      %v3591 = vpop.f32.mrf.mxu0
      %v3592 = vadd.f32 0.0, %v3591
      %3593 = vmatmul.f32.gmra.mxu0 %v3482
      %v3594 = vpop.f32.mrf.mxu0
      %v3595 = vadd.f32 0.0, %v3594
      %3596 = vmatmul.f32.gmra.mxu0 %v3485
      %v3597 = vpop.f32.mrf.mxu0
      %v3598 = vadd.f32 0.0, %v3597
      %3599 = vmatmul.f32.gmra.mxu0 %v3488
      %v3600 = vpop.f32.mrf.mxu0
      %v3601 = vadd.f32 0.0, %v3600
      %3602 = vmatmul.f32.gmra.mxu0 %v3491
      %v3603 = vpop.f32.mrf.mxu0
      %v3604 = vadd.f32 0.0, %v3603
      %3605 = vmatmul.f32.gmra.mxu0 %v3494
      %v3606 = vpop.f32.mrf.mxu0
      %v3607 = vadd.f32 0.0, %v3606
      %3608 = vmatmul.f32.gmra.mxu0 %v3497
      %v3609 = vpop.f32.mrf.mxu0
      %v3610 = vadd.f32 0.0, %v3609
      %3611 = vmatmul.f32.gmra.mxu0 %v3500
      %v3612 = vpop.f32.mrf.mxu0
      %v3613 = vadd.f32 0.0, %v3612
      %3614 = vmatmul.f32.gmra.mxu0 %v3503
      %v3615 = vpop.f32.mrf.mxu0
      %v3616 = vadd.f32 0.0, %v3615
      %3617 = vmatmul.f32.gmra.mxu0 %v3506
      %v3618 = vpop.f32.mrf.mxu0
      %v3619 = vadd.f32 0.0, %v3618
      %3620 = vmatmul.f32.gmra.mxu0 %v3509
      %v3621 = vpop.f32.mrf.mxu0
      %v3622 = vadd.f32 0.0, %v3621
      %3623 = vmatmul.f32.gmra.mxu0 %v3512
      %v3624 = vpop.f32.mrf.mxu0
      %v3625 = vadd.f32 0.0, %v3624
      %3626 = vmatmul.f32.gmra.mxu0 %v3515
      %v3627 = vpop.f32.mrf.mxu0
      %v3628 = vadd.f32 0.0, %v3627
      %3629 = vmatmul.f32.gmra.mxu0 %v3518
      %v3630 = vpop.f32.mrf.mxu0
      %v3631 = vadd.f32 0.0, %v3630
      %3632 = vmatmul.f32.gmra.mxu0 %v3521
      %v3633 = vpop.f32.mrf.mxu0
      %v3634 = vadd.f32 0.0, %v3633
      %3635 = vmatmul.f32.gmra.mxu0 %v3524
      %v3636 = vpop.f32.mrf.mxu0
      %v3637 = vadd.f32 0.0, %v3636
      %3638 = vmatmul.f32.gmra.mxu0 %v3527
      %v3639 = vpop.f32.mrf.mxu0
      %v3640 = vadd.f32 0.0, %v3639
      %3641 = vdwg.mxu0
      %v3642 = vadd.f32 %v3326, %v3547
      %v3643 = vadd.f32 %v3327, %v3550
      %v3644 = vadd.f32 %v3328, %v3553
      %v3645 = vadd.f32 %v3329, %v3556
      %v3646 = vadd.f32 %v3330, %v3559
      %v3647 = vadd.f32 %v3331, %v3562
      %v3648 = vadd.f32 %v3332, %v3565
      %v3649 = vadd.f32 %v3333, %v3568
      %v3650 = vadd.f32 %v3334, %v3571
      %v3651 = vadd.f32 %v3335, %v3574
      %v3652 = vadd.f32 %v3336, %v3577
      %v3653 = vadd.f32 %v3337, %v3580
      %v3654 = vadd.f32 %v3338, %v3583
      %v3655 = vadd.f32 %v3339, %v3586
      %v3656 = vadd.f32 %v3340, %v3589
      %v3657 = vadd.f32 %v3341, %v3592
      %v3658 = vadd.f32 %v3342, %v3595
      %v3659 = vadd.f32 %v3343, %v3598
      %v3660 = vadd.f32 %v3344, %v3601
      %v3661 = vadd.f32 %v3345, %v3604
      %v3662 = vadd.f32 %v3346, %v3607
      %v3663 = vadd.f32 %v3347, %v3610
      %v3664 = vadd.f32 %v3348, %v3613
      %v3665 = vadd.f32 %v3349, %v3616
      %v3666 = vadd.f32 %v3350, %v3619
      %v3667 = vadd.f32 %v3351, %v3622
      %v3668 = vadd.f32 %v3352, %v3625
      %v3669 = vadd.f32 %v3353, %v3628
      %v3670 = vadd.f32 %v3354, %v3631
      %v3671 = vadd.f32 %v3355, %v3634
      %v3672 = vadd.f32 %v3356, %v3637
      %v3673 = vadd.f32 %v3357, %v3640
      %s3674 = scalar_lea.vmem %s7, 1280
      %v3675 = vld [vmem:[%s3674] sm:$0xff]
      %v3676 = vld [vmem:[%s3674 + $0x8] sm:$0xff]
      %v3677 = vld [vmem:[%s3674 + $0x10] sm:$0xff]
      %v3678 = vld [vmem:[%s3674 + $0x18] sm:$0xff]
      %v3679 = vld [vmem:[%s3674 + $0x20] sm:$0xff]
      %v3680 = vld [vmem:[%s3674 + $0x28] sm:$0xff]
      %v3681 = vld [vmem:[%s3674 + $0x30] sm:$0xff]
      %v3682 = vld [vmem:[%s3674 + $0x38] sm:$0xff]
      %v3683 = vld [vmem:[%s3674 + $0x40] sm:$0xff]
      %v3684 = vld [vmem:[%s3674 + $0x48] sm:$0xff]
      %v3685 = vld [vmem:[%s3674 + $0x50] sm:$0xff]
      %v3686 = vld [vmem:[%s3674 + $0x58] sm:$0xff]
      %v3687 = vld [vmem:[%s3674 + $0x60] sm:$0xff]
      %v3688 = vld [vmem:[%s3674 + $0x68] sm:$0xff]
      %v3689 = vld [vmem:[%s3674 + $0x70] sm:$0xff]
      %v3690 = vld [vmem:[%s3674 + $0x78] sm:$0xff]
      %v3691 = vld [vmem:[%s3674 + $0x80] sm:$0xff]
      %v3692 = vld [vmem:[%s3674 + $0x88] sm:$0xff]
      %v3693 = vld [vmem:[%s3674 + $0x90] sm:$0xff]
      %v3694 = vld [vmem:[%s3674 + $0x98] sm:$0xff]
      %v3695 = vld [vmem:[%s3674 + $0xa0] sm:$0xff]
      %v3696 = vld [vmem:[%s3674 + $0xa8] sm:$0xff]
      %v3697 = vld [vmem:[%s3674 + $0xb0] sm:$0xff]
      %v3698 = vld [vmem:[%s3674 + $0xb8] sm:$0xff]
      %v3699 = vld [vmem:[%s3674 + $0xc0] sm:$0xff]
      %v3700 = vld [vmem:[%s3674 + $0xc8] sm:$0xff]
      %v3701 = vld [vmem:[%s3674 + $0xd0] sm:$0xff]
      %v3702 = vld [vmem:[%s3674 + $0xd8] sm:$0xff]
      %v3703 = vld [vmem:[%s3674 + $0xe0] sm:$0xff]
      %v3704 = vld [vmem:[%s3674 + $0xe8] sm:$0xff]
      %v3705 = vld [vmem:[%s3674 + $0xf0] sm:$0xff]
      %v3706 = vld [vmem:[%s3674 + $0xf8] sm:$0xff]
      %3707 = vrot.lane.b32.xlu0 %v2077, 123
      %v3708 = vpop.permute.xlu0 %3707
      %3709 = vrot.lane.b32.xlu0 %v2078, 123
      %v3710 = vpop.permute.xlu0 %3709
      %3711 = vrot.lane.b32.xlu0 %v2079, 123
      %v3712 = vpop.permute.xlu0 %3711
      %3713 = vrot.lane.b32.xlu0 %v2080, 123
      %v3714 = vpop.permute.xlu0 %3713
      %3715 = vrot.lane.b32.xlu0 %v2081, 123
      %v3716 = vpop.permute.xlu0 %3715
      %3717 = vrot.lane.b32.xlu0 %v2082, 123
      %v3718 = vpop.permute.xlu0 %3717
      %3719 = vrot.lane.b32.xlu0 %v2083, 123
      %v3720 = vpop.permute.xlu0 %3719
      %3721 = vrot.lane.b32.xlu0 %v2084, 123
      %v3722 = vpop.permute.xlu0 %3721
      %3723 = vrot.lane.b32.xlu0 %v2085, 123
      %v3724 = vpop.permute.xlu0 %3723
      %3725 = vrot.lane.b32.xlu0 %v2086, 123
      %v3726 = vpop.permute.xlu0 %3725
      %3727 = vrot.lane.b32.xlu0 %v2087, 123
      %v3728 = vpop.permute.xlu0 %3727
      %3729 = vrot.lane.b32.xlu0 %v2088, 123
      %v3730 = vpop.permute.xlu0 %3729
      %3731 = vrot.lane.b32.xlu0 %v2089, 123
      %v3732 = vpop.permute.xlu0 %3731
      %3733 = vrot.lane.b32.xlu0 %v2090, 123
      %v3734 = vpop.permute.xlu0 %3733
      %v3750 = vsel %vm1306, %v3675, 0
      %v3753 = vsel %vm1306, %v3676, 0
      %v3756 = vsel %vm1306, %v3677, 0
      %v3759 = vsel %vm1306, %v3678, 0
      %v3762 = vsel %vm1306, %v3679, 0
      %v3765 = vsel %vm1306, %v3680, 0
      %v3768 = vsel %vm1306, %v3681, 0
      %v3771 = vsel %vm1306, %v3682, 0
      %v3774 = vsel %vm1306, %v3683, 0
      %v3777 = vsel %vm1306, %v3684, 0
      %v3780 = vsel %vm1306, %v3685, 0
      %v3783 = vsel %vm1306, %v3686, 0
      %v3786 = vsel %vm1306, %v3687, 0
      %v3789 = vsel %vm1306, %v3688, 0
      %v3792 = vsel %vm1306, %v3689, 0
      %v3795 = vsel %vm1306, %v3690, 0
      %v3798 = vsel %vm1306, %v3691, 0
      %v3801 = vsel %vm1306, %v3692, 0
      %v3804 = vsel %vm1306, %v3693, 0
      %v3807 = vsel %vm1306, %v3694, 0
      %v3810 = vsel %vm1306, %v3695, 0
      %v3813 = vsel %vm1306, %v3696, 0
      %v3816 = vsel %vm1306, %v3697, 0
      %v3819 = vsel %vm1306, %v3698, 0
      %v3822 = vsel %vm1306, %v3699, 0
      %v3825 = vsel %vm1306, %v3700, 0
      %v3828 = vsel %vm1306, %v3701, 0
      %v3831 = vsel %vm1306, %v3702, 0
      %v3834 = vsel %vm1306, %v3703, 0
      %v3837 = vsel %vm1306, %v3704, 0
      %v3840 = vsel %vm1306, %v3705, 0
      %v3843 = vsel %vm1306, %v3706, 0
      %3845 = vmatpush.msra.mxu0 0.0
      %3846 = vmatpush.msra.mxu0 0.0
      %3847 = vmatpush.msra.mxu0 %v3734
      %3848 = vmatpush.msra.mxu0 %v3732
      %3849 = vmatpush.msra.mxu0 %v3730
      %3850 = vmatpush.msra.mxu0 %v3728
      %3851 = vmatpush.msra.mxu0 %v3726
      %3852 = vmatpush.msra.mxu0 %v3724
      %3853 = vmatpush.msra.mxu0 %v3722
      %3854 = vmatpush.msra.mxu0 %v3720
      %3855 = vmatpush.msra.mxu0 %v3718
      %3856 = vmatpush.msra.mxu0 %v3716
      %3857 = vmatpush.msra.mxu0 %v3714
      %3858 = vmatpush.msra.mxu0 %v3712
      %3859 = vmatpush.msra.mxu0 %v3710
      %3860 = vmatpush.msra.mxu0 %v3708
      %3861 = vmatmul.f32.gmra.mxu0 %v3750
      %v3862 = vpop.f32.mrf.mxu0
      %v3863 = vadd.f32 0.0, %v3862
      %3864 = vmatmul.f32.gmra.mxu0 %v3753
      %v3865 = vpop.f32.mrf.mxu0
      %v3866 = vadd.f32 0.0, %v3865
      %3867 = vmatmul.f32.gmra.mxu0 %v3756
      %v3868 = vpop.f32.mrf.mxu0
      %v3869 = vadd.f32 0.0, %v3868
      %3870 = vmatmul.f32.gmra.mxu0 %v3759
      %v3871 = vpop.f32.mrf.mxu0
      %v3872 = vadd.f32 0.0, %v3871
      %3873 = vmatmul.f32.gmra.mxu0 %v3762
      %v3874 = vpop.f32.mrf.mxu0
      %v3875 = vadd.f32 0.0, %v3874
      %3876 = vmatmul.f32.gmra.mxu0 %v3765
      %v3877 = vpop.f32.mrf.mxu0
      %v3878 = vadd.f32 0.0, %v3877
      %3879 = vmatmul.f32.gmra.mxu0 %v3768
      %v3880 = vpop.f32.mrf.mxu0
      %v3881 = vadd.f32 0.0, %v3880
      %3882 = vmatmul.f32.gmra.mxu0 %v3771
      %v3883 = vpop.f32.mrf.mxu0
      %v3884 = vadd.f32 0.0, %v3883
      %3885 = vmatmul.f32.gmra.mxu0 %v3774
      %v3886 = vpop.f32.mrf.mxu0
      %v3887 = vadd.f32 0.0, %v3886
      %3888 = vmatmul.f32.gmra.mxu0 %v3777
      %v3889 = vpop.f32.mrf.mxu0
      %v3890 = vadd.f32 0.0, %v3889
      %3891 = vmatmul.f32.gmra.mxu0 %v3780
      %v3892 = vpop.f32.mrf.mxu0
      %v3893 = vadd.f32 0.0, %v3892
      %3894 = vmatmul.f32.gmra.mxu0 %v3783
      %v3895 = vpop.f32.mrf.mxu0
      %v3896 = vadd.f32 0.0, %v3895
      %3897 = vmatmul.f32.gmra.mxu0 %v3786
      %v3898 = vpop.f32.mrf.mxu0
      %v3899 = vadd.f32 0.0, %v3898
      %3900 = vmatmul.f32.gmra.mxu0 %v3789
      %v3901 = vpop.f32.mrf.mxu0
      %v3902 = vadd.f32 0.0, %v3901
      %3903 = vmatmul.f32.gmra.mxu0 %v3792
      %v3904 = vpop.f32.mrf.mxu0
      %v3905 = vadd.f32 0.0, %v3904
      %3906 = vmatmul.f32.gmra.mxu0 %v3795
      %v3907 = vpop.f32.mrf.mxu0
      %v3908 = vadd.f32 0.0, %v3907
      %3909 = vmatmul.f32.gmra.mxu0 %v3798
      %v3910 = vpop.f32.mrf.mxu0
      %v3911 = vadd.f32 0.0, %v3910
      %3912 = vmatmul.f32.gmra.mxu0 %v3801
      %v3913 = vpop.f32.mrf.mxu0
      %v3914 = vadd.f32 0.0, %v3913
      %3915 = vmatmul.f32.gmra.mxu0 %v3804
      %v3916 = vpop.f32.mrf.mxu0
      %v3917 = vadd.f32 0.0, %v3916
      %3918 = vmatmul.f32.gmra.mxu0 %v3807
      %v3919 = vpop.f32.mrf.mxu0
      %v3920 = vadd.f32 0.0, %v3919
      %3921 = vmatmul.f32.gmra.mxu0 %v3810
      %v3922 = vpop.f32.mrf.mxu0
      %v3923 = vadd.f32 0.0, %v3922
      %3924 = vmatmul.f32.gmra.mxu0 %v3813
      %v3925 = vpop.f32.mrf.mxu0
      %v3926 = vadd.f32 0.0, %v3925
      %3927 = vmatmul.f32.gmra.mxu0 %v3816
      %v3928 = vpop.f32.mrf.mxu0
      %v3929 = vadd.f32 0.0, %v3928
      %3930 = vmatmul.f32.gmra.mxu0 %v3819
      %v3931 = vpop.f32.mrf.mxu0
      %v3932 = vadd.f32 0.0, %v3931
      %3933 = vmatmul.f32.gmra.mxu0 %v3822
      %v3934 = vpop.f32.mrf.mxu0
      %v3935 = vadd.f32 0.0, %v3934
      %3936 = vmatmul.f32.gmra.mxu0 %v3825
      %v3937 = vpop.f32.mrf.mxu0
      %v3938 = vadd.f32 0.0, %v3937
      %3939 = vmatmul.f32.gmra.mxu0 %v3828
      %v3940 = vpop.f32.mrf.mxu0
      %v3941 = vadd.f32 0.0, %v3940
      %3942 = vmatmul.f32.gmra.mxu0 %v3831
      %v3943 = vpop.f32.mrf.mxu0
      %v3944 = vadd.f32 0.0, %v3943
      %3945 = vmatmul.f32.gmra.mxu0 %v3834
      %v3946 = vpop.f32.mrf.mxu0
      %v3947 = vadd.f32 0.0, %v3946
      %3948 = vmatmul.f32.gmra.mxu0 %v3837
      %v3949 = vpop.f32.mrf.mxu0
      %v3950 = vadd.f32 0.0, %v3949
      %3951 = vmatmul.f32.gmra.mxu0 %v3840
      %v3952 = vpop.f32.mrf.mxu0
      %v3953 = vadd.f32 0.0, %v3952
      %3954 = vmatmul.f32.gmra.mxu0 %v3843
      %v3955 = vpop.f32.mrf.mxu0
      %v3956 = vadd.f32 0.0, %v3955
      %3957 = vdwg.mxu0
      %v3958 = vadd.f32 %v3642, %v3863
      %v3959 = vadd.f32 %v3643, %v3866
      %v3960 = vadd.f32 %v3644, %v3869
      %v3961 = vadd.f32 %v3645, %v3872
      %v3962 = vadd.f32 %v3646, %v3875
      %v3963 = vadd.f32 %v3647, %v3878
      %v3964 = vadd.f32 %v3648, %v3881
      %v3965 = vadd.f32 %v3649, %v3884
      %v3966 = vadd.f32 %v3650, %v3887
      %v3967 = vadd.f32 %v3651, %v3890
      %v3968 = vadd.f32 %v3652, %v3893
      %v3969 = vadd.f32 %v3653, %v3896
      %v3970 = vadd.f32 %v3654, %v3899
      %v3971 = vadd.f32 %v3655, %v3902
      %v3972 = vadd.f32 %v3656, %v3905
      %v3973 = vadd.f32 %v3657, %v3908
      %v3974 = vadd.f32 %v3658, %v3911
      %v3975 = vadd.f32 %v3659, %v3914
      %v3976 = vadd.f32 %v3660, %v3917
      %v3977 = vadd.f32 %v3661, %v3920
      %v3978 = vadd.f32 %v3662, %v3923
      %v3979 = vadd.f32 %v3663, %v3926
      %v3980 = vadd.f32 %v3664, %v3929
      %v3981 = vadd.f32 %v3665, %v3932
      %v3982 = vadd.f32 %v3666, %v3935
      %v3983 = vadd.f32 %v3667, %v3938
      %v3984 = vadd.f32 %v3668, %v3941
      %v3985 = vadd.f32 %v3669, %v3944
      %v3986 = vadd.f32 %v3670, %v3947
      %v3987 = vadd.f32 %v3671, %v3950
      %v3988 = vadd.f32 %v3672, %v3953
      %v3989 = vadd.f32 %v3673, %v3956
      %s3990 = scalar_lea.vmem %s7, 1536
      %v3991 = vld [vmem:[%s3990] sm:$0xff]
      %v3992 = vld [vmem:[%s3990 + $0x8] sm:$0xff]
      %v3993 = vld [vmem:[%s3990 + $0x10] sm:$0xff]
      %v3994 = vld [vmem:[%s3990 + $0x18] sm:$0xff]
      %v3995 = vld [vmem:[%s3990 + $0x20] sm:$0xff]
      %v3996 = vld [vmem:[%s3990 + $0x28] sm:$0xff]
      %v3997 = vld [vmem:[%s3990 + $0x30] sm:$0xff]
      %v3998 = vld [vmem:[%s3990 + $0x38] sm:$0xff]
      %v3999 = vld [vmem:[%s3990 + $0x40] sm:$0xff]
      %v4000 = vld [vmem:[%s3990 + $0x48] sm:$0xff]
      %v4001 = vld [vmem:[%s3990 + $0x50] sm:$0xff]
      %v4002 = vld [vmem:[%s3990 + $0x58] sm:$0xff]
      %v4003 = vld [vmem:[%s3990 + $0x60] sm:$0xff]
      %v4004 = vld [vmem:[%s3990 + $0x68] sm:$0xff]
      %v4005 = vld [vmem:[%s3990 + $0x70] sm:$0xff]
      %v4006 = vld [vmem:[%s3990 + $0x78] sm:$0xff]
      %v4007 = vld [vmem:[%s3990 + $0x80] sm:$0xff]
      %v4008 = vld [vmem:[%s3990 + $0x88] sm:$0xff]
      %v4009 = vld [vmem:[%s3990 + $0x90] sm:$0xff]
      %v4010 = vld [vmem:[%s3990 + $0x98] sm:$0xff]
      %v4011 = vld [vmem:[%s3990 + $0xa0] sm:$0xff]
      %v4012 = vld [vmem:[%s3990 + $0xa8] sm:$0xff]
      %v4013 = vld [vmem:[%s3990 + $0xb0] sm:$0xff]
      %v4014 = vld [vmem:[%s3990 + $0xb8] sm:$0xff]
      %v4015 = vld [vmem:[%s3990 + $0xc0] sm:$0xff]
      %v4016 = vld [vmem:[%s3990 + $0xc8] sm:$0xff]
      %v4017 = vld [vmem:[%s3990 + $0xd0] sm:$0xff]
      %v4018 = vld [vmem:[%s3990 + $0xd8] sm:$0xff]
      %v4019 = vld [vmem:[%s3990 + $0xe0] sm:$0xff]
      %v4020 = vld [vmem:[%s3990 + $0xe8] sm:$0xff]
      %v4021 = vld [vmem:[%s3990 + $0xf0] sm:$0xff]
      %v4022 = vld [vmem:[%s3990 + $0xf8] sm:$0xff]
      %4023 = vrot.lane.b32.xlu0 %v2077, 122
      %v4024 = vpop.permute.xlu0 %4023
      %4025 = vrot.lane.b32.xlu0 %v2078, 122
      %v4026 = vpop.permute.xlu0 %4025
      %4027 = vrot.lane.b32.xlu0 %v2079, 122
      %v4028 = vpop.permute.xlu0 %4027
      %4029 = vrot.lane.b32.xlu0 %v2080, 122
      %v4030 = vpop.permute.xlu0 %4029
      %4031 = vrot.lane.b32.xlu0 %v2081, 122
      %v4032 = vpop.permute.xlu0 %4031
      %4033 = vrot.lane.b32.xlu0 %v2082, 122
      %v4034 = vpop.permute.xlu0 %4033
      %4035 = vrot.lane.b32.xlu0 %v2083, 122
      %v4036 = vpop.permute.xlu0 %4035
      %4037 = vrot.lane.b32.xlu0 %v2084, 122
      %v4038 = vpop.permute.xlu0 %4037
      %4039 = vrot.lane.b32.xlu0 %v2085, 122
      %v4040 = vpop.permute.xlu0 %4039
      %4041 = vrot.lane.b32.xlu0 %v2086, 122
      %v4042 = vpop.permute.xlu0 %4041
      %4043 = vrot.lane.b32.xlu0 %v2087, 122
      %v4044 = vpop.permute.xlu0 %4043
      %4045 = vrot.lane.b32.xlu0 %v2088, 122
      %v4046 = vpop.permute.xlu0 %4045
      %4047 = vrot.lane.b32.xlu0 %v2089, 122
      %v4048 = vpop.permute.xlu0 %4047
      %4049 = vrot.lane.b32.xlu0 %v2090, 122
      %v4050 = vpop.permute.xlu0 %4049
      %v4066 = vsel %vm1306, %v3991, 0
      %v4069 = vsel %vm1306, %v3992, 0
      %v4072 = vsel %vm1306, %v3993, 0
      %v4075 = vsel %vm1306, %v3994, 0
      %v4078 = vsel %vm1306, %v3995, 0
      %v4081 = vsel %vm1306, %v3996, 0
      %v4084 = vsel %vm1306, %v3997, 0
      %v4087 = vsel %vm1306, %v3998, 0
      %v4090 = vsel %vm1306, %v3999, 0
      %v4093 = vsel %vm1306, %v4000, 0
      %v4096 = vsel %vm1306, %v4001, 0
      %v4099 = vsel %vm1306, %v4002, 0
      %v4102 = vsel %vm1306, %v4003, 0
      %v4105 = vsel %vm1306, %v4004, 0
      %v4108 = vsel %vm1306, %v4005, 0
      %v4111 = vsel %vm1306, %v4006, 0
      %v4114 = vsel %vm1306, %v4007, 0
      %v4117 = vsel %vm1306, %v4008, 0
      %v4120 = vsel %vm1306, %v4009, 0
      %v4123 = vsel %vm1306, %v4010, 0
      %v4126 = vsel %vm1306, %v4011, 0
      %v4129 = vsel %vm1306, %v4012, 0
      %v4132 = vsel %vm1306, %v4013, 0
      %v4135 = vsel %vm1306, %v4014, 0
      %v4138 = vsel %vm1306, %v4015, 0
      %v4141 = vsel %vm1306, %v4016, 0
      %v4144 = vsel %vm1306, %v4017, 0
      %v4147 = vsel %vm1306, %v4018, 0
      %v4150 = vsel %vm1306, %v4019, 0
      %v4153 = vsel %vm1306, %v4020, 0
      %v4156 = vsel %vm1306, %v4021, 0
      %v4159 = vsel %vm1306, %v4022, 0
      %4161 = vmatpush.msra.mxu0 0.0
      %4162 = vmatpush.msra.mxu0 0.0
      %4163 = vmatpush.msra.mxu0 %v4050
      %4164 = vmatpush.msra.mxu0 %v4048
      %4165 = vmatpush.msra.mxu0 %v4046
      %4166 = vmatpush.msra.mxu0 %v4044
      %4167 = vmatpush.msra.mxu0 %v4042
      %4168 = vmatpush.msra.mxu0 %v4040
      %4169 = vmatpush.msra.mxu0 %v4038
      %4170 = vmatpush.msra.mxu0 %v4036
      %4171 = vmatpush.msra.mxu0 %v4034
      %4172 = vmatpush.msra.mxu0 %v4032
      %4173 = vmatpush.msra.mxu0 %v4030
      %4174 = vmatpush.msra.mxu0 %v4028
      %4175 = vmatpush.msra.mxu0 %v4026
      %4176 = vmatpush.msra.mxu0 %v4024
      %4177 = vmatmul.f32.gmra.mxu0 %v4066
      %v4178 = vpop.f32.mrf.mxu0
      %v4179 = vadd.f32 0.0, %v4178
      %4180 = vmatmul.f32.gmra.mxu0 %v4069
      %v4181 = vpop.f32.mrf.mxu0
      %v4182 = vadd.f32 0.0, %v4181
      %4183 = vmatmul.f32.gmra.mxu0 %v4072
      %v4184 = vpop.f32.mrf.mxu0
      %v4185 = vadd.f32 0.0, %v4184
      %4186 = vmatmul.f32.gmra.mxu0 %v4075
      %v4187 = vpop.f32.mrf.mxu0
      %v4188 = vadd.f32 0.0, %v4187
      %4189 = vmatmul.f32.gmra.mxu0 %v4078
      %v4190 = vpop.f32.mrf.mxu0
      %v4191 = vadd.f32 0.0, %v4190
      %4192 = vmatmul.f32.gmra.mxu0 %v4081
      %v4193 = vpop.f32.mrf.mxu0
      %v4194 = vadd.f32 0.0, %v4193
      %4195 = vmatmul.f32.gmra.mxu0 %v4084
      %v4196 = vpop.f32.mrf.mxu0
      %v4197 = vadd.f32 0.0, %v4196
      %4198 = vmatmul.f32.gmra.mxu0 %v4087
      %v4199 = vpop.f32.mrf.mxu0
      %v4200 = vadd.f32 0.0, %v4199
      %4201 = vmatmul.f32.gmra.mxu0 %v4090
      %v4202 = vpop.f32.mrf.mxu0
      %v4203 = vadd.f32 0.0, %v4202
      %4204 = vmatmul.f32.gmra.mxu0 %v4093
      %v4205 = vpop.f32.mrf.mxu0
      %v4206 = vadd.f32 0.0, %v4205
      %4207 = vmatmul.f32.gmra.mxu0 %v4096
      %v4208 = vpop.f32.mrf.mxu0
      %v4209 = vadd.f32 0.0, %v4208
      %4210 = vmatmul.f32.gmra.mxu0 %v4099
      %v4211 = vpop.f32.mrf.mxu0
      %v4212 = vadd.f32 0.0, %v4211
      %4213 = vmatmul.f32.gmra.mxu0 %v4102
      %v4214 = vpop.f32.mrf.mxu0
      %v4215 = vadd.f32 0.0, %v4214
      %4216 = vmatmul.f32.gmra.mxu0 %v4105
      %v4217 = vpop.f32.mrf.mxu0
      %v4218 = vadd.f32 0.0, %v4217
      %4219 = vmatmul.f32.gmra.mxu0 %v4108
      %v4220 = vpop.f32.mrf.mxu0
      %v4221 = vadd.f32 0.0, %v4220
      %4222 = vmatmul.f32.gmra.mxu0 %v4111
      %v4223 = vpop.f32.mrf.mxu0
      %v4224 = vadd.f32 0.0, %v4223
      %4225 = vmatmul.f32.gmra.mxu0 %v4114
      %v4226 = vpop.f32.mrf.mxu0
      %v4227 = vadd.f32 0.0, %v4226
      %4228 = vmatmul.f32.gmra.mxu0 %v4117
      %v4229 = vpop.f32.mrf.mxu0
      %v4230 = vadd.f32 0.0, %v4229
      %4231 = vmatmul.f32.gmra.mxu0 %v4120
      %v4232 = vpop.f32.mrf.mxu0
      %v4233 = vadd.f32 0.0, %v4232
      %4234 = vmatmul.f32.gmra.mxu0 %v4123
      %v4235 = vpop.f32.mrf.mxu0
      %v4236 = vadd.f32 0.0, %v4235
      %4237 = vmatmul.f32.gmra.mxu0 %v4126
      %v4238 = vpop.f32.mrf.mxu0
      %v4239 = vadd.f32 0.0, %v4238
      %4240 = vmatmul.f32.gmra.mxu0 %v4129
      %v4241 = vpop.f32.mrf.mxu0
      %v4242 = vadd.f32 0.0, %v4241
      %4243 = vmatmul.f32.gmra.mxu0 %v4132
      %v4244 = vpop.f32.mrf.mxu0
      %v4245 = vadd.f32 0.0, %v4244
      %4246 = vmatmul.f32.gmra.mxu0 %v4135
      %v4247 = vpop.f32.mrf.mxu0
      %v4248 = vadd.f32 0.0, %v4247
      %4249 = vmatmul.f32.gmra.mxu0 %v4138
      %v4250 = vpop.f32.mrf.mxu0
      %v4251 = vadd.f32 0.0, %v4250
      %4252 = vmatmul.f32.gmra.mxu0 %v4141
      %v4253 = vpop.f32.mrf.mxu0
      %v4254 = vadd.f32 0.0, %v4253
      %4255 = vmatmul.f32.gmra.mxu0 %v4144
      %v4256 = vpop.f32.mrf.mxu0
      %v4257 = vadd.f32 0.0, %v4256
      %4258 = vmatmul.f32.gmra.mxu0 %v4147
      %v4259 = vpop.f32.mrf.mxu0
      %v4260 = vadd.f32 0.0, %v4259
      %4261 = vmatmul.f32.gmra.mxu0 %v4150
      %v4262 = vpop.f32.mrf.mxu0
      %v4263 = vadd.f32 0.0, %v4262
      %4264 = vmatmul.f32.gmra.mxu0 %v4153
      %v4265 = vpop.f32.mrf.mxu0
      %v4266 = vadd.f32 0.0, %v4265
      %4267 = vmatmul.f32.gmra.mxu0 %v4156
      %v4268 = vpop.f32.mrf.mxu0
      %v4269 = vadd.f32 0.0, %v4268
      %4270 = vmatmul.f32.gmra.mxu0 %v4159
      %v4271 = vpop.f32.mrf.mxu0
      %v4272 = vadd.f32 0.0, %v4271
      %4273 = vdwg.mxu0
      %v4274 = vadd.f32 %v3958, %v4179
      %v4275 = vadd.f32 %v3959, %v4182
      %v4276 = vadd.f32 %v3960, %v4185
      %v4277 = vadd.f32 %v3961, %v4188
      %v4278 = vadd.f32 %v3962, %v4191
      %v4279 = vadd.f32 %v3963, %v4194
      %v4280 = vadd.f32 %v3964, %v4197
      %v4281 = vadd.f32 %v3965, %v4200
      %v4282 = vadd.f32 %v3966, %v4203
      %v4283 = vadd.f32 %v3967, %v4206
      %v4284 = vadd.f32 %v3968, %v4209
      %v4285 = vadd.f32 %v3969, %v4212
      %v4286 = vadd.f32 %v3970, %v4215
      %v4287 = vadd.f32 %v3971, %v4218
      %v4288 = vadd.f32 %v3972, %v4221
      %v4289 = vadd.f32 %v3973, %v4224
      %v4290 = vadd.f32 %v3974, %v4227
      %v4291 = vadd.f32 %v3975, %v4230
      %v4292 = vadd.f32 %v3976, %v4233
      %v4293 = vadd.f32 %v3977, %v4236
      %v4294 = vadd.f32 %v3978, %v4239
      %v4295 = vadd.f32 %v3979, %v4242
      %v4296 = vadd.f32 %v3980, %v4245
      %v4297 = vadd.f32 %v3981, %v4248
      %v4298 = vadd.f32 %v3982, %v4251
      %v4299 = vadd.f32 %v3983, %v4254
      %v4300 = vadd.f32 %v3984, %v4257
      %v4301 = vadd.f32 %v3985, %v4260
      %v4302 = vadd.f32 %v3986, %v4263
      %v4303 = vadd.f32 %v3987, %v4266
      %v4304 = vadd.f32 %v3988, %v4269
      %v4305 = vadd.f32 %v3989, %v4272
      %v4306 = vmax.f32 %v4274, 0.0
      %v4307 = vmax.f32 %v4275, 0.0
      %v4308 = vmax.f32 %v4276, 0.0
      %v4309 = vmax.f32 %v4277, 0.0
      %v4310 = vmax.f32 %v4278, 0.0
      %v4311 = vmax.f32 %v4279, 0.0
      %v4312 = vmax.f32 %v4280, 0.0
      %v4313 = vmax.f32 %v4281, 0.0
      %v4314 = vmax.f32 %v4282, 0.0
      %v4315 = vmax.f32 %v4283, 0.0
      %v4316 = vmax.f32 %v4284, 0.0
      %v4317 = vmax.f32 %v4285, 0.0
      %v4318 = vmax.f32 %v4286, 0.0
      %v4319 = vmax.f32 %v4287, 0.0
      %v4320 = vmax.f32 %v4288, 0.0
      %v4321 = vmax.f32 %v4289, 0.0
      %v4322 = vmax.f32 %v4290, 0.0
      %v4323 = vmax.f32 %v4291, 0.0
      %v4324 = vmax.f32 %v4292, 0.0
      %v4325 = vmax.f32 %v4293, 0.0
      %v4326 = vmax.f32 %v4294, 0.0
      %v4327 = vmax.f32 %v4295, 0.0
      %v4328 = vmax.f32 %v4296, 0.0
      %v4329 = vmax.f32 %v4297, 0.0
      %v4330 = vmax.f32 %v4298, 0.0
      %v4331 = vmax.f32 %v4299, 0.0
      %v4332 = vmax.f32 %v4300, 0.0
      %v4333 = vmax.f32 %v4301, 0.0
      %v4334 = vmax.f32 %v4302, 0.0
      %v4335 = vmax.f32 %v4303, 0.0
      %v4336 = vmax.f32 %v4304, 0.0
      %v4337 = vmax.f32 %v4305, 0.0
      %v4338 = vld [vmem:[%s9] sm:$0xff]
      %v4339 = vld [vmem:[%s9 + $0x8] sm:$0xff]
      %v4340 = vld [vmem:[%s9 + $0x10] sm:$0xff]
      %v4341 = vld [vmem:[%s9 + $0x18] sm:$0xff]
      %v4342 = vld [vmem:[%s10] sm:$0xff]
      %v4343 = vld [vmem:[%s10 + $0x8] sm:$0xff]
      %4344 = vmatpush.msra.mxu0 %v4321
      %4345 = vmatpush.msra.mxu0 %v4320
      %4346 = vmatpush.msra.mxu0 %v4319
      %4347 = vmatpush.msra.mxu0 %v4318
      %4348 = vmatpush.msra.mxu0 %v4317
      %4349 = vmatpush.msra.mxu0 %v4316
      %4350 = vmatpush.msra.mxu0 %v4315
      %4351 = vmatpush.msra.mxu0 %v4314
      %4352 = vmatpush.msra.mxu0 %v4313
      %4353 = vmatpush.msra.mxu0 %v4312
      %4354 = vmatpush.msra.mxu0 %v4311
      %4355 = vmatpush.msra.mxu0 %v4310
      %4356 = vmatpush.msra.mxu0 %v4309
      %4357 = vmatpush.msra.mxu0 %v4308
      %4358 = vmatpush.msra.mxu0 %v4307
      %4359 = vmatpush.msra.mxu0 %v4306
      %4360 = vmatmul.f32.gmra.mxu0 %v4338
      %v4361 = vpop.f32.mrf.mxu0
      %v4362 = vadd.f32 %v4342, %v4361
      %4363 = vmatmul.f32.gmra.mxu0 %v4340
      %v4364 = vpop.f32.mrf.mxu0
      %v4365 = vadd.f32 %v4343, %v4364
      %4366 = vdwg.mxu0
      %4367 = vmatpush.msra.mxu0 %v4337
      %4368 = vmatpush.msra.mxu0 %v4336
      %4369 = vmatpush.msra.mxu0 %v4335
      %4370 = vmatpush.msra.mxu0 %v4334
      %4371 = vmatpush.msra.mxu0 %v4333
      %4372 = vmatpush.msra.mxu0 %v4332
      %4373 = vmatpush.msra.mxu0 %v4331
      %4374 = vmatpush.msra.mxu0 %v4330
      %4375 = vmatpush.msra.mxu0 %v4329
      %4376 = vmatpush.msra.mxu0 %v4328
      %4377 = vmatpush.msra.mxu0 %v4327
      %4378 = vmatpush.msra.mxu0 %v4326
      %4379 = vmatpush.msra.mxu0 %v4325
      %4380 = vmatpush.msra.mxu0 %v4324
      %4381 = vmatpush.msra.mxu0 %v4323
      %4382 = vmatpush.msra.mxu0 %v4322
      %4383 = vmatmul.f32.gmra.mxu0 %v4339
      %v4384 = vpop.f32.mrf.mxu0
      %v4385 = vadd.f32 %v4362, %v4384
      %4386 = vmatmul.f32.gmra.mxu0 %v4341
      %v4387 = vpop.f32.mrf.mxu0
      %v4388 = vadd.f32 %v4365, %v4387
      %4389 = vdwg.mxu0
      %vm4390 = vcmask 7168
      %4391 = vst.msk [vmem:[%s386] sm:$0xff] %vm4390, %v4385
      %4392 = vst.msk [vmem:[%s386 + $0x8] sm:$0xff] %vm4390, %v4388
      %p4393 = scmp.lt.s32.totalorder %s22, 1
      %s4394 = scalar_select %p4393, %s22, 1
      %s4395 = smul.addr %s4394, 2
      %s4396 = smul.addr %s4395, 8
      %s4397 = scalar_lea.vmem %s11, %s4396
      // Predicated region
      $region65: #{cnn_mnist_forward.1} parent=63 // pred_check
        %p4398 = pneg %p276
      $region66: #{cnn_mnist_forward.1} parent=63 // pred_check_branch
        %4400 = sbr.rel (%p4398) target = $region68
      $region67: #{cnn_mnist_forward.1} parent=63 // pred_region
        _
      $region68: #{cnn_mnist_forward.1} parent=63 // pred_fallthru
        _
    $region64: #{cnn_mnist_forward.1} parent=5 // pred_fallthru
      _
    %p4401 = scmp.le.s32.totalorder 2, %s17
    // Predicated region
    $region69: #{cnn_mnist_forward.1} parent=5 // pred_check
      %p4402 = pneg %p4401
    $region70: #{cnn_mnist_forward.1} parent=5 // pred_check_branch
      %4404 = sbr.rel (%p4402) target = $region72
    $region71: #{cnn_mnist_forward.1} parent=5 // pred_region
      %s4405 = ssub.s32 %s17, 2
      // Predicated region
      $region73: #{cnn_mnist_forward.1} parent=71 // pred_check
        %p4406 = pneg %p282
      $region74: #{cnn_mnist_forward.1} parent=71 // pred_check_branch
        %4408 = sbr.rel (%p4406) target = $region76
      $region75: #{cnn_mnist_forward.1} parent=71 // pred_region
        %p4409 = scmp.lt.s32.totalorder %s23, 1
        %s4410 = scalar_select %p4409, %s23, 1
        %s4411 = smul.addr %s4410, 2
        %s4412 = smul.addr %s4411, 8
        %s4413 = scalar_lea.vmem %s11, %s4412
      $region76: #{cnn_mnist_forward.1} parent=71 // pred_fallthru
        _
    $region72: #{cnn_mnist_forward.1} parent=5 // pred_fallthru
      _
  $region6: #{cnn_mnist_forward.1} parent=0 // loop_footer
    %s21 = sadd.s32 1, %s17
  $region7: #{cnn_mnist_forward.1} parent=0 // loop_footer_branch
    %16 = sbr.rel target = $region3
  $region8: #{cnn_mnist_forward.1} parent=0 // loop_exit
    _

</llo_original>
